<compile_context>
chip_gen: v7x
topology: tpu7x:2x2x1
jax: 0.10.0
libtpu: 0.0.40
codegen_flags: <defaults>
</compile_context>

<pallas_src>
import functools

import jax
import jax.numpy as jnp
from jax.experimental import pallas as pl
from jax.experimental.pallas import tpu as pltpu

LANE = 128
ROW_ALIGN = 512  # pad N to a multiple of this so tm=512 / large tk are selectable


def _round_up(x, m):
    return (x + m - 1) // m * m


def _pad_to(arr, shape):
    return jnp.pad(arr, [(0, t - s) for s, t in zip(arr.shape, shape)])


# ----------------------------------------------------------------------------
# Kernel 1: fused projection   P = X @ [W_self | W_neigh]  (+ bias on self half)
# ----------------------------------------------------------------------------
def _project_kernel(x_ref, w_ref, b_ref, ps_ref, pn_ref, *, f_pad):
    # x_ref is already bf16 (input features pre-cast / h1 emitted as bf16).
    p = jnp.dot(x_ref[...], w_ref[...],
                preferred_element_type=jnp.float32)     # (TM, 2*F_pad) f32
    ps_ref[...] = p[:, :f_pad] + b_ref[...]             # self path + bias (f32)
    pn_ref[...] = p[:, f_pad:].astype(jnp.bfloat16)     # neighbour path (bf16)


def sage_project(x_bf16, w_cat_bf16, bias_pad, *, tm):
    n_pad, f_in_pad = x_bf16.shape
    two_f_pad = w_cat_bf16.shape[1]
    f_pad = two_f_pad // 2
    kernel = functools.partial(_project_kernel, f_pad=f_pad)
    return pl.pallas_call(
        kernel,
        grid=(n_pad // tm,),
        in_specs=[
            pl.BlockSpec((tm, f_in_pad), lambda i: (i, 0)),
            pl.BlockSpec((f_in_pad, two_f_pad), lambda i: (0, 0)),  # resident
            pl.BlockSpec((1, f_pad), lambda i: (0, 0)),             # resident
        ],
        out_specs=[
            pl.BlockSpec((tm, f_pad), lambda i: (i, 0)),
            pl.BlockSpec((tm, f_pad), lambda i: (i, 0)),
        ],
        out_shape=[
            jax.ShapeDtypeStruct((n_pad, f_pad), jnp.float32),   # P_self (+bias)
            jax.ShapeDtypeStruct((n_pad, f_pad), jnp.bfloat16),  # P_neigh
        ],
        compiler_params=pltpu.CompilerParams(
            dimension_semantics=("parallel",),
            vmem_limit_bytes=32 << 20,
        ),
    )(x_bf16, w_cat_bf16, bias_pad)


# ----------------------------------------------------------------------------
# Kernel 2: tiled aggregation   out = P_self + A_norm @ P_neigh   (+ optional ReLU)
# ----------------------------------------------------------------------------
def _aggregate_kernel(mask_ref, kmap_ref, a_ref, pn_ref, ps_ref, o_ref, acc_ref,
                      *, apply_relu):
    i = pl.program_id(0)
    k = pl.program_id(1)
    nk = pl.num_programs(1)

    @pl.when(k == 0)
    def _():
        acc_ref[...] = jnp.zeros_like(acc_ref)

    # Skip MXU work for all-zero adjacency blocks.  The DMA for those blocks is
    # also skipped: the index_map maps zero blocks to the previous non-zero
    # block index (kmap), so consecutive identical block indices dedup the copy.
    @pl.when(mask_ref[i * nk + k] > 0)
    def _():
        acc_ref[...] += jnp.dot(a_ref[...], pn_ref[...],
                                preferred_element_type=jnp.float32)

    # Epilogue: self path + bias already folded into ps; ReLU for layer 1 only.
    @pl.when(k == nk - 1)
    def _():
        out = acc_ref[...] + ps_ref[...]
        if apply_relu:
            out = jnp.maximum(out, 0.0)
        o_ref[...] = out.astype(o_ref.dtype)


def sage_aggregate(block_mask, kmap, a_bf16, p_neigh, p_self, *,
                   tm, tk, apply_relu, out_dtype):
    n_pad = a_bf16.shape[0]
    f_pad = p_self.shape[1]
    nk = n_pad // tk
    kernel = functools.partial(_aggregate_kernel, apply_relu=apply_relu)
    return pl.pallas_call(
        kernel,
        grid_spec=pltpu.PrefetchScalarGridSpec(
            num_scalar_prefetch=2,                         # block_mask, kmap (SMEM)
            grid=(n_pad // tm, nk),
            in_specs=[
                # A tile: dedup DMA of zero blocks via kmap.
                pl.BlockSpec((tm, tk), lambda i, k, m, km: (i, km[i * nk + k])),
                # P_neigh tile: same dedup (zero A block -> reuse previous tile).
                pl.BlockSpec((tk, f_pad), lambda i, k, m, km: (km[i * nk + k], 0)),
                # P_self tile (f32, carries exact bias).
                pl.BlockSpec((tm, f_pad), lambda i, k, m, km: (i, 0)),
            ],
            out_specs=pl.BlockSpec((tm, f_pad), lambda i, k, m, km: (i, 0)),
            scratch_shapes=[pltpu.VMEM((tm, f_pad), jnp.float32)],
        ),
        out_shape=jax.ShapeDtypeStruct((n_pad, f_pad), out_dtype),
        compiler_params=pltpu.CompilerParams(
            dimension_semantics=("parallel", "arbitrary"),
            vmem_limit_bytes=32 << 20,
        ),
    )(block_mask, kmap, a_bf16, p_neigh, p_self)


# ----------------------------------------------------------------------------
# GraphSAGE model: conv1 -> ReLU -> conv2
# ----------------------------------------------------------------------------
def graphsage_forward(a_norm, x, params):
    n, f_in = x.shape
    f_out1 = params["w_self1"].shape[1]
    f_out2 = params["w_self2"].shape[1]

    n_pad = _round_up(n, ROW_ALIGN)
    f_in_pad = _round_up(f_in, LANE)
    f_pad = _round_up(max(f_out1, f_out2), LANE)   # lane-dense hidden width

    # Larger tiles: re-read of P_neigh scales as n_pad/tm, per-step overhead as
    # n_pad/tk.  Working set at tm=512/tk=2048 stays ~6-8 MiB (<< 32 MiB scoped).
    tm = next(c for c in (512, 256, 128) if n_pad % c == 0)
    tk = next(c for c in (2048, 1024, 512, 256, 128) if n_pad % c == 0)
    tm_proj = next(c for c in (1024, 512, 256, 128) if n_pad % c == 0)
    n_i, n_k = n_pad // tm, n_pad // tk

    # Adjacency streams as bf16 (f32 accumulation in-kernel).  Block mask and the
    # DMA-dedup kmap are built from the bf16 copy (no dense f32 transient).
    a_pad = _pad_to(a_norm, (n_pad, n_pad)).astype(jnp.bfloat16)
    nz_blocks = (a_pad != 0).reshape(n_i, tm, n_k, tk)
    block_mask_2d = nz_blocks.any(axis=(1, 3))                     # (n_i, n_k) bool
    block_mask = block_mask_2d.astype(jnp.int32).reshape(-1)

    # kmap[i, k] = k if block (i, k) non-zero else the previous non-zero k
    # (running max), 0 for a leading zero-run.  Compute stays gated by the mask.
    ks = jnp.arange(n_k, dtype=jnp.int32)
    kmap_2d = jax.lax.cummax(
        jnp.where(block_mask_2d, ks[None, :], jnp.int32(-1)), axis=1)
    kmap = jnp.maximum(kmap_2d, 0).astype(jnp.int32).reshape(-1)

    # Features pre-cast to bf16 (MXU consumes bf16 anyway) — halves X HBM traffic.
    x_pad = _pad_to(x, (n_pad, f_in_pad)).astype(jnp.bfloat16)

    def cat_weights(w_self, w_neigh, b, fi_pad):
        w_cat = jnp.concatenate(
            [_pad_to(w_self, (fi_pad, f_pad)), _pad_to(w_neigh, (fi_pad, f_pad))],
            axis=1).astype(jnp.bfloat16)
        b_pad = _pad_to(b.reshape(1, -1), (1, f_pad)).astype(jnp.float32)
        return w_cat, b_pad

    w_cat1, b1 = cat_weights(params["w_self1"], params["w_neigh1"], params["b1"],
                             f_in_pad)
    w_cat2, b2 = cat_weights(params["w_self2"], params["w_neigh2"], params["b2"],
                             f_pad)

    # Layer 1: fused projection, tiled mean-aggregation + ReLU, h1 emitted as bf16.
    ps1, pn1 = sage_project(x_pad, w_cat1, b1, tm=tm_proj)
    h1 = sage_aggregate(block_mask, kmap, a_pad, pn1, ps1,
                        tm=tm, tk=tk, apply_relu=True, out_dtype=jnp.bfloat16)

    # Layer 2 (no ReLU), final output in f32.
    ps2, pn2 = sage_project(h1, w_cat2, b2, tm=tm_proj)
    h2 = sage_aggregate(block_mask, kmap, a_pad, pn2, ps2,
                        tm=tm, tk=tk, apply_relu=False, out_dtype=jnp.float32)

    return h2[:n, :f_out2]


# ----------------------------------------------------------------------------
# Parameter / graph construction (pure JAX, not part of the kernel)
# ----------------------------------------------------------------------------
def init_params(key, in_feats, h_feats):
    k1, k2, k3, k4 = jax.random.split(key, 4)

    def xavier(k, fan_in, fan_out):
        scale = jnp.sqrt(2.0 / (fan_in + fan_out))
        return jax.random.normal(k, (fan_in, fan_out), jnp.float32) * scale

    return {
        "w_self1": xavier(k1, in_feats, h_feats),
        "w_neigh1": xavier(k2, in_feats, h_feats),
        "b1": jnp.zeros((h_feats,), jnp.float32),
        "w_self2": xavier(k3, h_feats, h_feats),
        "w_neigh2": xavier(k4, h_feats, h_feats),
        "b2": jnp.zeros((h_feats,), jnp.float32),
    }


def build_normalized_adjacency(key, num_nodes, avg_degree=4):
    """Random directed graph -> dense row-normalized adjacency (mean aggregation)."""
    num_edges = num_nodes * avg_degree
    ks, kd = jax.random.split(key)
    src = jax.random.randint(ks, (num_edges,), 0, num_nodes)
    dst = jax.random.randint(kd, (num_edges,), 0, num_nodes)
    adj = jnp.zeros((num_nodes, num_nodes), jnp.float32)
    adj = adj.at[dst, src].set(1.0)                  # A[i, j] = 1 if edge j -> i
    deg = jnp.maximum(jnp.sum(adj, axis=1, keepdims=True), 1.0)
    return adj / deg


if __name__ == "__main__":
    key = jax.random.PRNGKey(0)
    k_graph, k_feat, k_param = jax.random.split(key, 3)

    num_nodes = 64       # small synthetic "Cora-like" graph
    in_feats = 32
    h_feats = 16

    a_norm = build_normalized_adjacency(k_graph, num_nodes)
    x = jax.random.normal(k_feat, (num_nodes, in_feats), jnp.float32)
    params = init_params(k_param, in_feats, h_feats)

    fwd = jax.jit(graphsage_forward)
    h = fwd(a_norm, x, params)
    jax.block_until_ready(h)

    assert h.shape == (num_nodes, h_feats), h.shape
    assert h.dtype == jnp.float32, h.dtype

    # Pure-f32 JAX reference (kernel uses bf16 MXU inputs -> loosened tolerance).
    ref1 = jnp.maximum(
        x @ params["w_self1"] + (a_norm @ x) @ params["w_neigh1"] + params["b1"], 0.0)
    ref2 = ref1 @ params["w_self2"] + (a_norm @ ref1) @ params["w_neigh2"] + params["b2"]
    max_err = float(jnp.max(jnp.abs(h - ref2)))
    assert jnp.allclose(h, ref2, atol=5e-2, rtol=5e-2), max_err

    print("KERNEL_OK")
</pallas_src>

<mosaic_0001>
module attributes {stable_mosaic.version = 11 : i64} {
  func.func @_aggregate_kernel(%arg0: i32, %arg1: i32, %arg2: memref<1xi32, #tpu.memory_space<smem>>, %arg3: memref<1xi32, #tpu.memory_space<smem>>, %arg4: memref<512x512xbf16, #tpu.memory_space<vmem>>, %arg5: memref<512x128xbf16, #tpu.memory_space<vmem>>, %arg6: memref<512x128xf32, #tpu.memory_space<vmem>>, %arg7: memref<512x128xf32, #tpu.memory_space<vmem>>, %arg8: memref<512x128xf32, #tpu.memory_space<vmem>>) attributes {dimension_semantics = [#tpu.dimension_semantics<parallel>, #tpu.dimension_semantics<arbitrary>], iteration_bounds = array<i64: 1, 1>, scalar_prefetch = 2 : i64, scratch_operands = 1 : i64, tpu.core_type = #tpu.core_type<tc>, window_params = [{transform_indices = @transform_0, window_bounds = array<i64: 512, 512>}, {transform_indices = @transform_1, window_bounds = array<i64: 512, 128>}, {transform_indices = @transform_2, window_bounds = array<i64: 512, 128>}, {transform_indices = @transform_3, window_bounds = array<i64: 512, 128>}]} {
    %c0_i32 = arith.constant 0 : i32
    %0 = arith.cmpi eq, %arg1, %c0_i32 : i32
    %1 = arith.extui %0 : i1 to i32
    %c0_i32_0 = arith.constant 0 : i32
    %2 = arith.cmpi ne, %1, %c0_i32_0 : i32
    scf.if %2 {
      %cst = arith.constant 0.000000e+00 : f32
      %13 = vector.broadcast %cst : f32 to vector<512x128xf32>
      %c0 = arith.constant 0 : index
      %c0_5 = arith.constant 0 : index
      %14 = vector.load %arg8[%c0, %c0_5] : memref<512x128xf32, #tpu.memory_space<vmem>>, vector<512x128xf32>
      tpu.vector_store %arg8[%c0, %c0_5], %13 {strides = array<i32>} : memref<512x128xf32, #tpu.memory_space<vmem>>, vector<512x128xf32>,
    } else {
    }
    %c1_i32 = arith.constant 1 : i32
    %3 = arith.muli %arg0, %c1_i32 : i32
    %4 = arith.addi %3, %arg1 : i32
    %5 = arith.index_cast %4 : i32 to index
    %6 = memref.load %arg2[%5] : memref<1xi32, #tpu.memory_space<smem>>
    %c0_i32_1 = arith.constant 0 : i32
    %7 = arith.cmpi sgt, %6, %c0_i32_1 : i32
    %8 = arith.extui %7 : i1 to i32
    %c0_i32_2 = arith.constant 0 : i32
    %9 = arith.cmpi ne, %8, %c0_i32_2 : i32
    scf.if %9 {
      %c0 = arith.constant 0 : index
      %c0_5 = arith.constant 0 : index
      %13 = vector.load %arg8[%c0, %c0_5] : memref<512x128xf32, #tpu.memory_space<vmem>>, vector<512x128xf32>
      %c0_6 = arith.constant 0 : index
      %c0_7 = arith.constant 0 : index
      %14 = vector.load %arg4[%c0_6, %c0_7] : memref<512x512xbf16, #tpu.memory_space<vmem>>, vector<512x512xbf16>
      %c0_8 = arith.constant 0 : index
      %c0_9 = arith.constant 0 : index
      %15 = vector.load %arg5[%c0_8, %c0_9] : memref<512x128xbf16, #tpu.memory_space<vmem>>, vector<512x128xbf16>
      %cst = arith.constant dense<0.000000e+00> : vector<512x128xf32>
      %16 = tpu.matmul %14, %15, %cst {dimension_numbers = #tpu.dot_dimension_numbers<[1], [0], [0], [1], [0, 0, 1, 1], [], []>} : vector<512x512xbf16>, vector<512x128xbf16>, vector<512x128xf32> -> vector<512x128xf32>
      %17 = arith.addf %13, %16 : vector<512x128xf32>
      %c0_10 = arith.constant 0 : index
      %c0_11 = arith.constant 0 : index
      %18 = vector.load %arg8[%c0_10, %c0_11] : memref<512x128xf32, #tpu.memory_space<vmem>>, vector<512x128xf32>
      tpu.vector_store %arg8[%c0_10, %c0_11], %17 {strides = array<i32>} : memref<512x128xf32, #tpu.memory_space<vmem>>, vector<512x128xf32>,
    } else {
    }
    %c0_i32_3 = arith.constant 0 : i32
    %10 = arith.cmpi eq, %arg1, %c0_i32_3 : i32
    %11 = arith.extui %10 : i1 to i32
    %c0_i32_4 = arith.constant 0 : i32
    %12 = arith.cmpi ne, %11, %c0_i32_4 : i32
    scf.if %12 {
      %c0 = arith.constant 0 : index
      %c0_5 = arith.constant 0 : index
      %13 = vector.load %arg8[%c0, %c0_5] : memref<512x128xf32, #tpu.memory_space<vmem>>, vector<512x128xf32>
      %c0_6 = arith.constant 0 : index
      %c0_7 = arith.constant 0 : index
      %14 = vector.load %arg6[%c0_6, %c0_7] : memref<512x128xf32, #tpu.memory_space<vmem>>, vector<512x128xf32>
      %15 = arith.addf %13, %14 : vector<512x128xf32>
      %c0_8 = arith.constant 0 : index
      %c0_9 = arith.constant 0 : index
      %16 = vector.load %arg7[%c0_8, %c0_9] : memref<512x128xf32, #tpu.memory_space<vmem>>, vector<512x128xf32>
      tpu.vector_store %arg7[%c0_8, %c0_9], %15 {strides = array<i32>} : memref<512x128xf32, #tpu.memory_space<vmem>>, vector<512x128xf32>,
    } else {
    }
    return
  }
  func.func @transform_0(%arg0: i32, %arg1: i32, %arg2: memref<1xi32, #tpu.memory_space<smem>>, %arg3: memref<1xi32, #tpu.memory_space<smem>>) -> (i32, i32) {
    %c1_i32 = arith.constant 1 : i32
    %0 = arith.muli %arg0, %c1_i32 : i32
    %1 = arith.addi %0, %arg1 : i32
    %2 = arith.index_cast %1 : i32 to index
    %3 = memref.load %arg3[%2] : memref<1xi32, #tpu.memory_space<smem>>
    %c0_i32 = arith.constant 0 : i32
    return %arg0, %3 : i32, i32
  }
  func.func @transform_1(%arg0: i32, %arg1: i32, %arg2: memref<1xi32, #tpu.memory_space<smem>>, %arg3: memref<1xi32, #tpu.memory_space<smem>>) -> (i32, i32) {
    %c1_i32 = arith.constant 1 : i32
    %0 = arith.muli %arg0, %c1_i32 : i32
    %1 = arith.addi %0, %arg1 : i32
    %2 = arith.index_cast %1 : i32 to index
    %3 = memref.load %arg3[%2] : memref<1xi32, #tpu.memory_space<smem>>
    %c0_i32 = arith.constant 0 : i32
    %c0_i32_0 = arith.constant 0 : i32
    return %3, %c0_i32 : i32, i32
  }
  func.func @transform_2(%arg0: i32, %arg1: i32, %arg2: memref<1xi32, #tpu.memory_space<smem>>, %arg3: memref<1xi32, #tpu.memory_space<smem>>) -> (i32, i32) {
    %c0_i32 = arith.constant 0 : i32
    %c0_i32_0 = arith.constant 0 : i32
    return %arg0, %c0_i32 : i32, i32
  }
  func.func @transform_3(%arg0: i32, %arg1: i32, %arg2: memref<1xi32, #tpu.memory_space<smem>>, %arg3: memref<1xi32, #tpu.memory_space<smem>>) -> (i32, i32) {
    %c0_i32 = arith.constant 0 : i32
    %c0_i32_0 = arith.constant 0 : i32
    return %arg0, %c0_i32 : i32, i32
  }
}

module attributes {stable_mosaic.version = 11 : i64} {
  func.func @_project_kernel(%arg0: i32, %arg1: memref<512x128xbf16, #tpu.memory_space<vmem>>, %arg2: memref<128x256xbf16, #tpu.memory_space<vmem>>, %arg3: memref<1x128xf32, #tpu.memory_space<vmem>>, %arg4: memref<512x128xf32, #tpu.memory_space<vmem>>, %arg5: memref<512x128xbf16, #tpu.memory_space<vmem>>) attributes {dimension_semantics = [#tpu.dimension_semantics<parallel>], iteration_bounds = array<i64: 1>, scalar_prefetch = 0 : i64, scratch_operands = 0 : i64, tpu.core_type = #tpu.core_type<tc>, window_params = [{transform_indices = @transform_0, window_bounds = array<i64: 512, 128>}, {pipeline_mode = #tpu.pipeline_mode<synchronous>, transform_indices = @transform_1, window_bounds = array<i64: 128, 256>}, {pipeline_mode = #tpu.pipeline_mode<synchronous>, transform_indices = @transform_2, window_bounds = array<i64: 1, 128>}, {transform_indices = @transform_3, window_bounds = array<i64: 512, 128>}, {transform_indices = @transform_4, window_bounds = array<i64: 512, 128>}]} {
    %c0 = arith.constant 0 : index
    %c0_0 = arith.constant 0 : index
    %0 = vector.load %arg1[%c0, %c0_0] : memref<512x128xbf16, #tpu.memory_space<vmem>>, vector<512x128xbf16>
    %c0_1 = arith.constant 0 : index
    %c0_2 = arith.constant 0 : index
    %1 = vector.load %arg2[%c0_1, %c0_2] : memref<128x256xbf16, #tpu.memory_space<vmem>>, vector<128x256xbf16>
    %cst = arith.constant dense<0.000000e+00> : vector<512x256xf32>
    %2 = tpu.matmul %0, %1, %cst {dimension_numbers = #tpu.dot_dimension_numbers<[1], [0], [0], [1], [0, 0, 1, 1], [], []>} : vector<512x128xbf16>, vector<128x256xbf16>, vector<512x256xf32> -> vector<512x256xf32>
    %3 = vector.extract_strided_slice %2 {offsets = [0, 0], sizes = [512, 128], strides = [1, 1]} : vector<512x256xf32> to vector<512x128xf32>
    %c0_3 = arith.constant 0 : index
    %c0_4 = arith.constant 0 : index
    %4 = vector.load %arg3[%c0_3, %c0_4] : memref<1x128xf32, #tpu.memory_space<vmem>>, vector<1x128xf32>
    %5 = vector.broadcast %4 : vector<1x128xf32> to vector<512x128xf32>
    %6 = arith.addf %3, %5 : vector<512x128xf32>
    %c0_5 = arith.constant 0 : index
    %c0_6 = arith.constant 0 : index
    %7 = vector.load %arg4[%c0_5, %c0_6] : memref<512x128xf32, #tpu.memory_space<vmem>>, vector<512x128xf32>
    tpu.vector_store %arg4[%c0_5, %c0_6], %6 {strides = array<i32>} : memref<512x128xf32, #tpu.memory_space<vmem>>, vector<512x128xf32>,
    %8 = vector.extract_strided_slice %2 {offsets = [0, 128], sizes = [512, 128], strides = [1, 1]} : vector<512x256xf32> to vector<512x128xf32>
    %9 = arith.truncf %8 : vector<512x128xf32> to vector<512x128xbf16>
    %c0_7 = arith.constant 0 : index
    %c0_8 = arith.constant 0 : index
    %10 = vector.load %arg5[%c0_7, %c0_8] : memref<512x128xbf16, #tpu.memory_space<vmem>>, vector<512x128xbf16>
    tpu.vector_store %arg5[%c0_7, %c0_8], %9 {strides = array<i32>} : memref<512x128xbf16, #tpu.memory_space<vmem>>, vector<512x128xbf16>,
    return
  }
  func.func @transform_0(%arg0: i32) -> (i32, i32) {
    %c0_i32 = arith.constant 0 : i32
    %c0_i32_0 = arith.constant 0 : i32
    return %arg0, %c0_i32 : i32, i32
  }
  func.func @transform_1(%arg0: i32) -> (i32, i32) {
    %c0_i32 = arith.constant 0 : i32
    %c0_i32_0 = arith.constant 0 : i32
    %c0_i32_1 = arith.constant 0 : i32
    return %c0_i32, %c0_i32_0 : i32, i32
  }
  func.func @transform_2(%arg0: i32) -> (i32, i32) {
    %c0_i32 = arith.constant 0 : i32
    %c0_i32_0 = arith.constant 0 : i32
    %c0_i32_1 = arith.constant 0 : i32
    return %c0_i32, %c0_i32_0 : i32, i32
  }
  func.func @transform_3(%arg0: i32) -> (i32, i32) {
    %c0_i32 = arith.constant 0 : i32
    %c0_i32_0 = arith.constant 0 : i32
    return %arg0, %c0_i32 : i32, i32
  }
  func.func @transform_4(%arg0: i32) -> (i32, i32) {
    %c0_i32 = arith.constant 0 : i32
    %c0_i32_0 = arith.constant 0 : i32
    return %arg0, %c0_i32 : i32, i32
  }
}

module attributes {stable_mosaic.version = 11 : i64} {
  func.func @_aggregate_kernel(%arg0: i32, %arg1: i32, %arg2: memref<1xi32, #tpu.memory_space<smem>>, %arg3: memref<1xi32, #tpu.memory_space<smem>>, %arg4: memref<512x512xbf16, #tpu.memory_space<vmem>>, %arg5: memref<512x128xbf16, #tpu.memory_space<vmem>>, %arg6: memref<512x128xf32, #tpu.memory_space<vmem>>, %arg7: memref<512x128xbf16, #tpu.memory_space<vmem>>, %arg8: memref<512x128xf32, #tpu.memory_space<vmem>>) attributes {dimension_semantics = [#tpu.dimension_semantics<parallel>, #tpu.dimension_semantics<arbitrary>], iteration_bounds = array<i64: 1, 1>, scalar_prefetch = 2 : i64, scratch_operands = 1 : i64, tpu.core_type = #tpu.core_type<tc>, window_params = [{transform_indices = @transform_0, window_bounds = array<i64: 512, 512>}, {transform_indices = @transform_1, window_bounds = array<i64: 512, 128>}, {transform_indices = @transform_2, window_bounds = array<i64: 512, 128>}, {transform_indices = @transform_3, window_bounds = array<i64: 512, 128>}]} {
    %c0_i32 = arith.constant 0 : i32
    %0 = arith.cmpi eq, %arg1, %c0_i32 : i32
    %1 = arith.extui %0 : i1 to i32
    %c0_i32_0 = arith.constant 0 : i32
    %2 = arith.cmpi ne, %1, %c0_i32_0 : i32
    scf.if %2 {
      %cst = arith.constant 0.000000e+00 : f32
      %13 = vector.broadcast %cst : f32 to vector<512x128xf32>
      %c0 = arith.constant 0 : index
      %c0_5 = arith.constant 0 : index
      %14 = vector.load %arg8[%c0, %c0_5] : memref<512x128xf32, #tpu.memory_space<vmem>>, vector<512x128xf32>
      tpu.vector_store %arg8[%c0, %c0_5], %13 {strides = array<i32>} : memref<512x128xf32, #tpu.memory_space<vmem>>, vector<512x128xf32>,
    } else {
    }
    %c1_i32 = arith.constant 1 : i32
    %3 = arith.muli %arg0, %c1_i32 : i32
    %4 = arith.addi %3, %arg1 : i32
    %5 = arith.index_cast %4 : i32 to index
    %6 = memref.load %arg2[%5] : memref<1xi32, #tpu.memory_space<smem>>
    %c0_i32_1 = arith.constant 0 : i32
    %7 = arith.cmpi sgt, %6, %c0_i32_1 : i32
    %8 = arith.extui %7 : i1 to i32
    %c0_i32_2 = arith.constant 0 : i32
    %9 = arith.cmpi ne, %8, %c0_i32_2 : i32
    scf.if %9 {
      %c0 = arith.constant 0 : index
      %c0_5 = arith.constant 0 : index
      %13 = vector.load %arg8[%c0, %c0_5] : memref<512x128xf32, #tpu.memory_space<vmem>>, vector<512x128xf32>
      %c0_6 = arith.constant 0 : index
      %c0_7 = arith.constant 0 : index
      %14 = vector.load %arg4[%c0_6, %c0_7] : memref<512x512xbf16, #tpu.memory_space<vmem>>, vector<512x512xbf16>
      %c0_8 = arith.constant 0 : index
      %c0_9 = arith.constant 0 : index
      %15 = vector.load %arg5[%c0_8, %c0_9] : memref<512x128xbf16, #tpu.memory_space<vmem>>, vector<512x128xbf16>
      %cst = arith.constant dense<0.000000e+00> : vector<512x128xf32>
      %16 = tpu.matmul %14, %15, %cst {dimension_numbers = #tpu.dot_dimension_numbers<[1], [0], [0], [1], [0, 0, 1, 1], [], []>} : vector<512x512xbf16>, vector<512x128xbf16>, vector<512x128xf32> -> vector<512x128xf32>
      %17 = arith.addf %13, %16 : vector<512x128xf32>
      %c0_10 = arith.constant 0 : index
      %c0_11 = arith.constant 0 : index
      %18 = vector.load %arg8[%c0_10, %c0_11] : memref<512x128xf32, #tpu.memory_space<vmem>>, vector<512x128xf32>
      tpu.vector_store %arg8[%c0_10, %c0_11], %17 {strides = array<i32>} : memref<512x128xf32, #tpu.memory_space<vmem>>, vector<512x128xf32>,
    } else {
    }
    %c0_i32_3 = arith.constant 0 : i32
    %10 = arith.cmpi eq, %arg1, %c0_i32_3 : i32
    %11 = arith.extui %10 : i1 to i32
    %c0_i32_4 = arith.constant 0 : i32
    %12 = arith.cmpi ne, %11, %c0_i32_4 : i32
    scf.if %12 {
      %c0 = arith.constant 0 : index
      %c0_5 = arith.constant 0 : index
      %13 = vector.load %arg8[%c0, %c0_5] : memref<512x128xf32, #tpu.memory_space<vmem>>, vector<512x128xf32>
      %c0_6 = arith.constant 0 : index
      %c0_7 = arith.constant 0 : index
      %14 = vector.load %arg6[%c0_6, %c0_7] : memref<512x128xf32, #tpu.memory_space<vmem>>, vector<512x128xf32>
      %15 = arith.addf %13, %14 : vector<512x128xf32>
      %cst = arith.constant 0.000000e+00 : f32
      %16 = vector.broadcast %cst : f32 to vector<512x128xf32>
      %17 = arith.maximumf %15, %16 : vector<512x128xf32>
      %18 = arith.truncf %17 : vector<512x128xf32> to vector<512x128xbf16>
      %c0_8 = arith.constant 0 : index
      %c0_9 = arith.constant 0 : index
      %19 = vector.load %arg7[%c0_8, %c0_9] : memref<512x128xbf16, #tpu.memory_space<vmem>>, vector<512x128xbf16>
      tpu.vector_store %arg7[%c0_8, %c0_9], %18 {strides = array<i32>} : memref<512x128xbf16, #tpu.memory_space<vmem>>, vector<512x128xbf16>,
    } else {
    }
    return
  }
  func.func @transform_0(%arg0: i32, %arg1: i32, %arg2: memref<1xi32, #tpu.memory_space<smem>>, %arg3: memref<1xi32, #tpu.memory_space<smem>>) -> (i32, i32) {
    %c1_i32 = arith.constant 1 : i32
    %0 = arith.muli %arg0, %c1_i32 : i32
    %1 = arith.addi %0, %arg1 : i32
    %2 = arith.index_cast %1 : i32 to index
    %3 = memref.load %arg3[%2] : memref<1xi32, #tpu.memory_space<smem>>
    %c0_i32 = arith.constant 0 : i32
    return %arg0, %3 : i32, i32
  }
  func.func @transform_1(%arg0: i32, %arg1: i32, %arg2: memref<1xi32, #tpu.memory_space<smem>>, %arg3: memref<1xi32, #tpu.memory_space<smem>>) -> (i32, i32) {
    %c1_i32 = arith.constant 1 : i32
    %0 = arith.muli %arg0, %c1_i32 : i32
    %1 = arith.addi %0, %arg1 : i32
    %2 = arith.index_cast %1 : i32 to index
    %3 = memref.load %arg3[%2] : memref<1xi32, #tpu.memory_space<smem>>
    %c0_i32 = arith.constant 0 : i32
    %c0_i32_0 = arith.constant 0 : i32
    return %3, %c0_i32 : i32, i32
  }
  func.func @transform_2(%arg0: i32, %arg1: i32, %arg2: memref<1xi32, #tpu.memory_space<smem>>, %arg3: memref<1xi32, #tpu.memory_space<smem>>) -> (i32, i32) {
    %c0_i32 = arith.constant 0 : i32
    %c0_i32_0 = arith.constant 0 : i32
    return %arg0, %c0_i32 : i32, i32
  }
  func.func @transform_3(%arg0: i32, %arg1: i32, %arg2: memref<1xi32, #tpu.memory_space<smem>>, %arg3: memref<1xi32, #tpu.memory_space<smem>>) -> (i32, i32) {
    %c0_i32 = arith.constant 0 : i32
    %c0_i32_0 = arith.constant 0 : i32
    return %arg0, %c0_i32 : i32, i32
  }
}

</mosaic_0001>

<llo_original>
// kernel: graphsage_forward.4
$region0: #{graphsage_forward.4}
  #allocation0 [shape = 'u32[]', space=smem, size = 0x4, offset = 0x4, fixed_abs, tag = 'smem constant byte address 0x4 - core index']
  #allocation1 [shape = 'u32[144,128]{1,0:T(1,128)}', space=vmem, size = 0x12000, scoped, tag = 'internal scratch']
  %s0 = inlined_call_operand.vmem [shape: bf16[512,128], index: 0, kind: input, shape index: {}]
  %s1 = inlined_call_operand.vmem [shape: bf16[128,256], index: 1, kind: input, shape index: {}]
  %s2 = inlined_call_operand.vmem [shape: f32[1,128], index: 2, kind: input, shape index: {}]
  %s3 = inlined_call_operand.vmem [shape: f32[512,128], index: 3, kind: output, shape index: {0}]
  %s4 = inlined_call_operand.vmem [shape: bf16[512,128], index: 4, kind: output, shape index: {1}]
  %5 = xla_tuple %s3, %s4
  %s6 = sld [smem:[#allocation0]]
  $region30: #{graphsage_forward.4} parent=0
    _
  %s8 = ssub.s32 1, %s6
  %s9 = scalar_select 0, %s8, %s6
  // Predicated region
  $region2: #{graphsage_forward.4} parent=0 // pred_check
    _
  $region3: #{graphsage_forward.4} parent=0 // pred_check_branch
    %11 = sbr.rel (0) target = $region5
  $region4: #{graphsage_forward.4} parent=0 // pred_region
    _
  $region5: #{graphsage_forward.4} parent=0 // pred_fallthru
    _
  // Predicated region
  $region6: #{graphsage_forward.4} parent=0 // pred_check
    _
  $region7: #{graphsage_forward.4} parent=0 // pred_check_branch
    %13 = sbr.rel (0) target = $region9
  $region8: #{graphsage_forward.4} parent=0 // pred_region
    _
  $region9: #{graphsage_forward.4} parent=0 // pred_fallthru
    _
  // Predicated region
  $region10: #{graphsage_forward.4} parent=0 // pred_check
    _
  $region11: #{graphsage_forward.4} parent=0 // pred_check_branch
    %15 = sbr.rel (0) target = $region13
  $region12: #{graphsage_forward.4} parent=0 // pred_region
    _
  $region13: #{graphsage_forward.4} parent=0 // pred_fallthru
    _
  %v17 = vld [vmem:[%s0] sm:$0xf]
  %v18 = vld [vmem:[%s0 + $0x4] sm:$0xf]
  %v19 = vld [vmem:[%s0 + $0x8] sm:$0xf]
  %v20 = vld [vmem:[%s0 + $0xc] sm:$0xf]
  %v21 = vld [vmem:[%s0 + $0x10] sm:$0xf]
  %v22 = vld [vmem:[%s0 + $0x14] sm:$0xf]
  %v23 = vld [vmem:[%s0 + $0x18] sm:$0xf]
  %v24 = vld [vmem:[%s0 + $0x1c] sm:$0xf]
  %v25 = vld [vmem:[%s0 + $0x20] sm:$0xf]
  %v26 = vld [vmem:[%s0 + $0x24] sm:$0xf]
  %v27 = vld [vmem:[%s0 + $0x28] sm:$0xf]
  %v28 = vld [vmem:[%s0 + $0x2c] sm:$0xf]
  %v29 = vld [vmem:[%s0 + $0x30] sm:$0xf]
  %v30 = vld [vmem:[%s0 + $0x34] sm:$0xf]
  %v31 = vld [vmem:[%s0 + $0x38] sm:$0xf]
  %v32 = vld [vmem:[%s0 + $0x3c] sm:$0xf]
  %v33 = vld [vmem:[%s0 + $0x40] sm:$0xf]
  %v34 = vld [vmem:[%s0 + $0x44] sm:$0xf]
  %v35 = vld [vmem:[%s0 + $0x48] sm:$0xf]
  %v36 = vld [vmem:[%s0 + $0x4c] sm:$0xf]
  %v37 = vld [vmem:[%s0 + $0x50] sm:$0xf]
  %v38 = vld [vmem:[%s0 + $0x54] sm:$0xf]
  %v39 = vld [vmem:[%s0 + $0x58] sm:$0xf]
  %v40 = vld [vmem:[%s0 + $0x5c] sm:$0xf]
  %v41 = vld [vmem:[%s0 + $0x60] sm:$0xf]
  %v42 = vld [vmem:[%s0 + $0x64] sm:$0xf]
  %v43 = vld [vmem:[%s0 + $0x68] sm:$0xf]
  %v44 = vld [vmem:[%s0 + $0x6c] sm:$0xf]
  %v45 = vld [vmem:[%s0 + $0x70] sm:$0xf]
  %v46 = vld [vmem:[%s0 + $0x74] sm:$0xf]
  %v47 = vld [vmem:[%s0 + $0x78] sm:$0xf]
  %v48 = vld [vmem:[%s0 + $0x7c] sm:$0xf]
  %v49 = vld [vmem:[%s0 + $0x80] sm:$0xf]
  %v50 = vld [vmem:[%s0 + $0x84] sm:$0xf]
  %v51 = vld [vmem:[%s0 + $0x88] sm:$0xf]
  %v52 = vld [vmem:[%s0 + $0x8c] sm:$0xf]
  %v53 = vld [vmem:[%s0 + $0x90] sm:$0xf]
  %v54 = vld [vmem:[%s0 + $0x94] sm:$0xf]
  %v55 = vld [vmem:[%s0 + $0x98] sm:$0xf]
  %v56 = vld [vmem:[%s0 + $0x9c] sm:$0xf]
  %v57 = vld [vmem:[%s0 + $0xa0] sm:$0xf]
  %v58 = vld [vmem:[%s0 + $0xa4] sm:$0xf]
  %v59 = vld [vmem:[%s0 + $0xa8] sm:$0xf]
  %v60 = vld [vmem:[%s0 + $0xac] sm:$0xf]
  %v61 = vld [vmem:[%s0 + $0xb0] sm:$0xf]
  %v62 = vld [vmem:[%s0 + $0xb4] sm:$0xf]
  %v63 = vld [vmem:[%s0 + $0xb8] sm:$0xf]
  %v64 = vld [vmem:[%s0 + $0xbc] sm:$0xf]
  %v65 = vld [vmem:[%s0 + $0xc0] sm:$0xf]
  %v66 = vld [vmem:[%s0 + $0xc4] sm:$0xf]
  %v67 = vld [vmem:[%s0 + $0xc8] sm:$0xf]
  %v68 = vld [vmem:[%s0 + $0xcc] sm:$0xf]
  %v69 = vld [vmem:[%s0 + $0xd0] sm:$0xf]
  %v70 = vld [vmem:[%s0 + $0xd4] sm:$0xf]
  %v71 = vld [vmem:[%s0 + $0xd8] sm:$0xf]
  %v72 = vld [vmem:[%s0 + $0xdc] sm:$0xf]
  %v73 = vld [vmem:[%s0 + $0xe0] sm:$0xf]
  %v74 = vld [vmem:[%s0 + $0xe4] sm:$0xf]
  %v75 = vld [vmem:[%s0 + $0xe8] sm:$0xf]
  %v76 = vld [vmem:[%s0 + $0xec] sm:$0xf]
  %v77 = vld [vmem:[%s0 + $0xf0] sm:$0xf]
  %v78 = vld [vmem:[%s0 + $0xf4] sm:$0xf]
  %v79 = vld [vmem:[%s0 + $0xf8] sm:$0xf]
  %v80 = vld [vmem:[%s0 + $0xfc] sm:$0xf]
  %v81 = vld [vmem:[%s1] sm:$0xff]
  %v82 = vld [vmem:[%s1 + $0x8] sm:$0xff]
  %v83 = vld [vmem:[%s1 + $0x10] sm:$0xff]
  %v84 = vld [vmem:[%s1 + $0x18] sm:$0xff]
  %v85 = vld [vmem:[%s1 + $0x20] sm:$0xff]
  %v86 = vld [vmem:[%s1 + $0x28] sm:$0xff]
  %v87 = vld [vmem:[%s1 + $0x30] sm:$0xff]
  %v88 = vld [vmem:[%s1 + $0x38] sm:$0xff]
  %v89 = vld [vmem:[%s1 + $0x40] sm:$0xff]
  %v90 = vld [vmem:[%s1 + $0x48] sm:$0xff]
  %v91 = vld [vmem:[%s1 + $0x50] sm:$0xff]
  %v92 = vld [vmem:[%s1 + $0x58] sm:$0xff]
  %v93 = vld [vmem:[%s1 + $0x60] sm:$0xff]
  %v94 = vld [vmem:[%s1 + $0x68] sm:$0xff]
  %v95 = vld [vmem:[%s1 + $0x70] sm:$0xff]
  %v96 = vld [vmem:[%s1 + $0x78] sm:$0xff]
  %v161 = vunpack.c.l.b16 %v17
  %v162 = vunpack.c.l.b16 %v18
  %v163 = vunpack.c.l.b16 %v19
  %v164 = vunpack.c.l.b16 %v20
  %v165 = vunpack.c.l.b16 %v21
  %v166 = vunpack.c.l.b16 %v22
  %v167 = vunpack.c.l.b16 %v23
  %v168 = vunpack.c.l.b16 %v24
  %v169 = vunpack.c.l.b16 %v25
  %v170 = vunpack.c.l.b16 %v26
  %v171 = vunpack.c.l.b16 %v27
  %v172 = vunpack.c.l.b16 %v28
  %v173 = vunpack.c.l.b16 %v29
  %v174 = vunpack.c.l.b16 %v30
  %v175 = vunpack.c.l.b16 %v31
  %v176 = vunpack.c.l.b16 %v32
  %v177 = vunpack.c.l.b16 %v33
  %v178 = vunpack.c.l.b16 %v34
  %v179 = vunpack.c.l.b16 %v35
  %v180 = vunpack.c.l.b16 %v36
  %v181 = vunpack.c.l.b16 %v37
  %v182 = vunpack.c.l.b16 %v38
  %v183 = vunpack.c.l.b16 %v39
  %v184 = vunpack.c.l.b16 %v40
  %v185 = vunpack.c.l.b16 %v41
  %v186 = vunpack.c.l.b16 %v42
  %v187 = vunpack.c.l.b16 %v43
  %v188 = vunpack.c.l.b16 %v44
  %v189 = vunpack.c.l.b16 %v45
  %v190 = vunpack.c.l.b16 %v46
  %v191 = vunpack.c.l.b16 %v47
  %v192 = vunpack.c.l.b16 %v48
  %v193 = vunpack.c.l.b16 %v49
  %v194 = vunpack.c.l.b16 %v50
  %v195 = vunpack.c.l.b16 %v51
  %v196 = vunpack.c.l.b16 %v52
  %v197 = vunpack.c.l.b16 %v53
  %v198 = vunpack.c.l.b16 %v54
  %v199 = vunpack.c.l.b16 %v55
  %v200 = vunpack.c.l.b16 %v56
  %v201 = vunpack.c.l.b16 %v57
  %v202 = vunpack.c.l.b16 %v58
  %v203 = vunpack.c.l.b16 %v59
  %v204 = vunpack.c.l.b16 %v60
  %v205 = vunpack.c.l.b16 %v61
  %v206 = vunpack.c.l.b16 %v62
  %v207 = vunpack.c.l.b16 %v63
  %v208 = vunpack.c.l.b16 %v64
  %v209 = vunpack.c.l.b16 %v65
  %v210 = vunpack.c.l.b16 %v66
  %v211 = vunpack.c.l.b16 %v67
  %v212 = vunpack.c.l.b16 %v68
  %v213 = vunpack.c.l.b16 %v69
  %v214 = vunpack.c.l.b16 %v70
  %v215 = vunpack.c.l.b16 %v71
  %v216 = vunpack.c.l.b16 %v72
  %v217 = vunpack.c.l.b16 %v73
  %v218 = vunpack.c.l.b16 %v74
  %v219 = vunpack.c.l.b16 %v75
  %v220 = vunpack.c.l.b16 %v76
  %v221 = vunpack.c.l.b16 %v77
  %v222 = vunpack.c.l.b16 %v78
  %v223 = vunpack.c.l.b16 %v79
  %v224 = vunpack.c.l.b16 %v80
  %v225 = vpack.c.b16 %v162, %v161
  %v226 = vpack.c.b16 %v164, %v163
  %v227 = vpack.c.b16 %v166, %v165
  %v228 = vpack.c.b16 %v168, %v167
  %v229 = vpack.c.b16 %v170, %v169
  %v230 = vpack.c.b16 %v172, %v171
  %v231 = vpack.c.b16 %v174, %v173
  %v232 = vpack.c.b16 %v176, %v175
  %v233 = vpack.c.b16 %v178, %v177
  %v234 = vpack.c.b16 %v180, %v179
  %v235 = vpack.c.b16 %v182, %v181
  %v236 = vpack.c.b16 %v184, %v183
  %v237 = vpack.c.b16 %v186, %v185
  %v238 = vpack.c.b16 %v188, %v187
  %v239 = vpack.c.b16 %v190, %v189
  %v240 = vpack.c.b16 %v192, %v191
  %v241 = vpack.c.b16 %v194, %v193
  %v242 = vpack.c.b16 %v196, %v195
  %v243 = vpack.c.b16 %v198, %v197
  %v244 = vpack.c.b16 %v200, %v199
  %v245 = vpack.c.b16 %v202, %v201
  %v246 = vpack.c.b16 %v204, %v203
  %v247 = vpack.c.b16 %v206, %v205
  %v248 = vpack.c.b16 %v208, %v207
  %v249 = vpack.c.b16 %v210, %v209
  %v250 = vpack.c.b16 %v212, %v211
  %v251 = vpack.c.b16 %v214, %v213
  %v252 = vpack.c.b16 %v216, %v215
  %v253 = vpack.c.b16 %v218, %v217
  %v254 = vpack.c.b16 %v220, %v219
  %v255 = vpack.c.b16 %v222, %v221
  %v256 = vpack.c.b16 %v224, %v223
  %v305 = vunpack.c.l.b16 %v81
  %v306 = vunpack.c.h.b16 %v81
  %v307 = vunpack.c.l.b16 %v82
  %v308 = vunpack.c.h.b16 %v82
  %v309 = vunpack.c.l.b16 %v83
  %v310 = vunpack.c.h.b16 %v83
  %v311 = vunpack.c.l.b16 %v84
  %v312 = vunpack.c.h.b16 %v84
  %v313 = vunpack.c.l.b16 %v85
  %v314 = vunpack.c.h.b16 %v85
  %v315 = vunpack.c.l.b16 %v86
  %v316 = vunpack.c.h.b16 %v86
  %v317 = vunpack.c.l.b16 %v87
  %v318 = vunpack.c.h.b16 %v87
  %v319 = vunpack.c.l.b16 %v88
  %v320 = vunpack.c.h.b16 %v88
  %v321 = vunpack.c.l.b16 %v89
  %v322 = vunpack.c.h.b16 %v89
  %v323 = vunpack.c.l.b16 %v90
  %v324 = vunpack.c.h.b16 %v90
  %v325 = vunpack.c.l.b16 %v91
  %v326 = vunpack.c.h.b16 %v91
  %v327 = vunpack.c.l.b16 %v92
  %v328 = vunpack.c.h.b16 %v92
  %v329 = vunpack.c.l.b16 %v93
  %v330 = vunpack.c.h.b16 %v93
  %v331 = vunpack.c.l.b16 %v94
  %v332 = vunpack.c.h.b16 %v94
  %v333 = vunpack.c.l.b16 %v95
  %v334 = vunpack.c.h.b16 %v95
  %v335 = vunpack.c.l.b16 %v96
  %v336 = vunpack.c.h.b16 %v96
  %v337 = vpack.c.b16 %v307, %v305
  %v338 = vpack.c.b16 %v308, %v306
  %v339 = vpack.c.b16 %v311, %v309
  %v340 = vpack.c.b16 %v312, %v310
  %v341 = vpack.c.b16 %v315, %v313
  %v342 = vpack.c.b16 %v316, %v314
  %v343 = vpack.c.b16 %v319, %v317
  %v344 = vpack.c.b16 %v320, %v318
  %v345 = vpack.c.b16 %v323, %v321
  %v346 = vpack.c.b16 %v324, %v322
  %v347 = vpack.c.b16 %v327, %v325
  %v348 = vpack.c.b16 %v328, %v326
  %v349 = vpack.c.b16 %v331, %v329
  %v350 = vpack.c.b16 %v332, %v330
  %v351 = vpack.c.b16 %v335, %v333
  %v352 = vpack.c.b16 %v336, %v334
  %369 = vmatprep.subr.bf16.mxu0 %v338
  %370 = vmatpush1.bf16.msra.mxu0 %v337
  %371 = vmatprep.subr.bf16.mxu0 %v340
  %372 = vmatpush1.bf16.msra.mxu0 %v339
  %373 = vmatprep.subr.bf16.mxu0 %v342
  %374 = vmatpush1.bf16.msra.mxu0 %v341
  %375 = vmatprep.subr.bf16.mxu0 %v344
  %376 = vmatpush1.bf16.msra.mxu0 %v343
  %377 = vmatprep.subr.bf16.mxu0 %v346
  %378 = vmatpush1.bf16.msra.mxu0 %v345
  %379 = vmatprep.subr.bf16.mxu0 %v348
  %380 = vmatpush1.bf16.msra.mxu0 %v347
  %381 = vmatprep.subr.bf16.mxu0 %v350
  %382 = vmatpush1.bf16.msra.mxu0 %v349
  %383 = vmatprep.subr.bf16.mxu0 %v352
  %384 = vmatpush1.bf16.msra.mxu0 %v351
  %385 = vmatprep.subr.bf16.mxu0 0
  %386 = vmatpush1.bf16.msra.mxu0 0
  %387 = vmatprep.subr.bf16.mxu0 0
  %388 = vmatpush1.bf16.msra.mxu0 0
  %389 = vmatprep.subr.bf16.mxu0 0
  %390 = vmatpush1.bf16.msra.mxu0 0
  %391 = vmatprep.subr.bf16.mxu0 0
  %392 = vmatpush1.bf16.msra.mxu0 0
  %393 = vmatprep.subr.bf16.mxu0 0
  %394 = vmatpush1.bf16.msra.mxu0 0
  %395 = vmatprep.subr.bf16.mxu0 0
  %396 = vmatpush1.bf16.msra.mxu0 0
  %397 = vmatprep.subr.bf16.mxu0 0
  %398 = vmatpush1.bf16.msra.mxu0 0
  %399 = vmatprep.subr.bf16.mxu0 0
  %400 = vmatpush1.bf16.msra.mxu0 0
  %401 = vmatprep.mubr.bf16.mxu0 0
  %402 = vmatmul.mubr.bf16.gmra.mrb[0].mxu0 %v225
  %v403 = vpop.f32.mrb[0].mxu0
  %v404 = vadd.f32 0.0, %v403
  %v405 = vpop.f32.mrb[0].mxu0
  %v406 = vadd.f32 0.0, %v405
  %v407 = vpop.f32.mrb[0].mxu0
  %v408 = vadd.f32 0.0, %v407
  %v409 = vpop.f32.mrb[0].mxu0
  %v410 = vadd.f32 0.0, %v409
  %411 = vmatprep.mubr.bf16.mxu0 0
  %412 = vmatmul.mubr.bf16.gmra.mrb[0].mxu0 %v226
  %v413 = vpop.f32.mrb[0].mxu0
  %v414 = vadd.f32 0.0, %v413
  %v415 = vpop.f32.mrb[0].mxu0
  %v416 = vadd.f32 0.0, %v415
  %v417 = vpop.f32.mrb[0].mxu0
  %v418 = vadd.f32 0.0, %v417
  %v419 = vpop.f32.mrb[0].mxu0
  %v420 = vadd.f32 0.0, %v419
  %421 = vmatprep.mubr.bf16.mxu0 0
  %422 = vmatmul.mubr.bf16.gmra.mrb[0].mxu0 %v227
  %v423 = vpop.f32.mrb[0].mxu0
  %v424 = vadd.f32 0.0, %v423
  %v425 = vpop.f32.mrb[0].mxu0
  %v426 = vadd.f32 0.0, %v425
  %v427 = vpop.f32.mrb[0].mxu0
  %v428 = vadd.f32 0.0, %v427
  %v429 = vpop.f32.mrb[0].mxu0
  %v430 = vadd.f32 0.0, %v429
  %431 = vmatprep.mubr.bf16.mxu0 0
  %432 = vmatmul.mubr.bf16.gmra.mrb[0].mxu0 %v228
  %v433 = vpop.f32.mrb[0].mxu0
  %v434 = vadd.f32 0.0, %v433
  %v435 = vpop.f32.mrb[0].mxu0
  %v436 = vadd.f32 0.0, %v435
  %v437 = vpop.f32.mrb[0].mxu0
  %v438 = vadd.f32 0.0, %v437
  %v439 = vpop.f32.mrb[0].mxu0
  %v440 = vadd.f32 0.0, %v439
  %441 = vmatprep.mubr.bf16.mxu0 0
  %442 = vmatmul.mubr.bf16.gmra.mrb[0].mxu0 %v229
  %v443 = vpop.f32.mrb[0].mxu0
  %v444 = vadd.f32 0.0, %v443
  %v445 = vpop.f32.mrb[0].mxu0
  %v446 = vadd.f32 0.0, %v445
  %v447 = vpop.f32.mrb[0].mxu0
  %v448 = vadd.f32 0.0, %v447
  %v449 = vpop.f32.mrb[0].mxu0
  %v450 = vadd.f32 0.0, %v449
  %451 = vmatprep.mubr.bf16.mxu0 0
  %452 = vmatmul.mubr.bf16.gmra.mrb[0].mxu0 %v230
  %v453 = vpop.f32.mrb[0].mxu0
  %v454 = vadd.f32 0.0, %v453
  %v455 = vpop.f32.mrb[0].mxu0
  %v456 = vadd.f32 0.0, %v455
  %v457 = vpop.f32.mrb[0].mxu0
  %v458 = vadd.f32 0.0, %v457
  %v459 = vpop.f32.mrb[0].mxu0
  %v460 = vadd.f32 0.0, %v459
  %461 = vmatprep.mubr.bf16.mxu0 0
  %462 = vmatmul.mubr.bf16.gmra.mrb[0].mxu0 %v231
  %v463 = vpop.f32.mrb[0].mxu0
  %v464 = vadd.f32 0.0, %v463
  %v465 = vpop.f32.mrb[0].mxu0
  %v466 = vadd.f32 0.0, %v465
  %v467 = vpop.f32.mrb[0].mxu0
  %v468 = vadd.f32 0.0, %v467
  %v469 = vpop.f32.mrb[0].mxu0
  %v470 = vadd.f32 0.0, %v469
  %471 = vmatprep.mubr.bf16.mxu0 0
  %472 = vmatmul.mubr.bf16.gmra.mrb[0].mxu0 %v232
  %v473 = vpop.f32.mrb[0].mxu0
  %v474 = vadd.f32 0.0, %v473
  %v475 = vpop.f32.mrb[0].mxu0
  %v476 = vadd.f32 0.0, %v475
  %v477 = vpop.f32.mrb[0].mxu0
  %v478 = vadd.f32 0.0, %v477
  %v479 = vpop.f32.mrb[0].mxu0
  %v480 = vadd.f32 0.0, %v479
  %481 = vmatprep.mubr.bf16.mxu0 0
  %482 = vmatmul.mubr.bf16.gmra.mrb[0].mxu0 %v233
  %v483 = vpop.f32.mrb[0].mxu0
  %v484 = vadd.f32 0.0, %v483
  %v485 = vpop.f32.mrb[0].mxu0
  %v486 = vadd.f32 0.0, %v485
  %v487 = vpop.f32.mrb[0].mxu0
  %v488 = vadd.f32 0.0, %v487
  %v489 = vpop.f32.mrb[0].mxu0
  %v490 = vadd.f32 0.0, %v489
  %491 = vmatprep.mubr.bf16.mxu0 0
  %492 = vmatmul.mubr.bf16.gmra.mrb[0].mxu0 %v234
  %v493 = vpop.f32.mrb[0].mxu0
  %v494 = vadd.f32 0.0, %v493
  %v495 = vpop.f32.mrb[0].mxu0
  %v496 = vadd.f32 0.0, %v495
  %v497 = vpop.f32.mrb[0].mxu0
  %v498 = vadd.f32 0.0, %v497
  %v499 = vpop.f32.mrb[0].mxu0
  %v500 = vadd.f32 0.0, %v499
  %501 = vmatprep.mubr.bf16.mxu0 0
  %502 = vmatmul.mubr.bf16.gmra.mrb[0].mxu0 %v235
  %v503 = vpop.f32.mrb[0].mxu0
  %v504 = vadd.f32 0.0, %v503
  %v505 = vpop.f32.mrb[0].mxu0
  %v506 = vadd.f32 0.0, %v505
  %v507 = vpop.f32.mrb[0].mxu0
  %v508 = vadd.f32 0.0, %v507
  %v509 = vpop.f32.mrb[0].mxu0
  %v510 = vadd.f32 0.0, %v509
  %511 = vmatprep.mubr.bf16.mxu0 0
  %512 = vmatmul.mubr.bf16.gmra.mrb[0].mxu0 %v236
  %v513 = vpop.f32.mrb[0].mxu0
  %v514 = vadd.f32 0.0, %v513
  %v515 = vpop.f32.mrb[0].mxu0
  %v516 = vadd.f32 0.0, %v515
  %v517 = vpop.f32.mrb[0].mxu0
  %v518 = vadd.f32 0.0, %v517
  %v519 = vpop.f32.mrb[0].mxu0
  %v520 = vadd.f32 0.0, %v519
  %521 = vmatprep.mubr.bf16.mxu0 0
  %522 = vmatmul.mubr.bf16.gmra.mrb[0].mxu0 %v237
  %v523 = vpop.f32.mrb[0].mxu0
  %v524 = vadd.f32 0.0, %v523
  %v525 = vpop.f32.mrb[0].mxu0
  %v526 = vadd.f32 0.0, %v525
  %v527 = vpop.f32.mrb[0].mxu0
  %v528 = vadd.f32 0.0, %v527
  %v529 = vpop.f32.mrb[0].mxu0
  %v530 = vadd.f32 0.0, %v529
  %531 = vmatprep.mubr.bf16.mxu0 0
  %532 = vmatmul.mubr.bf16.gmra.mrb[0].mxu0 %v238
  %v533 = vpop.f32.mrb[0].mxu0
  %v534 = vadd.f32 0.0, %v533
  %v535 = vpop.f32.mrb[0].mxu0
  %v536 = vadd.f32 0.0, %v535
  %v537 = vpop.f32.mrb[0].mxu0
  %v538 = vadd.f32 0.0, %v537
  %v539 = vpop.f32.mrb[0].mxu0
  %v540 = vadd.f32 0.0, %v539
  %541 = vmatprep.mubr.bf16.mxu0 0
  %542 = vmatmul.mubr.bf16.gmra.mrb[0].mxu0 %v239
  %v543 = vpop.f32.mrb[0].mxu0
  %v544 = vadd.f32 0.0, %v543
  %v545 = vpop.f32.mrb[0].mxu0
  %v546 = vadd.f32 0.0, %v545
  %v547 = vpop.f32.mrb[0].mxu0
  %v548 = vadd.f32 0.0, %v547
  %v549 = vpop.f32.mrb[0].mxu0
  %v550 = vadd.f32 0.0, %v549
  %551 = vmatprep.mubr.bf16.mxu0 0
  %552 = vmatmul.mubr.bf16.gmra.mrb[0].mxu0 %v240
  %v553 = vpop.f32.mrb[0].mxu0
  %v554 = vadd.f32 0.0, %v553
  %v555 = vpop.f32.mrb[0].mxu0
  %v556 = vadd.f32 0.0, %v555
  %v557 = vpop.f32.mrb[0].mxu0
  %v558 = vadd.f32 0.0, %v557
  %v559 = vpop.f32.mrb[0].mxu0
  %v560 = vadd.f32 0.0, %v559
  %561 = vmatprep.mubr.bf16.mxu0 0
  %562 = vmatmul.mubr.bf16.gmra.mrb[0].mxu0 %v241
  %v563 = vpop.f32.mrb[0].mxu0
  %v564 = vadd.f32 0.0, %v563
  %v565 = vpop.f32.mrb[0].mxu0
  %v566 = vadd.f32 0.0, %v565
  %v567 = vpop.f32.mrb[0].mxu0
  %v568 = vadd.f32 0.0, %v567
  %v569 = vpop.f32.mrb[0].mxu0
  %v570 = vadd.f32 0.0, %v569
  %571 = vmatprep.mubr.bf16.mxu0 0
  %572 = vmatmul.mubr.bf16.gmra.mrb[0].mxu0 %v242
  %v573 = vpop.f32.mrb[0].mxu0
  %v574 = vadd.f32 0.0, %v573
  %v575 = vpop.f32.mrb[0].mxu0
  %v576 = vadd.f32 0.0, %v575
  %v577 = vpop.f32.mrb[0].mxu0
  %v578 = vadd.f32 0.0, %v577
  %v579 = vpop.f32.mrb[0].mxu0
  %v580 = vadd.f32 0.0, %v579
  %581 = vmatprep.mubr.bf16.mxu0 0
  %582 = vmatmul.mubr.bf16.gmra.mrb[0].mxu0 %v243
  %v583 = vpop.f32.mrb[0].mxu0
  %v584 = vadd.f32 0.0, %v583
  %v585 = vpop.f32.mrb[0].mxu0
  %v586 = vadd.f32 0.0, %v585
  %v587 = vpop.f32.mrb[0].mxu0
  %v588 = vadd.f32 0.0, %v587
  %v589 = vpop.f32.mrb[0].mxu0
  %v590 = vadd.f32 0.0, %v589
  %591 = vmatprep.mubr.bf16.mxu0 0
  %592 = vmatmul.mubr.bf16.gmra.mrb[0].mxu0 %v244
  %v593 = vpop.f32.mrb[0].mxu0
  %v594 = vadd.f32 0.0, %v593
  %v595 = vpop.f32.mrb[0].mxu0
  %v596 = vadd.f32 0.0, %v595
  %v597 = vpop.f32.mrb[0].mxu0
  %v598 = vadd.f32 0.0, %v597
  %v599 = vpop.f32.mrb[0].mxu0
  %v600 = vadd.f32 0.0, %v599
  %601 = vmatprep.mubr.bf16.mxu0 0
  %602 = vmatmul.mubr.bf16.gmra.mrb[0].mxu0 %v245
  %v603 = vpop.f32.mrb[0].mxu0
  %v604 = vadd.f32 0.0, %v603
  %v605 = vpop.f32.mrb[0].mxu0
  %v606 = vadd.f32 0.0, %v605
  %v607 = vpop.f32.mrb[0].mxu0
  %v608 = vadd.f32 0.0, %v607
  %v609 = vpop.f32.mrb[0].mxu0
  %v610 = vadd.f32 0.0, %v609
  %611 = vmatprep.mubr.bf16.mxu0 0
  %612 = vmatmul.mubr.bf16.gmra.mrb[0].mxu0 %v246
  %v613 = vpop.f32.mrb[0].mxu0
  %v614 = vadd.f32 0.0, %v613
  %v615 = vpop.f32.mrb[0].mxu0
  %v616 = vadd.f32 0.0, %v615
  %v617 = vpop.f32.mrb[0].mxu0
  %v618 = vadd.f32 0.0, %v617
  %v619 = vpop.f32.mrb[0].mxu0
  %v620 = vadd.f32 0.0, %v619
  %621 = vmatprep.mubr.bf16.mxu0 0
  %622 = vmatmul.mubr.bf16.gmra.mrb[0].mxu0 %v247
  %v623 = vpop.f32.mrb[0].mxu0
  %v624 = vadd.f32 0.0, %v623
  %v625 = vpop.f32.mrb[0].mxu0
  %v626 = vadd.f32 0.0, %v625
  %v627 = vpop.f32.mrb[0].mxu0
  %v628 = vadd.f32 0.0, %v627
  %v629 = vpop.f32.mrb[0].mxu0
  %v630 = vadd.f32 0.0, %v629
  %631 = vmatprep.mubr.bf16.mxu0 0
  %632 = vmatmul.mubr.bf16.gmra.mrb[0].mxu0 %v248
  %v633 = vpop.f32.mrb[0].mxu0
  %v634 = vadd.f32 0.0, %v633
  %v635 = vpop.f32.mrb[0].mxu0
  %v636 = vadd.f32 0.0, %v635
  %v637 = vpop.f32.mrb[0].mxu0
  %v638 = vadd.f32 0.0, %v637
  %v639 = vpop.f32.mrb[0].mxu0
  %v640 = vadd.f32 0.0, %v639
  %641 = vmatprep.mubr.bf16.mxu0 0
  %642 = vmatmul.mubr.bf16.gmra.mrb[0].mxu0 %v249
  %v643 = vpop.f32.mrb[0].mxu0
  %v644 = vadd.f32 0.0, %v643
  %v645 = vpop.f32.mrb[0].mxu0
  %v646 = vadd.f32 0.0, %v645
  %v647 = vpop.f32.mrb[0].mxu0
  %v648 = vadd.f32 0.0, %v647
  %v649 = vpop.f32.mrb[0].mxu0
  %v650 = vadd.f32 0.0, %v649
  %651 = vmatprep.mubr.bf16.mxu0 0
  %652 = vmatmul.mubr.bf16.gmra.mrb[0].mxu0 %v250
  %v653 = vpop.f32.mrb[0].mxu0
  %v654 = vadd.f32 0.0, %v653
  %v655 = vpop.f32.mrb[0].mxu0
  %v656 = vadd.f32 0.0, %v655
  %v657 = vpop.f32.mrb[0].mxu0
  %v658 = vadd.f32 0.0, %v657
  %v659 = vpop.f32.mrb[0].mxu0
  %v660 = vadd.f32 0.0, %v659
  %661 = vmatprep.mubr.bf16.mxu0 0
  %662 = vmatmul.mubr.bf16.gmra.mrb[0].mxu0 %v251
  %v663 = vpop.f32.mrb[0].mxu0
  %v664 = vadd.f32 0.0, %v663
  %v665 = vpop.f32.mrb[0].mxu0
  %v666 = vadd.f32 0.0, %v665
  %v667 = vpop.f32.mrb[0].mxu0
  %v668 = vadd.f32 0.0, %v667
  %v669 = vpop.f32.mrb[0].mxu0
  %v670 = vadd.f32 0.0, %v669
  %671 = vmatprep.mubr.bf16.mxu0 0
  %672 = vmatmul.mubr.bf16.gmra.mrb[0].mxu0 %v252
  %v673 = vpop.f32.mrb[0].mxu0
  %v674 = vadd.f32 0.0, %v673
  %v675 = vpop.f32.mrb[0].mxu0
  %v676 = vadd.f32 0.0, %v675
  %v677 = vpop.f32.mrb[0].mxu0
  %v678 = vadd.f32 0.0, %v677
  %v679 = vpop.f32.mrb[0].mxu0
  %v680 = vadd.f32 0.0, %v679
  %681 = vmatprep.mubr.bf16.mxu0 0
  %682 = vmatmul.mubr.bf16.gmra.mrb[0].mxu0 %v253
  %v683 = vpop.f32.mrb[0].mxu0
  %v684 = vadd.f32 0.0, %v683
  %v685 = vpop.f32.mrb[0].mxu0
  %v686 = vadd.f32 0.0, %v685
  %v687 = vpop.f32.mrb[0].mxu0
  %v688 = vadd.f32 0.0, %v687
  %v689 = vpop.f32.mrb[0].mxu0
  %v690 = vadd.f32 0.0, %v689
  %691 = vmatprep.mubr.bf16.mxu0 0
  %692 = vmatmul.mubr.bf16.gmra.mrb[0].mxu0 %v254
  %v693 = vpop.f32.mrb[0].mxu0
  %v694 = vadd.f32 0.0, %v693
  %v695 = vpop.f32.mrb[0].mxu0
  %v696 = vadd.f32 0.0, %v695
  %v697 = vpop.f32.mrb[0].mxu0
  %v698 = vadd.f32 0.0, %v697
  %v699 = vpop.f32.mrb[0].mxu0
  %v700 = vadd.f32 0.0, %v699
  %701 = vmatprep.mubr.bf16.mxu0 0
  %702 = vmatmul.mubr.bf16.gmra.mrb[0].mxu0 %v255
  %v703 = vpop.f32.mrb[0].mxu0
  %v704 = vadd.f32 0.0, %v703
  %v705 = vpop.f32.mrb[0].mxu0
  %v706 = vadd.f32 0.0, %v705
  %v707 = vpop.f32.mrb[0].mxu0
  %v708 = vadd.f32 0.0, %v707
  %v709 = vpop.f32.mrb[0].mxu0
  %v710 = vadd.f32 0.0, %v709
  %711 = vmatprep.mubr.bf16.mxu0 0
  %712 = vmatmul.mubr.bf16.gmra.mrb[0].mxu0 %v256
  %v713 = vpop.f32.mrb[0].mxu0
  %v714 = vadd.f32 0.0, %v713
  %v715 = vpop.f32.mrb[0].mxu0
  %v716 = vadd.f32 0.0, %v715
  %v717 = vpop.f32.mrb[0].mxu0
  %v718 = vadd.f32 0.0, %v717
  %v719 = vpop.f32.mrb[0].mxu0
  %v720 = vadd.f32 0.0, %v719
  %721 = vdwg.mxu0
  %v722 = vld [vmem:[%s2] sm:$0x1]
  %v724 = vlaneseq
  %v725 = vshrl.u32 %v724, 7
  %v726 = vsub.s32 0, %v725
  %v727 = vrot.slane %v722, %v726
  %v729 = vadd.f32 %v404, %v727
  %v730 = vadd.f32 %v408, %v727
  %v731 = vadd.f32 %v414, %v727
  %v732 = vadd.f32 %v418, %v727
  %v733 = vadd.f32 %v424, %v727
  %v734 = vadd.f32 %v428, %v727
  %v735 = vadd.f32 %v434, %v727
  %v736 = vadd.f32 %v438, %v727
  %v737 = vadd.f32 %v444, %v727
  %v738 = vadd.f32 %v448, %v727
  %v739 = vadd.f32 %v454, %v727
  %v740 = vadd.f32 %v458, %v727
  %v741 = vadd.f32 %v464, %v727
  %v742 = vadd.f32 %v468, %v727
  %v743 = vadd.f32 %v474, %v727
  %v744 = vadd.f32 %v478, %v727
  %v745 = vadd.f32 %v484, %v727
  %v746 = vadd.f32 %v488, %v727
  %v747 = vadd.f32 %v494, %v727
  %v748 = vadd.f32 %v498, %v727
  %v749 = vadd.f32 %v504, %v727
  %v750 = vadd.f32 %v508, %v727
  %v751 = vadd.f32 %v514, %v727
  %v752 = vadd.f32 %v518, %v727
  %v753 = vadd.f32 %v524, %v727
  %v754 = vadd.f32 %v528, %v727
  %v755 = vadd.f32 %v534, %v727
  %v756 = vadd.f32 %v538, %v727
  %v757 = vadd.f32 %v544, %v727
  %v758 = vadd.f32 %v548, %v727
  %v759 = vadd.f32 %v554, %v727
  %v760 = vadd.f32 %v558, %v727
  %v761 = vadd.f32 %v564, %v727
  %v762 = vadd.f32 %v568, %v727
  %v763 = vadd.f32 %v574, %v727
  %v764 = vadd.f32 %v578, %v727
  %v765 = vadd.f32 %v584, %v727
  %v766 = vadd.f32 %v588, %v727
  %v767 = vadd.f32 %v594, %v727
  %v768 = vadd.f32 %v598, %v727
  %v769 = vadd.f32 %v604, %v727
  %v770 = vadd.f32 %v608, %v727
  %v771 = vadd.f32 %v614, %v727
  %v772 = vadd.f32 %v618, %v727
  %v773 = vadd.f32 %v624, %v727
  %v774 = vadd.f32 %v628, %v727
  %v775 = vadd.f32 %v634, %v727
  %v776 = vadd.f32 %v638, %v727
  %v777 = vadd.f32 %v644, %v727
  %v778 = vadd.f32 %v648, %v727
  %v779 = vadd.f32 %v654, %v727
  %v780 = vadd.f32 %v658, %v727
  %v781 = vadd.f32 %v664, %v727
  %v782 = vadd.f32 %v668, %v727
  %v783 = vadd.f32 %v674, %v727
  %v784 = vadd.f32 %v678, %v727
  %v785 = vadd.f32 %v684, %v727
  %v786 = vadd.f32 %v688, %v727
  %v787 = vadd.f32 %v694, %v727
  %v788 = vadd.f32 %v698, %v727
  %v789 = vadd.f32 %v704, %v727
  %v790 = vadd.f32 %v708, %v727
  %v791 = vadd.f32 %v714, %v727
  %v792 = vadd.f32 %v718, %v727
  %793 = vst [vmem:[%s3] sm:$0xff] %v729
  %794 = vst [vmem:[%s3 + $0x8] sm:$0xff] %v730
  %795 = vst [vmem:[%s3 + $0x10] sm:$0xff] %v731
  %796 = vst [vmem:[%s3 + $0x18] sm:$0xff] %v732
  %797 = vst [vmem:[%s3 + $0x20] sm:$0xff] %v733
  %798 = vst [vmem:[%s3 + $0x28] sm:$0xff] %v734
  %799 = vst [vmem:[%s3 + $0x30] sm:$0xff] %v735
  %800 = vst [vmem:[%s3 + $0x38] sm:$0xff] %v736
  %801 = vst [vmem:[%s3 + $0x40] sm:$0xff] %v737
  %802 = vst [vmem:[%s3 + $0x48] sm:$0xff] %v738
  %803 = vst [vmem:[%s3 + $0x50] sm:$0xff] %v739
  %804 = vst [vmem:[%s3 + $0x58] sm:$0xff] %v740
  %805 = vst [vmem:[%s3 + $0x60] sm:$0xff] %v741
  %806 = vst [vmem:[%s3 + $0x68] sm:$0xff] %v742
  %807 = vst [vmem:[%s3 + $0x70] sm:$0xff] %v743
  %808 = vst [vmem:[%s3 + $0x78] sm:$0xff] %v744
  %809 = vst [vmem:[%s3 + $0x80] sm:$0xff] %v745
  %810 = vst [vmem:[%s3 + $0x88] sm:$0xff] %v746
  %811 = vst [vmem:[%s3 + $0x90] sm:$0xff] %v747
  %812 = vst [vmem:[%s3 + $0x98] sm:$0xff] %v748
  %813 = vst [vmem:[%s3 + $0xa0] sm:$0xff] %v749
  %814 = vst [vmem:[%s3 + $0xa8] sm:$0xff] %v750
  %815 = vst [vmem:[%s3 + $0xb0] sm:$0xff] %v751
  %816 = vst [vmem:[%s3 + $0xb8] sm:$0xff] %v752
  %817 = vst [vmem:[%s3 + $0xc0] sm:$0xff] %v753
  %818 = vst [vmem:[%s3 + $0xc8] sm:$0xff] %v754
  %819 = vst [vmem:[%s3 + $0xd0] sm:$0xff] %v755
  %820 = vst [vmem:[%s3 + $0xd8] sm:$0xff] %v756
  %821 = vst [vmem:[%s3 + $0xe0] sm:$0xff] %v757
  %822 = vst [vmem:[%s3 + $0xe8] sm:$0xff] %v758
  %823 = vst [vmem:[%s3 + $0xf0] sm:$0xff] %v759
  %824 = vst [vmem:[%s3 + $0xf8] sm:$0xff] %v760
  %825 = vst [vmem:[%s3 + $0x100] sm:$0xff] %v761
  %826 = vst [vmem:[%s3 + $0x108] sm:$0xff] %v762
  %827 = vst [vmem:[%s3 + $0x110] sm:$0xff] %v763
  %828 = vst [vmem:[%s3 + $0x118] sm:$0xff] %v764
  %829 = vst [vmem:[%s3 + $0x120] sm:$0xff] %v765
  %830 = vst [vmem:[%s3 + $0x128] sm:$0xff] %v766
  %831 = vst [vmem:[%s3 + $0x130] sm:$0xff] %v767
  %832 = vst [vmem:[%s3 + $0x138] sm:$0xff] %v768
  %833 = vst [vmem:[%s3 + $0x140] sm:$0xff] %v769
  %834 = vst [vmem:[%s3 + $0x148] sm:$0xff] %v770
  %835 = vst [vmem:[%s3 + $0x150] sm:$0xff] %v771
  %836 = vst [vmem:[%s3 + $0x158] sm:$0xff] %v772
  %837 = vst [vmem:[%s3 + $0x160] sm:$0xff] %v773
  %838 = vst [vmem:[%s3 + $0x168] sm:$0xff] %v774
  %839 = vst [vmem:[%s3 + $0x170] sm:$0xff] %v775
  %840 = vst [vmem:[%s3 + $0x178] sm:$0xff] %v776
  %841 = vst [vmem:[%s3 + $0x180] sm:$0xff] %v777
  %842 = vst [vmem:[%s3 + $0x188] sm:$0xff] %v778
  %843 = vst [vmem:[%s3 + $0x190] sm:$0xff] %v779
  %844 = vst [vmem:[%s3 + $0x198] sm:$0xff] %v780
  %845 = vst [vmem:[%s3 + $0x1a0] sm:$0xff] %v781
  %846 = vst [vmem:[%s3 + $0x1a8] sm:$0xff] %v782
  %847 = vst [vmem:[%s3 + $0x1b0] sm:$0xff] %v783
  %848 = vst [vmem:[%s3 + $0x1b8] sm:$0xff] %v784
  %849 = vst [vmem:[%s3 + $0x1c0] sm:$0xff] %v785
  %850 = vst [vmem:[%s3 + $0x1c8] sm:$0xff] %v786
  %851 = vst [vmem:[%s3 + $0x1d0] sm:$0xff] %v787
  %852 = vst [vmem:[%s3 + $0x1d8] sm:$0xff] %v788
  %853 = vst [vmem:[%s3 + $0x1e0] sm:$0xff] %v789
  %854 = vst [vmem:[%s3 + $0x1e8] sm:$0xff] %v790
  %855 = vst [vmem:[%s3 + $0x1f0] sm:$0xff] %v791
  %856 = vst [vmem:[%s3 + $0x1f8] sm:$0xff] %v792
  %v857 = vpack.c.bf16 %v410, %v406
  %v858 = vpack.c.bf16 %v420, %v416
  %v859 = vpack.c.bf16 %v430, %v426
  %v860 = vpack.c.bf16 %v440, %v436
  %v861 = vpack.c.bf16 %v450, %v446
  %v862 = vpack.c.bf16 %v460, %v456
  %v863 = vpack.c.bf16 %v470, %v466
  %v864 = vpack.c.bf16 %v480, %v476
  %v865 = vpack.c.bf16 %v490, %v486
  %v866 = vpack.c.bf16 %v500, %v496
  %v867 = vpack.c.bf16 %v510, %v506
  %v868 = vpack.c.bf16 %v520, %v516
  %v869 = vpack.c.bf16 %v530, %v526
  %v870 = vpack.c.bf16 %v540, %v536
  %v871 = vpack.c.bf16 %v550, %v546
  %v872 = vpack.c.bf16 %v560, %v556
  %v873 = vpack.c.bf16 %v570, %v566
  %v874 = vpack.c.bf16 %v580, %v576
  %v875 = vpack.c.bf16 %v590, %v586
  %v876 = vpack.c.bf16 %v600, %v596
  %v877 = vpack.c.bf16 %v610, %v606
  %v878 = vpack.c.bf16 %v620, %v616
  %v879 = vpack.c.bf16 %v630, %v626
  %v880 = vpack.c.bf16 %v640, %v636
  %v881 = vpack.c.bf16 %v650, %v646
  %v882 = vpack.c.bf16 %v660, %v656
  %v883 = vpack.c.bf16 %v670, %v666
  %v884 = vpack.c.bf16 %v680, %v676
  %v885 = vpack.c.bf16 %v690, %v686
  %v886 = vpack.c.bf16 %v700, %v696
  %v887 = vpack.c.bf16 %v710, %v706
  %v888 = vpack.c.bf16 %v720, %v716
  %v921 = vunpack.c.l.b16 %v857
  %v922 = vunpack.c.h.b16 %v857
  %v923 = vunpack.c.l.b16 %v858
  %v924 = vunpack.c.h.b16 %v858
  %v925 = vunpack.c.l.b16 %v859
  %v926 = vunpack.c.h.b16 %v859
  %v927 = vunpack.c.l.b16 %v860
  %v928 = vunpack.c.h.b16 %v860
  %v929 = vunpack.c.l.b16 %v861
  %v930 = vunpack.c.h.b16 %v861
  %v931 = vunpack.c.l.b16 %v862
  %v932 = vunpack.c.h.b16 %v862
  %v933 = vunpack.c.l.b16 %v863
  %v934 = vunpack.c.h.b16 %v863
  %v935 = vunpack.c.l.b16 %v864
  %v936 = vunpack.c.h.b16 %v864
  %v937 = vunpack.c.l.b16 %v865
  %v938 = vunpack.c.h.b16 %v865
  %v939 = vunpack.c.l.b16 %v866
  %v940 = vunpack.c.h.b16 %v866
  %v941 = vunpack.c.l.b16 %v867
  %v942 = vunpack.c.h.b16 %v867
  %v943 = vunpack.c.l.b16 %v868
  %v944 = vunpack.c.h.b16 %v868
  %v945 = vunpack.c.l.b16 %v869
  %v946 = vunpack.c.h.b16 %v869
  %v947 = vunpack.c.l.b16 %v870
  %v948 = vunpack.c.h.b16 %v870
  %v949 = vunpack.c.l.b16 %v871
  %v950 = vunpack.c.h.b16 %v871
  %v951 = vunpack.c.l.b16 %v872
  %v952 = vunpack.c.h.b16 %v872
  %v953 = vunpack.c.l.b16 %v873
  %v954 = vunpack.c.h.b16 %v873
  %v955 = vunpack.c.l.b16 %v874
  %v956 = vunpack.c.h.b16 %v874
  %v957 = vunpack.c.l.b16 %v875
  %v958 = vunpack.c.h.b16 %v875
  %v959 = vunpack.c.l.b16 %v876
  %v960 = vunpack.c.h.b16 %v876
  %v961 = vunpack.c.l.b16 %v877
  %v962 = vunpack.c.h.b16 %v877
  %v963 = vunpack.c.l.b16 %v878
  %v964 = vunpack.c.h.b16 %v878
  %v965 = vunpack.c.l.b16 %v879
  %v966 = vunpack.c.h.b16 %v879
  %v967 = vunpack.c.l.b16 %v880
  %v968 = vunpack.c.h.b16 %v880
  %v969 = vunpack.c.l.b16 %v881
  %v970 = vunpack.c.h.b16 %v881
  %v971 = vunpack.c.l.b16 %v882
  %v972 = vunpack.c.h.b16 %v882
  %v973 = vunpack.c.l.b16 %v883
  %v974 = vunpack.c.h.b16 %v883
  %v975 = vunpack.c.l.b16 %v884
  %v976 = vunpack.c.h.b16 %v884
  %v977 = vunpack.c.l.b16 %v885
  %v978 = vunpack.c.h.b16 %v885
  %v979 = vunpack.c.l.b16 %v886
  %v980 = vunpack.c.h.b16 %v886
  %v981 = vunpack.c.l.b16 %v887
  %v982 = vunpack.c.h.b16 %v887
  %v983 = vunpack.c.l.b16 %v888
  %v984 = vunpack.c.h.b16 %v888
  %v985 = vpack.c.b16 %v921, %v921
  %v986 = vpack.c.b16 %v922, %v922
  %v987 = vpack.c.b16 %v923, %v923
  %v988 = vpack.c.b16 %v924, %v924
  %v989 = vpack.c.b16 %v925, %v925
  %v990 = vpack.c.b16 %v926, %v926
  %v991 = vpack.c.b16 %v927, %v927
  %v992 = vpack.c.b16 %v928, %v928
  %v993 = vpack.c.b16 %v929, %v929
  %v994 = vpack.c.b16 %v930, %v930
  %v995 = vpack.c.b16 %v931, %v931
  %v996 = vpack.c.b16 %v932, %v932
  %v997 = vpack.c.b16 %v933, %v933
  %v998 = vpack.c.b16 %v934, %v934
  %v999 = vpack.c.b16 %v935, %v935
  %v1000 = vpack.c.b16 %v936, %v936
  %v1001 = vpack.c.b16 %v937, %v937
  %v1002 = vpack.c.b16 %v938, %v938
  %v1003 = vpack.c.b16 %v939, %v939
  %v1004 = vpack.c.b16 %v940, %v940
  %v1005 = vpack.c.b16 %v941, %v941
  %v1006 = vpack.c.b16 %v942, %v942
  %v1007 = vpack.c.b16 %v943, %v943
  %v1008 = vpack.c.b16 %v944, %v944
  %v1009 = vpack.c.b16 %v945, %v945
  %v1010 = vpack.c.b16 %v946, %v946
  %v1011 = vpack.c.b16 %v947, %v947
  %v1012 = vpack.c.b16 %v948, %v948
  %v1013 = vpack.c.b16 %v949, %v949
  %v1014 = vpack.c.b16 %v950, %v950
  %v1015 = vpack.c.b16 %v951, %v951
  %v1016 = vpack.c.b16 %v952, %v952
  %v1017 = vpack.c.b16 %v953, %v953
  %v1018 = vpack.c.b16 %v954, %v954
  %v1019 = vpack.c.b16 %v955, %v955
  %v1020 = vpack.c.b16 %v956, %v956
  %v1021 = vpack.c.b16 %v957, %v957
  %v1022 = vpack.c.b16 %v958, %v958
  %v1023 = vpack.c.b16 %v959, %v959
  %v1024 = vpack.c.b16 %v960, %v960
  %v1025 = vpack.c.b16 %v961, %v961
  %v1026 = vpack.c.b16 %v962, %v962
  %v1027 = vpack.c.b16 %v963, %v963
  %v1028 = vpack.c.b16 %v964, %v964
  %v1029 = vpack.c.b16 %v965, %v965
  %v1030 = vpack.c.b16 %v966, %v966
  %v1031 = vpack.c.b16 %v967, %v967
  %v1032 = vpack.c.b16 %v968, %v968
  %v1033 = vpack.c.b16 %v969, %v969
  %v1034 = vpack.c.b16 %v970, %v970
  %v1035 = vpack.c.b16 %v971, %v971
  %v1036 = vpack.c.b16 %v972, %v972
  %v1037 = vpack.c.b16 %v973, %v973
  %v1038 = vpack.c.b16 %v974, %v974
  %v1039 = vpack.c.b16 %v975, %v975
  %v1040 = vpack.c.b16 %v976, %v976
  %v1041 = vpack.c.b16 %v977, %v977
  %v1042 = vpack.c.b16 %v978, %v978
  %v1043 = vpack.c.b16 %v979, %v979
  %v1044 = vpack.c.b16 %v980, %v980
  %v1045 = vpack.c.b16 %v981, %v981
  %v1046 = vpack.c.b16 %v982, %v982
  %v1047 = vpack.c.b16 %v983, %v983
  %v1048 = vpack.c.b16 %v984, %v984
  %1113 = vst [vmem:[%s4] sm:$0xf] %v985
  %1114 = vst [vmem:[%s4 + $0x4] sm:$0xf] %v986
  %1115 = vst [vmem:[%s4 + $0x8] sm:$0xf] %v987
  %1116 = vst [vmem:[%s4 + $0xc] sm:$0xf] %v988
  %1117 = vst [vmem:[%s4 + $0x10] sm:$0xf] %v989
  %1118 = vst [vmem:[%s4 + $0x14] sm:$0xf] %v990
  %1119 = vst [vmem:[%s4 + $0x18] sm:$0xf] %v991
  %1120 = vst [vmem:[%s4 + $0x1c] sm:$0xf] %v992
  %1121 = vst [vmem:[%s4 + $0x20] sm:$0xf] %v993
  %1122 = vst [vmem:[%s4 + $0x24] sm:$0xf] %v994
  %1123 = vst [vmem:[%s4 + $0x28] sm:$0xf] %v995
  %1124 = vst [vmem:[%s4 + $0x2c] sm:$0xf] %v996
  %1125 = vst [vmem:[%s4 + $0x30] sm:$0xf] %v997
  %1126 = vst [vmem:[%s4 + $0x34] sm:$0xf] %v998
  %1127 = vst [vmem:[%s4 + $0x38] sm:$0xf] %v999
  %1128 = vst [vmem:[%s4 + $0x3c] sm:$0xf] %v1000
  %1129 = vst [vmem:[%s4 + $0x40] sm:$0xf] %v1001
  %1130 = vst [vmem:[%s4 + $0x44] sm:$0xf] %v1002
  %1131 = vst [vmem:[%s4 + $0x48] sm:$0xf] %v1003
  %1132 = vst [vmem:[%s4 + $0x4c] sm:$0xf] %v1004
  %1133 = vst [vmem:[%s4 + $0x50] sm:$0xf] %v1005
  %1134 = vst [vmem:[%s4 + $0x54] sm:$0xf] %v1006
  %1135 = vst [vmem:[%s4 + $0x58] sm:$0xf] %v1007
  %1136 = vst [vmem:[%s4 + $0x5c] sm:$0xf] %v1008
  %1137 = vst [vmem:[%s4 + $0x60] sm:$0xf] %v1009
  %1138 = vst [vmem:[%s4 + $0x64] sm:$0xf] %v1010
  %1139 = vst [vmem:[%s4 + $0x68] sm:$0xf] %v1011
  %1140 = vst [vmem:[%s4 + $0x6c] sm:$0xf] %v1012
  %1141 = vst [vmem:[%s4 + $0x70] sm:$0xf] %v1013
  %1142 = vst [vmem:[%s4 + $0x74] sm:$0xf] %v1014
  %1143 = vst [vmem:[%s4 + $0x78] sm:$0xf] %v1015
  %1144 = vst [vmem:[%s4 + $0x7c] sm:$0xf] %v1016
  %1145 = vst [vmem:[%s4 + $0x80] sm:$0xf] %v1017
  %1146 = vst [vmem:[%s4 + $0x84] sm:$0xf] %v1018
  %1147 = vst [vmem:[%s4 + $0x88] sm:$0xf] %v1019
  %1148 = vst [vmem:[%s4 + $0x8c] sm:$0xf] %v1020
  %1149 = vst [vmem:[%s4 + $0x90] sm:$0xf] %v1021
  %1150 = vst [vmem:[%s4 + $0x94] sm:$0xf] %v1022
  %1151 = vst [vmem:[%s4 + $0x98] sm:$0xf] %v1023
  %1152 = vst [vmem:[%s4 + $0x9c] sm:$0xf] %v1024
  %1153 = vst [vmem:[%s4 + $0xa0] sm:$0xf] %v1025
  %1154 = vst [vmem:[%s4 + $0xa4] sm:$0xf] %v1026
  %1155 = vst [vmem:[%s4 + $0xa8] sm:$0xf] %v1027
  %1156 = vst [vmem:[%s4 + $0xac] sm:$0xf] %v1028
  %1157 = vst [vmem:[%s4 + $0xb0] sm:$0xf] %v1029
  %1158 = vst [vmem:[%s4 + $0xb4] sm:$0xf] %v1030
  %1159 = vst [vmem:[%s4 + $0xb8] sm:$0xf] %v1031
  %1160 = vst [vmem:[%s4 + $0xbc] sm:$0xf] %v1032
  %1161 = vst [vmem:[%s4 + $0xc0] sm:$0xf] %v1033
  %1162 = vst [vmem:[%s4 + $0xc4] sm:$0xf] %v1034
  %1163 = vst [vmem:[%s4 + $0xc8] sm:$0xf] %v1035
  %1164 = vst [vmem:[%s4 + $0xcc] sm:$0xf] %v1036
  %1165 = vst [vmem:[%s4 + $0xd0] sm:$0xf] %v1037
  %1166 = vst [vmem:[%s4 + $0xd4] sm:$0xf] %v1038
  %1167 = vst [vmem:[%s4 + $0xd8] sm:$0xf] %v1039
  %1168 = vst [vmem:[%s4 + $0xdc] sm:$0xf] %v1040
  %1169 = vst [vmem:[%s4 + $0xe0] sm:$0xf] %v1041
  %1170 = vst [vmem:[%s4 + $0xe4] sm:$0xf] %v1042
  %1171 = vst [vmem:[%s4 + $0xe8] sm:$0xf] %v1043
  %1172 = vst [vmem:[%s4 + $0xec] sm:$0xf] %v1044
  %1173 = vst [vmem:[%s4 + $0xf0] sm:$0xf] %v1045
  %1174 = vst [vmem:[%s4 + $0xf4] sm:$0xf] %v1046
  %1175 = vst [vmem:[%s4 + $0xf8] sm:$0xf] %v1047
  %1176 = vst [vmem:[%s4 + $0xfc] sm:$0xf] %v1048
  // Predicated region
  $region14: #{graphsage_forward.4} parent=0 // pred_check
    _
  $region15: #{graphsage_forward.4} parent=0 // pred_check_branch
    %1178 = sbr.rel (0) target = $region17
  $region16: #{graphsage_forward.4} parent=0 // pred_region
    _
  $region17: #{graphsage_forward.4} parent=0 // pred_fallthru
    _
  // Predicated region
  $region18: #{graphsage_forward.4} parent=0 // pred_check
    _
  $region19: #{graphsage_forward.4} parent=0 // pred_check_branch
    %1180 = sbr.rel (0) target = $region21
  $region20: #{graphsage_forward.4} parent=0 // pred_region
    _
  $region21: #{graphsage_forward.4} parent=0 // pred_fallthru
    _
  // Predicated region
  $region22: #{graphsage_forward.4} parent=0 // pred_check
    _
  $region23: #{graphsage_forward.4} parent=0 // pred_check_branch
    %1182 = sbr.rel (0) target = $region25
  $region24: #{graphsage_forward.4} parent=0 // pred_region
    _
  $region25: #{graphsage_forward.4} parent=0 // pred_fallthru
    _
  // Predicated region
  $region26: #{graphsage_forward.4} parent=0 // pred_check
    _
  $region27: #{graphsage_forward.4} parent=0 // pred_check_branch
    %1184 = sbr.rel (0) target = $region29
  $region28: #{graphsage_forward.4} parent=0 // pred_region
    _
  $region29: #{graphsage_forward.4} parent=0 // pred_fallthru
    _

// kernel: graphsage_forward.7
$region0: #{graphsage_forward.7}
  #allocation0 [shape = 'u32[]', space=smem, size = 0x4, offset = 0x4, fixed_abs, tag = 'smem constant byte address 0x4 - core index']
  #allocation1 [shape = 'u32[144,128]{1,0:T(1,128)}', space=vmem, size = 0x12000, scoped, tag = 'internal scratch']
  #allocation2 [shape = 'f32[512,128]{1,0:T(8,128)}', space=vmem, size = 0x40000, scoped, tag = 'scratch operand']
  #allocation3 [shape = 's32[1]{0}', space=sflag, size = 0x4, scoped, tag = 'scoped memory for graphsage_forward.7']
  #allocation4 [shape = 's32[1]{0:T(128)S(6)}', space=smem, size = 0x200, scoped, tag = 'prefetched SMEM operand 0']
  #allocation5 [shape = 's32[1]{0:T(128)S(6)}', space=smem, size = 0x200, scoped, tag = 'prefetched SMEM operand 1']
  %s0 = inlined_call_operand.<no memory space> [shape: s32[1], index: 0, kind: input, shape index: {}]
  %s1 = inlined_call_operand.<no memory space> [shape: s32[1], index: 1, kind: input, shape index: {}]
  %s2 = inlined_call_operand.vmem [shape: bf16[512,512], index: 2, kind: input, shape index: {}]
  %s3 = inlined_call_operand.vmem [shape: bf16[512,128], index: 3, kind: input, shape index: {}]
  %s4 = inlined_call_operand.vmem [shape: f32[512,128], index: 4, kind: input, shape index: {}]
  %s5 = inlined_call_operand.vmem [shape: f32[512,128], index: 5, kind: output, shape index: {}]
  %s6 = sld [smem:[#allocation0]]
  $region34: #{graphsage_forward.7} parent=0
    _
  %s8 = ssub.s32 1, %s6
  %s9 = scalar_select 0, %s8, %s6
  %10 = sst [smem:[#allocation4]] %s0
  %11 = sst [smem:[#allocation5]] %s1
  // Predicated region
  $region2: #{graphsage_forward.7} parent=0 // pred_check
    _
  $region3: #{graphsage_forward.7} parent=0 // pred_check_branch
    %13 = sbr.rel (0) target = $region5
  $region4: #{graphsage_forward.7} parent=0 // pred_region
    %s14 = sadd.s32 0, 0
    %s15 = sld [smem:[#allocation5 + %s14]]
    %s16 = smul.u32 4, %s15
    %p17 = scmp.lt.s32.totalorder %s16, 3
    %s18 = scalar_select %p17, %s16, 3
    %s19 = smul.addr %s18, 4
    %s20 = scalar_lea.vmem %s2, %s19
    %s21 = sadd.s32 0, 0
    %s22 = sld [smem:[#allocation5 + %s21]]
    %s23 = smul.u32 4, %s22
  $region5: #{graphsage_forward.7} parent=0 // pred_fallthru
    _
  // Predicated region
  $region6: #{graphsage_forward.7} parent=0 // pred_check
    _
  $region7: #{graphsage_forward.7} parent=0 // pred_check_branch
    %25 = sbr.rel (0) target = $region9
  $region8: #{graphsage_forward.7} parent=0 // pred_region
    %s26 = sadd.s32 0, 0
    %s27 = sld [smem:[#allocation5 + %s26]]
    %s28 = smul.u32 64, %s27
    %p29 = scmp.lt.s32.totalorder %s28, 63
    %s30 = scalar_select %p29, %s28, 63
    %s31 = smul.addr %s30, 4
    %s32 = scalar_lea.vmem %s3, %s31
    %s33 = sadd.s32 0, 0
    %s34 = sld [smem:[#allocation5 + %s33]]
    %s35 = smul.u32 64, %s34
  $region9: #{graphsage_forward.7} parent=0 // pred_fallthru
    _
  // Predicated region
  $region10: #{graphsage_forward.7} parent=0 // pred_check
    _
  $region11: #{graphsage_forward.7} parent=0 // pred_check_branch
    %37 = sbr.rel (0) target = $region13
  $region12: #{graphsage_forward.7} parent=0 // pred_region
    _
  $region13: #{graphsage_forward.7} parent=0 // pred_fallthru
    _
  %s38 = sadd.s32 0, 0
  %s39 = sld [smem:[#allocation5 + %s38]]
  %s40 = smul.u32 4, %s39
  %p41 = scmp.lt.s32.totalorder %s40, 3
  %s42 = scalar_select %p41, %s40, 3
  %s43 = smul.addr %s42, 4
  %s44 = scalar_lea.vmem %s2, %s43
  %s45 = sadd.s32 0, 0
  %s46 = sld [smem:[#allocation5 + %s45]]
  %s47 = smul.u32 64, %s46
  %p48 = scmp.lt.s32.totalorder %s47, 63
  %s49 = scalar_select %p48, %s47, 63
  %s50 = smul.addr %s49, 4
  %s51 = scalar_lea.vmem %s3, %s50
  %s52 = sadd.s32 0, 0
  %s53 = sld [smem:[#allocation5 + %s52]]
  %s54 = smul.u32 4, %s53
  %p55 = scmp.lt.s32.totalorder %s54, 3
  %s56 = scalar_select %p55, %s54, 3
  %s57 = smul.addr %s56, 4
  %s58 = scalar_lea.vmem %s2, %s57
  %s59 = sadd.s32 0, 0
  %s60 = sld [smem:[#allocation5 + %s59]]
  %s61 = smul.u32 4, %s60
  %s62 = sadd.s32 0, 0
  %s63 = sld [smem:[#allocation5 + %s62]]
  %s64 = smul.u32 64, %s63
  %p65 = scmp.lt.s32.totalorder %s64, 63
  %s66 = scalar_select %p65, %s64, 63
  %s67 = smul.addr %s66, 4
  %s68 = scalar_lea.vmem %s3, %s67
  %s69 = sadd.s32 0, 0
  %s70 = sld [smem:[#allocation5 + %s69]]
  %s71 = smul.u32 64, %s70
  %p73 = scmp.eq.s32.totalorder 0, 0
  // Predicated region
  $region14: #{graphsage_forward.7} parent=0 // pred_check
    %p74 = pneg %p73
  $region15: #{graphsage_forward.7} parent=0 // pred_check_branch
    %76 = sbr.rel (%p74) target = $region17
  $region16: #{graphsage_forward.7} parent=0 // pred_region
    %77 = vst [vmem:[#allocation2] sm:$0xff] 0.0
    %78 = vst [vmem:[#allocation2 + $0x8] sm:$0xff] 0.0
    %79 = vst [vmem:[#allocation2 + $0x10] sm:$0xff] 0.0
    %80 = vst [vmem:[#allocation2 + $0x18] sm:$0xff] 0.0
    %81 = vst [vmem:[#allocation2 + $0x20] sm:$0xff] 0.0
    %82 = vst [vmem:[#allocation2 + $0x28] sm:$0xff] 0.0
    %83 = vst [vmem:[#allocation2 + $0x30] sm:$0xff] 0.0
    %84 = vst [vmem:[#allocation2 + $0x38] sm:$0xff] 0.0
    %85 = vst [vmem:[#allocation2 + $0x40] sm:$0xff] 0.0
    %86 = vst [vmem:[#allocation2 + $0x48] sm:$0xff] 0.0
    %87 = vst [vmem:[#allocation2 + $0x50] sm:$0xff] 0.0
    %88 = vst [vmem:[#allocation2 + $0x58] sm:$0xff] 0.0
    %89 = vst [vmem:[#allocation2 + $0x60] sm:$0xff] 0.0
    %90 = vst [vmem:[#allocation2 + $0x68] sm:$0xff] 0.0
    %91 = vst [vmem:[#allocation2 + $0x70] sm:$0xff] 0.0
    %92 = vst [vmem:[#allocation2 + $0x78] sm:$0xff] 0.0
    %93 = vst [vmem:[#allocation2 + $0x80] sm:$0xff] 0.0
    %94 = vst [vmem:[#allocation2 + $0x88] sm:$0xff] 0.0
    %95 = vst [vmem:[#allocation2 + $0x90] sm:$0xff] 0.0
    %96 = vst [vmem:[#allocation2 + $0x98] sm:$0xff] 0.0
    %97 = vst [vmem:[#allocation2 + $0xa0] sm:$0xff] 0.0
    %98 = vst [vmem:[#allocation2 + $0xa8] sm:$0xff] 0.0
    %99 = vst [vmem:[#allocation2 + $0xb0] sm:$0xff] 0.0
    %100 = vst [vmem:[#allocation2 + $0xb8] sm:$0xff] 0.0
    %101 = vst [vmem:[#allocation2 + $0xc0] sm:$0xff] 0.0
    %102 = vst [vmem:[#allocation2 + $0xc8] sm:$0xff] 0.0
    %103 = vst [vmem:[#allocation2 + $0xd0] sm:$0xff] 0.0
    %104 = vst [vmem:[#allocation2 + $0xd8] sm:$0xff] 0.0
    %105 = vst [vmem:[#allocation2 + $0xe0] sm:$0xff] 0.0
    %106 = vst [vmem:[#allocation2 + $0xe8] sm:$0xff] 0.0
    %107 = vst [vmem:[#allocation2 + $0xf0] sm:$0xff] 0.0
    %108 = vst [vmem:[#allocation2 + $0xf8] sm:$0xff] 0.0
    %109 = vst [vmem:[#allocation2 + $0x100] sm:$0xff] 0.0
    %110 = vst [vmem:[#allocation2 + $0x108] sm:$0xff] 0.0
    %111 = vst [vmem:[#allocation2 + $0x110] sm:$0xff] 0.0
    %112 = vst [vmem:[#allocation2 + $0x118] sm:$0xff] 0.0
    %113 = vst [vmem:[#allocation2 + $0x120] sm:$0xff] 0.0
    %114 = vst [vmem:[#allocation2 + $0x128] sm:$0xff] 0.0
    %115 = vst [vmem:[#allocation2 + $0x130] sm:$0xff] 0.0
    %116 = vst [vmem:[#allocation2 + $0x138] sm:$0xff] 0.0
    %117 = vst [vmem:[#allocation2 + $0x140] sm:$0xff] 0.0
    %118 = vst [vmem:[#allocation2 + $0x148] sm:$0xff] 0.0
    %119 = vst [vmem:[#allocation2 + $0x150] sm:$0xff] 0.0
    %120 = vst [vmem:[#allocation2 + $0x158] sm:$0xff] 0.0
    %121 = vst [vmem:[#allocation2 + $0x160] sm:$0xff] 0.0
    %122 = vst [vmem:[#allocation2 + $0x168] sm:$0xff] 0.0
    %123 = vst [vmem:[#allocation2 + $0x170] sm:$0xff] 0.0
    %124 = vst [vmem:[#allocation2 + $0x178] sm:$0xff] 0.0
    %125 = vst [vmem:[#allocation2 + $0x180] sm:$0xff] 0.0
    %126 = vst [vmem:[#allocation2 + $0x188] sm:$0xff] 0.0
    %127 = vst [vmem:[#allocation2 + $0x190] sm:$0xff] 0.0
    %128 = vst [vmem:[#allocation2 + $0x198] sm:$0xff] 0.0
    %129 = vst [vmem:[#allocation2 + $0x1a0] sm:$0xff] 0.0
    %130 = vst [vmem:[#allocation2 + $0x1a8] sm:$0xff] 0.0
    %131 = vst [vmem:[#allocation2 + $0x1b0] sm:$0xff] 0.0
    %132 = vst [vmem:[#allocation2 + $0x1b8] sm:$0xff] 0.0
    %133 = vst [vmem:[#allocation2 + $0x1c0] sm:$0xff] 0.0
    %134 = vst [vmem:[#allocation2 + $0x1c8] sm:$0xff] 0.0
    %135 = vst [vmem:[#allocation2 + $0x1d0] sm:$0xff] 0.0
    %136 = vst [vmem:[#allocation2 + $0x1d8] sm:$0xff] 0.0
    %137 = vst [vmem:[#allocation2 + $0x1e0] sm:$0xff] 0.0
    %138 = vst [vmem:[#allocation2 + $0x1e8] sm:$0xff] 0.0
    %139 = vst [vmem:[#allocation2 + $0x1f0] sm:$0xff] 0.0
    %140 = vst [vmem:[#allocation2 + $0x1f8] sm:$0xff] 0.0
  $region17: #{graphsage_forward.7} parent=0 // pred_fallthru
    _
  %s141 = sadd.s32 0, 0
  %s142 = sld [smem:[#allocation4 + %s141]]
  %p143 = scmp.gt.s32.totalorder %s142, 0
  // Predicated region
  $region18: #{graphsage_forward.7} parent=0 // pred_check
    %p144 = pneg %p143
  $region19: #{graphsage_forward.7} parent=0 // pred_check_branch
    %146 = sbr.rel (%p144) target = $region21
  $region20: #{graphsage_forward.7} parent=0 // pred_region
    %v147 = vld [vmem:[#allocation2] sm:$0xff]
    %v148 = vld [vmem:[#allocation2 + $0x8] sm:$0xff]
    %v149 = vld [vmem:[#allocation2 + $0x10] sm:$0xff]
    %v150 = vld [vmem:[#allocation2 + $0x18] sm:$0xff]
    %v151 = vld [vmem:[#allocation2 + $0x20] sm:$0xff]
    %v152 = vld [vmem:[#allocation2 + $0x28] sm:$0xff]
    %v153 = vld [vmem:[#allocation2 + $0x30] sm:$0xff]
    %v154 = vld [vmem:[#allocation2 + $0x38] sm:$0xff]
    %v155 = vld [vmem:[#allocation2 + $0x40] sm:$0xff]
    %v156 = vld [vmem:[#allocation2 + $0x48] sm:$0xff]
    %v157 = vld [vmem:[#allocation2 + $0x50] sm:$0xff]
    %v158 = vld [vmem:[#allocation2 + $0x58] sm:$0xff]
    %v159 = vld [vmem:[#allocation2 + $0x60] sm:$0xff]
    %v160 = vld [vmem:[#allocation2 + $0x68] sm:$0xff]
    %v161 = vld [vmem:[#allocation2 + $0x70] sm:$0xff]
    %v162 = vld [vmem:[#allocation2 + $0x78] sm:$0xff]
    %v163 = vld [vmem:[#allocation2 + $0x80] sm:$0xff]
    %v164 = vld [vmem:[#allocation2 + $0x88] sm:$0xff]
    %v165 = vld [vmem:[#allocation2 + $0x90] sm:$0xff]
    %v166 = vld [vmem:[#allocation2 + $0x98] sm:$0xff]
    %v167 = vld [vmem:[#allocation2 + $0xa0] sm:$0xff]
    %v168 = vld [vmem:[#allocation2 + $0xa8] sm:$0xff]
    %v169 = vld [vmem:[#allocation2 + $0xb0] sm:$0xff]
    %v170 = vld [vmem:[#allocation2 + $0xb8] sm:$0xff]
    %v171 = vld [vmem:[#allocation2 + $0xc0] sm:$0xff]
    %v172 = vld [vmem:[#allocation2 + $0xc8] sm:$0xff]
    %v173 = vld [vmem:[#allocation2 + $0xd0] sm:$0xff]
    %v174 = vld [vmem:[#allocation2 + $0xd8] sm:$0xff]
    %v175 = vld [vmem:[#allocation2 + $0xe0] sm:$0xff]
    %v176 = vld [vmem:[#allocation2 + $0xe8] sm:$0xff]
    %v177 = vld [vmem:[#allocation2 + $0xf0] sm:$0xff]
    %v178 = vld [vmem:[#allocation2 + $0xf8] sm:$0xff]
    %v179 = vld [vmem:[#allocation2 + $0x100] sm:$0xff]
    %v180 = vld [vmem:[#allocation2 + $0x108] sm:$0xff]
    %v181 = vld [vmem:[#allocation2 + $0x110] sm:$0xff]
    %v182 = vld [vmem:[#allocation2 + $0x118] sm:$0xff]
    %v183 = vld [vmem:[#allocation2 + $0x120] sm:$0xff]
    %v184 = vld [vmem:[#allocation2 + $0x128] sm:$0xff]
    %v185 = vld [vmem:[#allocation2 + $0x130] sm:$0xff]
    %v186 = vld [vmem:[#allocation2 + $0x138] sm:$0xff]
    %v187 = vld [vmem:[#allocation2 + $0x140] sm:$0xff]
    %v188 = vld [vmem:[#allocation2 + $0x148] sm:$0xff]
    %v189 = vld [vmem:[#allocation2 + $0x150] sm:$0xff]
    %v190 = vld [vmem:[#allocation2 + $0x158] sm:$0xff]
    %v191 = vld [vmem:[#allocation2 + $0x160] sm:$0xff]
    %v192 = vld [vmem:[#allocation2 + $0x168] sm:$0xff]
    %v193 = vld [vmem:[#allocation2 + $0x170] sm:$0xff]
    %v194 = vld [vmem:[#allocation2 + $0x178] sm:$0xff]
    %v195 = vld [vmem:[#allocation2 + $0x180] sm:$0xff]
    %v196 = vld [vmem:[#allocation2 + $0x188] sm:$0xff]
    %v197 = vld [vmem:[#allocation2 + $0x190] sm:$0xff]
    %v198 = vld [vmem:[#allocation2 + $0x198] sm:$0xff]
    %v199 = vld [vmem:[#allocation2 + $0x1a0] sm:$0xff]
    %v200 = vld [vmem:[#allocation2 + $0x1a8] sm:$0xff]
    %v201 = vld [vmem:[#allocation2 + $0x1b0] sm:$0xff]
    %v202 = vld [vmem:[#allocation2 + $0x1b8] sm:$0xff]
    %v203 = vld [vmem:[#allocation2 + $0x1c0] sm:$0xff]
    %v204 = vld [vmem:[#allocation2 + $0x1c8] sm:$0xff]
    %v205 = vld [vmem:[#allocation2 + $0x1d0] sm:$0xff]
    %v206 = vld [vmem:[#allocation2 + $0x1d8] sm:$0xff]
    %v207 = vld [vmem:[#allocation2 + $0x1e0] sm:$0xff]
    %v208 = vld [vmem:[#allocation2 + $0x1e8] sm:$0xff]
    %v209 = vld [vmem:[#allocation2 + $0x1f0] sm:$0xff]
    %v210 = vld [vmem:[#allocation2 + $0x1f8] sm:$0xff]
    %v211 = vld [vmem:[%s58] sm:$0xff]
    %v212 = vld [vmem:[%s58 + $0x8] sm:$0xff]
    %v213 = vld [vmem:[%s58 + $0x10] sm:$0xff]
    %v214 = vld [vmem:[%s58 + $0x18] sm:$0xff]
    %v215 = vld [vmem:[%s58 + $0x20] sm:$0xff]
    %v216 = vld [vmem:[%s58 + $0x28] sm:$0xff]
    %v217 = vld [vmem:[%s58 + $0x30] sm:$0xff]
    %v218 = vld [vmem:[%s58 + $0x38] sm:$0xff]
    %v219 = vld [vmem:[%s58 + $0x40] sm:$0xff]
    %v220 = vld [vmem:[%s58 + $0x48] sm:$0xff]
    %v221 = vld [vmem:[%s58 + $0x50] sm:$0xff]
    %v222 = vld [vmem:[%s58 + $0x58] sm:$0xff]
    %v223 = vld [vmem:[%s58 + $0x60] sm:$0xff]
    %v224 = vld [vmem:[%s58 + $0x68] sm:$0xff]
    %v225 = vld [vmem:[%s58 + $0x70] sm:$0xff]
    %v226 = vld [vmem:[%s58 + $0x78] sm:$0xff]
    %v227 = vld [vmem:[%s58 + $0x80] sm:$0xff]
    %v228 = vld [vmem:[%s58 + $0x88] sm:$0xff]
    %v229 = vld [vmem:[%s58 + $0x90] sm:$0xff]
    %v230 = vld [vmem:[%s58 + $0x98] sm:$0xff]
    %v231 = vld [vmem:[%s58 + $0xa0] sm:$0xff]
    %v232 = vld [vmem:[%s58 + $0xa8] sm:$0xff]
    %v233 = vld [vmem:[%s58 + $0xb0] sm:$0xff]
    %v234 = vld [vmem:[%s58 + $0xb8] sm:$0xff]
    %v235 = vld [vmem:[%s58 + $0xc0] sm:$0xff]
    %v236 = vld [vmem:[%s58 + $0xc8] sm:$0xff]
    %v237 = vld [vmem:[%s58 + $0xd0] sm:$0xff]
    %v238 = vld [vmem:[%s58 + $0xd8] sm:$0xff]
    %v239 = vld [vmem:[%s58 + $0xe0] sm:$0xff]
    %v240 = vld [vmem:[%s58 + $0xe8] sm:$0xff]
    %v241 = vld [vmem:[%s58 + $0xf0] sm:$0xff]
    %v242 = vld [vmem:[%s58 + $0xf8] sm:$0xff]
    %v243 = vld [vmem:[%s58 + $0x100] sm:$0xff]
    %v244 = vld [vmem:[%s58 + $0x108] sm:$0xff]
    %v245 = vld [vmem:[%s58 + $0x110] sm:$0xff]
    %v246 = vld [vmem:[%s58 + $0x118] sm:$0xff]
    %v247 = vld [vmem:[%s58 + $0x120] sm:$0xff]
    %v248 = vld [vmem:[%s58 + $0x128] sm:$0xff]
    %v249 = vld [vmem:[%s58 + $0x130] sm:$0xff]
    %v250 = vld [vmem:[%s58 + $0x138] sm:$0xff]
    %v251 = vld [vmem:[%s58 + $0x140] sm:$0xff]
    %v252 = vld [vmem:[%s58 + $0x148] sm:$0xff]
    %v253 = vld [vmem:[%s58 + $0x150] sm:$0xff]
    %v254 = vld [vmem:[%s58 + $0x158] sm:$0xff]
    %v255 = vld [vmem:[%s58 + $0x160] sm:$0xff]
    %v256 = vld [vmem:[%s58 + $0x168] sm:$0xff]
    %v257 = vld [vmem:[%s58 + $0x170] sm:$0xff]
    %v258 = vld [vmem:[%s58 + $0x178] sm:$0xff]
    %v259 = vld [vmem:[%s58 + $0x180] sm:$0xff]
    %v260 = vld [vmem:[%s58 + $0x188] sm:$0xff]
    %v261 = vld [vmem:[%s58 + $0x190] sm:$0xff]
    %v262 = vld [vmem:[%s58 + $0x198] sm:$0xff]
    %v263 = vld [vmem:[%s58 + $0x1a0] sm:$0xff]
    %v264 = vld [vmem:[%s58 + $0x1a8] sm:$0xff]
    %v265 = vld [vmem:[%s58 + $0x1b0] sm:$0xff]
    %v266 = vld [vmem:[%s58 + $0x1b8] sm:$0xff]
    %v267 = vld [vmem:[%s58 + $0x1c0] sm:$0xff]
    %v268 = vld [vmem:[%s58 + $0x1c8] sm:$0xff]
    %v269 = vld [vmem:[%s58 + $0x1d0] sm:$0xff]
    %v270 = vld [vmem:[%s58 + $0x1d8] sm:$0xff]
    %v271 = vld [vmem:[%s58 + $0x1e0] sm:$0xff]
    %v272 = vld [vmem:[%s58 + $0x1e8] sm:$0xff]
    %v273 = vld [vmem:[%s58 + $0x1f0] sm:$0xff]
    %v274 = vld [vmem:[%s58 + $0x1f8] sm:$0xff]
    %v275 = vld [vmem:[%s58 + $0x200] sm:$0xff]
    %v276 = vld [vmem:[%s58 + $0x208] sm:$0xff]
    %v277 = vld [vmem:[%s58 + $0x210] sm:$0xff]
    %v278 = vld [vmem:[%s58 + $0x218] sm:$0xff]
    %v279 = vld [vmem:[%s58 + $0x220] sm:$0xff]
    %v280 = vld [vmem:[%s58 + $0x228] sm:$0xff]
    %v281 = vld [vmem:[%s58 + $0x230] sm:$0xff]
    %v282 = vld [vmem:[%s58 + $0x238] sm:$0xff]
    %v283 = vld [vmem:[%s58 + $0x240] sm:$0xff]
    %v284 = vld [vmem:[%s58 + $0x248] sm:$0xff]
    %v285 = vld [vmem:[%s58 + $0x250] sm:$0xff]
    %v286 = vld [vmem:[%s58 + $0x258] sm:$0xff]
    %v287 = vld [vmem:[%s58 + $0x260] sm:$0xff]
    %v288 = vld [vmem:[%s58 + $0x268] sm:$0xff]
    %v289 = vld [vmem:[%s58 + $0x270] sm:$0xff]
    %v290 = vld [vmem:[%s58 + $0x278] sm:$0xff]
    %v291 = vld [vmem:[%s58 + $0x280] sm:$0xff]
    %v292 = vld [vmem:[%s58 + $0x288] sm:$0xff]
    %v293 = vld [vmem:[%s58 + $0x290] sm:$0xff]
    %v294 = vld [vmem:[%s58 + $0x298] sm:$0xff]
    %v295 = vld [vmem:[%s58 + $0x2a0] sm:$0xff]
    %v296 = vld [vmem:[%s58 + $0x2a8] sm:$0xff]
    %v297 = vld [vmem:[%s58 + $0x2b0] sm:$0xff]
    %v298 = vld [vmem:[%s58 + $0x2b8] sm:$0xff]
    %v299 = vld [vmem:[%s58 + $0x2c0] sm:$0xff]
    %v300 = vld [vmem:[%s58 + $0x2c8] sm:$0xff]
    %v301 = vld [vmem:[%s58 + $0x2d0] sm:$0xff]
    %v302 = vld [vmem:[%s58 + $0x2d8] sm:$0xff]
    %v303 = vld [vmem:[%s58 + $0x2e0] sm:$0xff]
    %v304 = vld [vmem:[%s58 + $0x2e8] sm:$0xff]
    %v305 = vld [vmem:[%s58 + $0x2f0] sm:$0xff]
    %v306 = vld [vmem:[%s58 + $0x2f8] sm:$0xff]
    %v307 = vld [vmem:[%s58 + $0x300] sm:$0xff]
    %v308 = vld [vmem:[%s58 + $0x308] sm:$0xff]
    %v309 = vld [vmem:[%s58 + $0x310] sm:$0xff]
    %v310 = vld [vmem:[%s58 + $0x318] sm:$0xff]
    %v311 = vld [vmem:[%s58 + $0x320] sm:$0xff]
    %v312 = vld [vmem:[%s58 + $0x328] sm:$0xff]
    %v313 = vld [vmem:[%s58 + $0x330] sm:$0xff]
    %v314 = vld [vmem:[%s58 + $0x338] sm:$0xff]
    %v315 = vld [vmem:[%s58 + $0x340] sm:$0xff]
    %v316 = vld [vmem:[%s58 + $0x348] sm:$0xff]
    %v317 = vld [vmem:[%s58 + $0x350] sm:$0xff]
    %v318 = vld [vmem:[%s58 + $0x358] sm:$0xff]
    %v319 = vld [vmem:[%s58 + $0x360] sm:$0xff]
    %v320 = vld [vmem:[%s58 + $0x368] sm:$0xff]
    %v321 = vld [vmem:[%s58 + $0x370] sm:$0xff]
    %v322 = vld [vmem:[%s58 + $0x378] sm:$0xff]
    %v323 = vld [vmem:[%s58 + $0x380] sm:$0xff]
    %v324 = vld [vmem:[%s58 + $0x388] sm:$0xff]
    %v325 = vld [vmem:[%s58 + $0x390] sm:$0xff]
    %v326 = vld [vmem:[%s58 + $0x398] sm:$0xff]
    %v327 = vld [vmem:[%s58 + $0x3a0] sm:$0xff]
    %v328 = vld [vmem:[%s58 + $0x3a8] sm:$0xff]
    %v329 = vld [vmem:[%s58 + $0x3b0] sm:$0xff]
    %v330 = vld [vmem:[%s58 + $0x3b8] sm:$0xff]
    %v331 = vld [vmem:[%s58 + $0x3c0] sm:$0xff]
    %v332 = vld [vmem:[%s58 + $0x3c8] sm:$0xff]
    %v333 = vld [vmem:[%s58 + $0x3d0] sm:$0xff]
    %v334 = vld [vmem:[%s58 + $0x3d8] sm:$0xff]
    %v335 = vld [vmem:[%s58 + $0x3e0] sm:$0xff]
    %v336 = vld [vmem:[%s58 + $0x3e8] sm:$0xff]
    %v337 = vld [vmem:[%s58 + $0x3f0] sm:$0xff]
    %v338 = vld [vmem:[%s58 + $0x3f8] sm:$0xff]
    %v339 = vld [vmem:[%s68] sm:$0xf]
    %v340 = vld [vmem:[%s68 + $0x4] sm:$0xf]
    %v341 = vld [vmem:[%s68 + $0x8] sm:$0xf]
    %v342 = vld [vmem:[%s68 + $0xc] sm:$0xf]
    %v343 = vld [vmem:[%s68 + $0x10] sm:$0xf]
    %v344 = vld [vmem:[%s68 + $0x14] sm:$0xf]
    %v345 = vld [vmem:[%s68 + $0x18] sm:$0xf]
    %v346 = vld [vmem:[%s68 + $0x1c] sm:$0xf]
    %v347 = vld [vmem:[%s68 + $0x20] sm:$0xf]
    %v348 = vld [vmem:[%s68 + $0x24] sm:$0xf]
    %v349 = vld [vmem:[%s68 + $0x28] sm:$0xf]
    %v350 = vld [vmem:[%s68 + $0x2c] sm:$0xf]
    %v351 = vld [vmem:[%s68 + $0x30] sm:$0xf]
    %v352 = vld [vmem:[%s68 + $0x34] sm:$0xf]
    %v353 = vld [vmem:[%s68 + $0x38] sm:$0xf]
    %v354 = vld [vmem:[%s68 + $0x3c] sm:$0xf]
    %v355 = vld [vmem:[%s68 + $0x40] sm:$0xf]
    %v356 = vld [vmem:[%s68 + $0x44] sm:$0xf]
    %v357 = vld [vmem:[%s68 + $0x48] sm:$0xf]
    %v358 = vld [vmem:[%s68 + $0x4c] sm:$0xf]
    %v359 = vld [vmem:[%s68 + $0x50] sm:$0xf]
    %v360 = vld [vmem:[%s68 + $0x54] sm:$0xf]
    %v361 = vld [vmem:[%s68 + $0x58] sm:$0xf]
    %v362 = vld [vmem:[%s68 + $0x5c] sm:$0xf]
    %v363 = vld [vmem:[%s68 + $0x60] sm:$0xf]
    %v364 = vld [vmem:[%s68 + $0x64] sm:$0xf]
    %v365 = vld [vmem:[%s68 + $0x68] sm:$0xf]
    %v366 = vld [vmem:[%s68 + $0x6c] sm:$0xf]
    %v367 = vld [vmem:[%s68 + $0x70] sm:$0xf]
    %v368 = vld [vmem:[%s68 + $0x74] sm:$0xf]
    %v369 = vld [vmem:[%s68 + $0x78] sm:$0xf]
    %v370 = vld [vmem:[%s68 + $0x7c] sm:$0xf]
    %v371 = vld [vmem:[%s68 + $0x80] sm:$0xf]
    %v372 = vld [vmem:[%s68 + $0x84] sm:$0xf]
    %v373 = vld [vmem:[%s68 + $0x88] sm:$0xf]
    %v374 = vld [vmem:[%s68 + $0x8c] sm:$0xf]
    %v375 = vld [vmem:[%s68 + $0x90] sm:$0xf]
    %v376 = vld [vmem:[%s68 + $0x94] sm:$0xf]
    %v377 = vld [vmem:[%s68 + $0x98] sm:$0xf]
    %v378 = vld [vmem:[%s68 + $0x9c] sm:$0xf]
    %v379 = vld [vmem:[%s68 + $0xa0] sm:$0xf]
    %v380 = vld [vmem:[%s68 + $0xa4] sm:$0xf]
    %v381 = vld [vmem:[%s68 + $0xa8] sm:$0xf]
    %v382 = vld [vmem:[%s68 + $0xac] sm:$0xf]
    %v383 = vld [vmem:[%s68 + $0xb0] sm:$0xf]
    %v384 = vld [vmem:[%s68 + $0xb4] sm:$0xf]
    %v385 = vld [vmem:[%s68 + $0xb8] sm:$0xf]
    %v386 = vld [vmem:[%s68 + $0xbc] sm:$0xf]
    %v387 = vld [vmem:[%s68 + $0xc0] sm:$0xf]
    %v388 = vld [vmem:[%s68 + $0xc4] sm:$0xf]
    %v389 = vld [vmem:[%s68 + $0xc8] sm:$0xf]
    %v390 = vld [vmem:[%s68 + $0xcc] sm:$0xf]
    %v391 = vld [vmem:[%s68 + $0xd0] sm:$0xf]
    %v392 = vld [vmem:[%s68 + $0xd4] sm:$0xf]
    %v393 = vld [vmem:[%s68 + $0xd8] sm:$0xf]
    %v394 = vld [vmem:[%s68 + $0xdc] sm:$0xf]
    %v395 = vld [vmem:[%s68 + $0xe0] sm:$0xf]
    %v396 = vld [vmem:[%s68 + $0xe4] sm:$0xf]
    %v397 = vld [vmem:[%s68 + $0xe8] sm:$0xf]
    %v398 = vld [vmem:[%s68 + $0xec] sm:$0xf]
    %v399 = vld [vmem:[%s68 + $0xf0] sm:$0xf]
    %v400 = vld [vmem:[%s68 + $0xf4] sm:$0xf]
    %v401 = vld [vmem:[%s68 + $0xf8] sm:$0xf]
    %v402 = vld [vmem:[%s68 + $0xfc] sm:$0xf]
    %v531 = vunpack.c.l.b16 %v211
    %v532 = vunpack.c.h.b16 %v211
    %v533 = vunpack.c.l.b16 %v212
    %v534 = vunpack.c.h.b16 %v212
    %v535 = vunpack.c.l.b16 %v213
    %v536 = vunpack.c.h.b16 %v213
    %v537 = vunpack.c.l.b16 %v214
    %v538 = vunpack.c.h.b16 %v214
    %v539 = vunpack.c.l.b16 %v215
    %v540 = vunpack.c.h.b16 %v215
    %v541 = vunpack.c.l.b16 %v216
    %v542 = vunpack.c.h.b16 %v216
    %v543 = vunpack.c.l.b16 %v217
    %v544 = vunpack.c.h.b16 %v217
    %v545 = vunpack.c.l.b16 %v218
    %v546 = vunpack.c.h.b16 %v218
    %v547 = vunpack.c.l.b16 %v219
    %v548 = vunpack.c.h.b16 %v219
    %v549 = vunpack.c.l.b16 %v220
    %v550 = vunpack.c.h.b16 %v220
    %v551 = vunpack.c.l.b16 %v221
    %v552 = vunpack.c.h.b16 %v221
    %v553 = vunpack.c.l.b16 %v222
    %v554 = vunpack.c.h.b16 %v222
    %v555 = vunpack.c.l.b16 %v223
    %v556 = vunpack.c.h.b16 %v223
    %v557 = vunpack.c.l.b16 %v224
    %v558 = vunpack.c.h.b16 %v224
    %v559 = vunpack.c.l.b16 %v225
    %v560 = vunpack.c.h.b16 %v225
    %v561 = vunpack.c.l.b16 %v226
    %v562 = vunpack.c.h.b16 %v226
    %v563 = vunpack.c.l.b16 %v227
    %v564 = vunpack.c.h.b16 %v227
    %v565 = vunpack.c.l.b16 %v228
    %v566 = vunpack.c.h.b16 %v228
    %v567 = vunpack.c.l.b16 %v229
    %v568 = vunpack.c.h.b16 %v229
    %v569 = vunpack.c.l.b16 %v230
    %v570 = vunpack.c.h.b16 %v230
    %v571 = vunpack.c.l.b16 %v231
    %v572 = vunpack.c.h.b16 %v231
    %v573 = vunpack.c.l.b16 %v232
    %v574 = vunpack.c.h.b16 %v232
    %v575 = vunpack.c.l.b16 %v233
    %v576 = vunpack.c.h.b16 %v233
    %v577 = vunpack.c.l.b16 %v234
    %v578 = vunpack.c.h.b16 %v234
    %v579 = vunpack.c.l.b16 %v235
    %v580 = vunpack.c.h.b16 %v235
    %v581 = vunpack.c.l.b16 %v236
    %v582 = vunpack.c.h.b16 %v236
    %v583 = vunpack.c.l.b16 %v237
    %v584 = vunpack.c.h.b16 %v237
    %v585 = vunpack.c.l.b16 %v238
    %v586 = vunpack.c.h.b16 %v238
    %v587 = vunpack.c.l.b16 %v239
    %v588 = vunpack.c.h.b16 %v239
    %v589 = vunpack.c.l.b16 %v240
    %v590 = vunpack.c.h.b16 %v240
    %v591 = vunpack.c.l.b16 %v241
    %v592 = vunpack.c.h.b16 %v241
    %v593 = vunpack.c.l.b16 %v242
    %v594 = vunpack.c.h.b16 %v242
    %v595 = vunpack.c.l.b16 %v243
    %v596 = vunpack.c.h.b16 %v243
    %v597 = vunpack.c.l.b16 %v244
    %v598 = vunpack.c.h.b16 %v244
    %v599 = vunpack.c.l.b16 %v245
    %v600 = vunpack.c.h.b16 %v245
    %v601 = vunpack.c.l.b16 %v246
    %v602 = vunpack.c.h.b16 %v246
    %v603 = vunpack.c.l.b16 %v247
    %v604 = vunpack.c.h.b16 %v247
    %v605 = vunpack.c.l.b16 %v248
    %v606 = vunpack.c.h.b16 %v248
    %v607 = vunpack.c.l.b16 %v249
    %v608 = vunpack.c.h.b16 %v249
    %v609 = vunpack.c.l.b16 %v250
    %v610 = vunpack.c.h.b16 %v250
    %v611 = vunpack.c.l.b16 %v251
    %v612 = vunpack.c.h.b16 %v251
    %v613 = vunpack.c.l.b16 %v252
    %v614 = vunpack.c.h.b16 %v252
    %v615 = vunpack.c.l.b16 %v253
    %v616 = vunpack.c.h.b16 %v253
    %v617 = vunpack.c.l.b16 %v254
    %v618 = vunpack.c.h.b16 %v254
    %v619 = vunpack.c.l.b16 %v255
    %v620 = vunpack.c.h.b16 %v255
    %v621 = vunpack.c.l.b16 %v256
    %v622 = vunpack.c.h.b16 %v256
    %v623 = vunpack.c.l.b16 %v257
    %v624 = vunpack.c.h.b16 %v257
    %v625 = vunpack.c.l.b16 %v258
    %v626 = vunpack.c.h.b16 %v258
    %v627 = vunpack.c.l.b16 %v259
    %v628 = vunpack.c.h.b16 %v259
    %v629 = vunpack.c.l.b16 %v260
    %v630 = vunpack.c.h.b16 %v260
    %v631 = vunpack.c.l.b16 %v261
    %v632 = vunpack.c.h.b16 %v261
    %v633 = vunpack.c.l.b16 %v262
    %v634 = vunpack.c.h.b16 %v262
    %v635 = vunpack.c.l.b16 %v263
    %v636 = vunpack.c.h.b16 %v263
    %v637 = vunpack.c.l.b16 %v264
    %v638 = vunpack.c.h.b16 %v264
    %v639 = vunpack.c.l.b16 %v265
    %v640 = vunpack.c.h.b16 %v265
    %v641 = vunpack.c.l.b16 %v266
    %v642 = vunpack.c.h.b16 %v266
    %v643 = vunpack.c.l.b16 %v267
    %v644 = vunpack.c.h.b16 %v267
    %v645 = vunpack.c.l.b16 %v268
    %v646 = vunpack.c.h.b16 %v268
    %v647 = vunpack.c.l.b16 %v269
    %v648 = vunpack.c.h.b16 %v269
    %v649 = vunpack.c.l.b16 %v270
    %v650 = vunpack.c.h.b16 %v270
    %v651 = vunpack.c.l.b16 %v271
    %v652 = vunpack.c.h.b16 %v271
    %v653 = vunpack.c.l.b16 %v272
    %v654 = vunpack.c.h.b16 %v272
    %v655 = vunpack.c.l.b16 %v273
    %v656 = vunpack.c.h.b16 %v273
    %v657 = vunpack.c.l.b16 %v274
    %v658 = vunpack.c.h.b16 %v274
    %v659 = vunpack.c.l.b16 %v275
    %v660 = vunpack.c.h.b16 %v275
    %v661 = vunpack.c.l.b16 %v276
    %v662 = vunpack.c.h.b16 %v276
    %v663 = vunpack.c.l.b16 %v277
    %v664 = vunpack.c.h.b16 %v277
    %v665 = vunpack.c.l.b16 %v278
    %v666 = vunpack.c.h.b16 %v278
    %v667 = vunpack.c.l.b16 %v279
    %v668 = vunpack.c.h.b16 %v279
    %v669 = vunpack.c.l.b16 %v280
    %v670 = vunpack.c.h.b16 %v280
    %v671 = vunpack.c.l.b16 %v281
    %v672 = vunpack.c.h.b16 %v281
    %v673 = vunpack.c.l.b16 %v282
    %v674 = vunpack.c.h.b16 %v282
    %v675 = vunpack.c.l.b16 %v283
    %v676 = vunpack.c.h.b16 %v283
    %v677 = vunpack.c.l.b16 %v284
    %v678 = vunpack.c.h.b16 %v284
    %v679 = vunpack.c.l.b16 %v285
    %v680 = vunpack.c.h.b16 %v285
    %v681 = vunpack.c.l.b16 %v286
    %v682 = vunpack.c.h.b16 %v286
    %v683 = vunpack.c.l.b16 %v287
    %v684 = vunpack.c.h.b16 %v287
    %v685 = vunpack.c.l.b16 %v288
    %v686 = vunpack.c.h.b16 %v288
    %v687 = vunpack.c.l.b16 %v289
    %v688 = vunpack.c.h.b16 %v289
    %v689 = vunpack.c.l.b16 %v290
    %v690 = vunpack.c.h.b16 %v290
    %v691 = vunpack.c.l.b16 %v291
    %v692 = vunpack.c.h.b16 %v291
    %v693 = vunpack.c.l.b16 %v292
    %v694 = vunpack.c.h.b16 %v292
    %v695 = vunpack.c.l.b16 %v293
    %v696 = vunpack.c.h.b16 %v293
    %v697 = vunpack.c.l.b16 %v294
    %v698 = vunpack.c.h.b16 %v294
    %v699 = vunpack.c.l.b16 %v295
    %v700 = vunpack.c.h.b16 %v295
    %v701 = vunpack.c.l.b16 %v296
    %v702 = vunpack.c.h.b16 %v296
    %v703 = vunpack.c.l.b16 %v297
    %v704 = vunpack.c.h.b16 %v297
    %v705 = vunpack.c.l.b16 %v298
    %v706 = vunpack.c.h.b16 %v298
    %v707 = vunpack.c.l.b16 %v299
    %v708 = vunpack.c.h.b16 %v299
    %v709 = vunpack.c.l.b16 %v300
    %v710 = vunpack.c.h.b16 %v300
    %v711 = vunpack.c.l.b16 %v301
    %v712 = vunpack.c.h.b16 %v301
    %v713 = vunpack.c.l.b16 %v302
    %v714 = vunpack.c.h.b16 %v302
    %v715 = vunpack.c.l.b16 %v303
    %v716 = vunpack.c.h.b16 %v303
    %v717 = vunpack.c.l.b16 %v304
    %v718 = vunpack.c.h.b16 %v304
    %v719 = vunpack.c.l.b16 %v305
    %v720 = vunpack.c.h.b16 %v305
    %v721 = vunpack.c.l.b16 %v306
    %v722 = vunpack.c.h.b16 %v306
    %v723 = vunpack.c.l.b16 %v307
    %v724 = vunpack.c.h.b16 %v307
    %v725 = vunpack.c.l.b16 %v308
    %v726 = vunpack.c.h.b16 %v308
    %v727 = vunpack.c.l.b16 %v309
    %v728 = vunpack.c.h.b16 %v309
    %v729 = vunpack.c.l.b16 %v310
    %v730 = vunpack.c.h.b16 %v310
    %v731 = vunpack.c.l.b16 %v311
    %v732 = vunpack.c.h.b16 %v311
    %v733 = vunpack.c.l.b16 %v312
    %v734 = vunpack.c.h.b16 %v312
    %v735 = vunpack.c.l.b16 %v313
    %v736 = vunpack.c.h.b16 %v313
    %v737 = vunpack.c.l.b16 %v314
    %v738 = vunpack.c.h.b16 %v314
    %v739 = vunpack.c.l.b16 %v315
    %v740 = vunpack.c.h.b16 %v315
    %v741 = vunpack.c.l.b16 %v316
    %v742 = vunpack.c.h.b16 %v316
    %v743 = vunpack.c.l.b16 %v317
    %v744 = vunpack.c.h.b16 %v317
    %v745 = vunpack.c.l.b16 %v318
    %v746 = vunpack.c.h.b16 %v318
    %v747 = vunpack.c.l.b16 %v319
    %v748 = vunpack.c.h.b16 %v319
    %v749 = vunpack.c.l.b16 %v320
    %v750 = vunpack.c.h.b16 %v320
    %v751 = vunpack.c.l.b16 %v321
    %v752 = vunpack.c.h.b16 %v321
    %v753 = vunpack.c.l.b16 %v322
    %v754 = vunpack.c.h.b16 %v322
    %v755 = vunpack.c.l.b16 %v323
    %v756 = vunpack.c.h.b16 %v323
    %v757 = vunpack.c.l.b16 %v324
    %v758 = vunpack.c.h.b16 %v324
    %v759 = vunpack.c.l.b16 %v325
    %v760 = vunpack.c.h.b16 %v325
    %v761 = vunpack.c.l.b16 %v326
    %v762 = vunpack.c.h.b16 %v326
    %v763 = vunpack.c.l.b16 %v327
    %v764 = vunpack.c.h.b16 %v327
    %v765 = vunpack.c.l.b16 %v328
    %v766 = vunpack.c.h.b16 %v328
    %v767 = vunpack.c.l.b16 %v329
    %v768 = vunpack.c.h.b16 %v329
    %v769 = vunpack.c.l.b16 %v330
    %v770 = vunpack.c.h.b16 %v330
    %v771 = vunpack.c.l.b16 %v331
    %v772 = vunpack.c.h.b16 %v331
    %v773 = vunpack.c.l.b16 %v332
    %v774 = vunpack.c.h.b16 %v332
    %v775 = vunpack.c.l.b16 %v333
    %v776 = vunpack.c.h.b16 %v333
    %v777 = vunpack.c.l.b16 %v334
    %v778 = vunpack.c.h.b16 %v334
    %v779 = vunpack.c.l.b16 %v335
    %v780 = vunpack.c.h.b16 %v335
    %v781 = vunpack.c.l.b16 %v336
    %v782 = vunpack.c.h.b16 %v336
    %v783 = vunpack.c.l.b16 %v337
    %v784 = vunpack.c.h.b16 %v337
    %v785 = vunpack.c.l.b16 %v338
    %v786 = vunpack.c.h.b16 %v338
    %v787 = vpack.c.b16 %v535, %v531
    %v788 = vpack.c.b16 %v536, %v532
    %v789 = vpack.c.b16 %v537, %v533
    %v790 = vpack.c.b16 %v538, %v534
    %v791 = vpack.c.b16 %v543, %v539
    %v792 = vpack.c.b16 %v544, %v540
    %v793 = vpack.c.b16 %v545, %v541
    %v794 = vpack.c.b16 %v546, %v542
    %v795 = vpack.c.b16 %v551, %v547
    %v796 = vpack.c.b16 %v552, %v548
    %v797 = vpack.c.b16 %v553, %v549
    %v798 = vpack.c.b16 %v554, %v550
    %v799 = vpack.c.b16 %v559, %v555
    %v800 = vpack.c.b16 %v560, %v556
    %v801 = vpack.c.b16 %v561, %v557
    %v802 = vpack.c.b16 %v562, %v558
    %v803 = vpack.c.b16 %v567, %v563
    %v804 = vpack.c.b16 %v568, %v564
    %v805 = vpack.c.b16 %v569, %v565
    %v806 = vpack.c.b16 %v570, %v566
    %v807 = vpack.c.b16 %v575, %v571
    %v808 = vpack.c.b16 %v576, %v572
    %v809 = vpack.c.b16 %v577, %v573
    %v810 = vpack.c.b16 %v578, %v574
    %v811 = vpack.c.b16 %v583, %v579
    %v812 = vpack.c.b16 %v584, %v580
    %v813 = vpack.c.b16 %v585, %v581
    %v814 = vpack.c.b16 %v586, %v582
    %v815 = vpack.c.b16 %v591, %v587
    %v816 = vpack.c.b16 %v592, %v588
    %v817 = vpack.c.b16 %v593, %v589
    %v818 = vpack.c.b16 %v594, %v590
    %v819 = vpack.c.b16 %v599, %v595
    %v820 = vpack.c.b16 %v600, %v596
    %v821 = vpack.c.b16 %v601, %v597
    %v822 = vpack.c.b16 %v602, %v598
    %v823 = vpack.c.b16 %v607, %v603
    %v824 = vpack.c.b16 %v608, %v604
    %v825 = vpack.c.b16 %v609, %v605
    %v826 = vpack.c.b16 %v610, %v606
    %v827 = vpack.c.b16 %v615, %v611
    %v828 = vpack.c.b16 %v616, %v612
    %v829 = vpack.c.b16 %v617, %v613
    %v830 = vpack.c.b16 %v618, %v614
    %v831 = vpack.c.b16 %v623, %v619
    %v832 = vpack.c.b16 %v624, %v620
    %v833 = vpack.c.b16 %v625, %v621
    %v834 = vpack.c.b16 %v626, %v622
    %v835 = vpack.c.b16 %v631, %v627
    %v836 = vpack.c.b16 %v632, %v628
    %v837 = vpack.c.b16 %v633, %v629
    %v838 = vpack.c.b16 %v634, %v630
    %v839 = vpack.c.b16 %v639, %v635
    %v840 = vpack.c.b16 %v640, %v636
    %v841 = vpack.c.b16 %v641, %v637
    %v842 = vpack.c.b16 %v642, %v638
    %v843 = vpack.c.b16 %v647, %v643
    %v844 = vpack.c.b16 %v648, %v644
    %v845 = vpack.c.b16 %v649, %v645
    %v846 = vpack.c.b16 %v650, %v646
    %v847 = vpack.c.b16 %v655, %v651
    %v848 = vpack.c.b16 %v656, %v652
    %v849 = vpack.c.b16 %v657, %v653
    %v850 = vpack.c.b16 %v658, %v654
    %v851 = vpack.c.b16 %v663, %v659
    %v852 = vpack.c.b16 %v664, %v660
    %v853 = vpack.c.b16 %v665, %v661
    %v854 = vpack.c.b16 %v666, %v662
    %v855 = vpack.c.b16 %v671, %v667
    %v856 = vpack.c.b16 %v672, %v668
    %v857 = vpack.c.b16 %v673, %v669
    %v858 = vpack.c.b16 %v674, %v670
    %v859 = vpack.c.b16 %v679, %v675
    %v860 = vpack.c.b16 %v680, %v676
    %v861 = vpack.c.b16 %v681, %v677
    %v862 = vpack.c.b16 %v682, %v678
    %v863 = vpack.c.b16 %v687, %v683
    %v864 = vpack.c.b16 %v688, %v684
    %v865 = vpack.c.b16 %v689, %v685
    %v866 = vpack.c.b16 %v690, %v686
    %v867 = vpack.c.b16 %v695, %v691
    %v868 = vpack.c.b16 %v696, %v692
    %v869 = vpack.c.b16 %v697, %v693
    %v870 = vpack.c.b16 %v698, %v694
    %v871 = vpack.c.b16 %v703, %v699
    %v872 = vpack.c.b16 %v704, %v700
    %v873 = vpack.c.b16 %v705, %v701
    %v874 = vpack.c.b16 %v706, %v702
    %v875 = vpack.c.b16 %v711, %v707
    %v876 = vpack.c.b16 %v712, %v708
    %v877 = vpack.c.b16 %v713, %v709
    %v878 = vpack.c.b16 %v714, %v710
    %v879 = vpack.c.b16 %v719, %v715
    %v880 = vpack.c.b16 %v720, %v716
    %v881 = vpack.c.b16 %v721, %v717
    %v882 = vpack.c.b16 %v722, %v718
    %v883 = vpack.c.b16 %v727, %v723
    %v884 = vpack.c.b16 %v728, %v724
    %v885 = vpack.c.b16 %v729, %v725
    %v886 = vpack.c.b16 %v730, %v726
    %v887 = vpack.c.b16 %v735, %v731
    %v888 = vpack.c.b16 %v736, %v732
    %v889 = vpack.c.b16 %v737, %v733
    %v890 = vpack.c.b16 %v738, %v734
    %v891 = vpack.c.b16 %v743, %v739
    %v892 = vpack.c.b16 %v744, %v740
    %v893 = vpack.c.b16 %v745, %v741
    %v894 = vpack.c.b16 %v746, %v742
    %v895 = vpack.c.b16 %v751, %v747
    %v896 = vpack.c.b16 %v752, %v748
    %v897 = vpack.c.b16 %v753, %v749
    %v898 = vpack.c.b16 %v754, %v750
    %v899 = vpack.c.b16 %v759, %v755
    %v900 = vpack.c.b16 %v760, %v756
    %v901 = vpack.c.b16 %v761, %v757
    %v902 = vpack.c.b16 %v762, %v758
    %v903 = vpack.c.b16 %v767, %v763
    %v904 = vpack.c.b16 %v768, %v764
    %v905 = vpack.c.b16 %v769, %v765
    %v906 = vpack.c.b16 %v770, %v766
    %v907 = vpack.c.b16 %v775, %v771
    %v908 = vpack.c.b16 %v776, %v772
    %v909 = vpack.c.b16 %v777, %v773
    %v910 = vpack.c.b16 %v778, %v774
    %v911 = vpack.c.b16 %v783, %v779
    %v912 = vpack.c.b16 %v784, %v780
    %v913 = vpack.c.b16 %v785, %v781
    %v914 = vpack.c.b16 %v786, %v782
    %v1107 = vunpack.c.l.b16 %v339
    %v1108 = vunpack.c.l.b16 %v340
    %v1109 = vunpack.c.l.b16 %v341
    %v1110 = vunpack.c.l.b16 %v342
    %v1111 = vunpack.c.l.b16 %v343
    %v1112 = vunpack.c.l.b16 %v344
    %v1113 = vunpack.c.l.b16 %v345
    %v1114 = vunpack.c.l.b16 %v346
    %v1115 = vunpack.c.l.b16 %v347
    %v1116 = vunpack.c.l.b16 %v348
    %v1117 = vunpack.c.l.b16 %v349
    %v1118 = vunpack.c.l.b16 %v350
    %v1119 = vunpack.c.l.b16 %v351
    %v1120 = vunpack.c.l.b16 %v352
    %v1121 = vunpack.c.l.b16 %v353
    %v1122 = vunpack.c.l.b16 %v354
    %v1123 = vunpack.c.l.b16 %v355
    %v1124 = vunpack.c.l.b16 %v356
    %v1125 = vunpack.c.l.b16 %v357
    %v1126 = vunpack.c.l.b16 %v358
    %v1127 = vunpack.c.l.b16 %v359
    %v1128 = vunpack.c.l.b16 %v360
    %v1129 = vunpack.c.l.b16 %v361
    %v1130 = vunpack.c.l.b16 %v362
    %v1131 = vunpack.c.l.b16 %v363
    %v1132 = vunpack.c.l.b16 %v364
    %v1133 = vunpack.c.l.b16 %v365
    %v1134 = vunpack.c.l.b16 %v366
    %v1135 = vunpack.c.l.b16 %v367
    %v1136 = vunpack.c.l.b16 %v368
    %v1137 = vunpack.c.l.b16 %v369
    %v1138 = vunpack.c.l.b16 %v370
    %v1139 = vunpack.c.l.b16 %v371
    %v1140 = vunpack.c.l.b16 %v372
    %v1141 = vunpack.c.l.b16 %v373
    %v1142 = vunpack.c.l.b16 %v374
    %v1143 = vunpack.c.l.b16 %v375
    %v1144 = vunpack.c.l.b16 %v376
    %v1145 = vunpack.c.l.b16 %v377
    %v1146 = vunpack.c.l.b16 %v378
    %v1147 = vunpack.c.l.b16 %v379
    %v1148 = vunpack.c.l.b16 %v380
    %v1149 = vunpack.c.l.b16 %v381
    %v1150 = vunpack.c.l.b16 %v382
    %v1151 = vunpack.c.l.b16 %v383
    %v1152 = vunpack.c.l.b16 %v384
    %v1153 = vunpack.c.l.b16 %v385
    %v1154 = vunpack.c.l.b16 %v386
    %v1155 = vunpack.c.l.b16 %v387
    %v1156 = vunpack.c.l.b16 %v388
    %v1157 = vunpack.c.l.b16 %v389
    %v1158 = vunpack.c.l.b16 %v390
    %v1159 = vunpack.c.l.b16 %v391
    %v1160 = vunpack.c.l.b16 %v392
    %v1161 = vunpack.c.l.b16 %v393
    %v1162 = vunpack.c.l.b16 %v394
    %v1163 = vunpack.c.l.b16 %v395
    %v1164 = vunpack.c.l.b16 %v396
    %v1165 = vunpack.c.l.b16 %v397
    %v1166 = vunpack.c.l.b16 %v398
    %v1167 = vunpack.c.l.b16 %v399
    %v1168 = vunpack.c.l.b16 %v400
    %v1169 = vunpack.c.l.b16 %v401
    %v1170 = vunpack.c.l.b16 %v402
    %v1171 = vpack.c.b16 %v1108, %v1107
    %v1172 = vpack.c.b16 %v1110, %v1109
    %v1173 = vpack.c.b16 %v1112, %v1111
    %v1174 = vpack.c.b16 %v1114, %v1113
    %v1175 = vpack.c.b16 %v1116, %v1115
    %v1176 = vpack.c.b16 %v1118, %v1117
    %v1177 = vpack.c.b16 %v1120, %v1119
    %v1178 = vpack.c.b16 %v1122, %v1121
    %v1179 = vpack.c.b16 %v1124, %v1123
    %v1180 = vpack.c.b16 %v1126, %v1125
    %v1181 = vpack.c.b16 %v1128, %v1127
    %v1182 = vpack.c.b16 %v1130, %v1129
    %v1183 = vpack.c.b16 %v1132, %v1131
    %v1184 = vpack.c.b16 %v1134, %v1133
    %v1185 = vpack.c.b16 %v1136, %v1135
    %v1186 = vpack.c.b16 %v1138, %v1137
    %v1187 = vpack.c.b16 %v1140, %v1139
    %v1188 = vpack.c.b16 %v1142, %v1141
    %v1189 = vpack.c.b16 %v1144, %v1143
    %v1190 = vpack.c.b16 %v1146, %v1145
    %v1191 = vpack.c.b16 %v1148, %v1147
    %v1192 = vpack.c.b16 %v1150, %v1149
    %v1193 = vpack.c.b16 %v1152, %v1151
    %v1194 = vpack.c.b16 %v1154, %v1153
    %v1195 = vpack.c.b16 %v1156, %v1155
    %v1196 = vpack.c.b16 %v1158, %v1157
    %v1197 = vpack.c.b16 %v1160, %v1159
    %v1198 = vpack.c.b16 %v1162, %v1161
    %v1199 = vpack.c.b16 %v1164, %v1163
    %v1200 = vpack.c.b16 %v1166, %v1165
    %v1201 = vpack.c.b16 %v1168, %v1167
    %v1202 = vpack.c.b16 %v1170, %v1169
    %1235 = vmatprep.subr.bf16.mxu0 0
    %1236 = vmatpush1.bf16.msra.mxu0 %v1171
    %1237 = vmatprep.subr.bf16.mxu0 0
    %1238 = vmatpush1.bf16.msra.mxu0 %v1172
    %1239 = vmatprep.subr.bf16.mxu0 0
    %1240 = vmatpush1.bf16.msra.mxu0 %v1173
    %1241 = vmatprep.subr.bf16.mxu0 0
    %1242 = vmatpush1.bf16.msra.mxu0 %v1174
    %1243 = vmatprep.subr.bf16.mxu0 0
    %1244 = vmatpush1.bf16.msra.mxu0 %v1175
    %1245 = vmatprep.subr.bf16.mxu0 0
    %1246 = vmatpush1.bf16.msra.mxu0 %v1176
    %1247 = vmatprep.subr.bf16.mxu0 0
    %1248 = vmatpush1.bf16.msra.mxu0 %v1177
    %1249 = vmatprep.subr.bf16.mxu0 0
    %1250 = vmatpush1.bf16.msra.mxu0 %v1178
    %1251 = vmatprep.subr.bf16.mxu0 0
    %1252 = vmatpush1.bf16.msra.mxu0 %v1179
    %1253 = vmatprep.subr.bf16.mxu0 0
    %1254 = vmatpush1.bf16.msra.mxu0 %v1180
    %1255 = vmatprep.subr.bf16.mxu0 0
    %1256 = vmatpush1.bf16.msra.mxu0 %v1181
    %1257 = vmatprep.subr.bf16.mxu0 0
    %1258 = vmatpush1.bf16.msra.mxu0 %v1182
    %1259 = vmatprep.subr.bf16.mxu0 0
    %1260 = vmatpush1.bf16.msra.mxu0 %v1183
    %1261 = vmatprep.subr.bf16.mxu0 0
    %1262 = vmatpush1.bf16.msra.mxu0 %v1184
    %1263 = vmatprep.subr.bf16.mxu0 0
    %1264 = vmatpush1.bf16.msra.mxu0 %v1185
    %1265 = vmatprep.subr.bf16.mxu0 0
    %1266 = vmatpush1.bf16.msra.mxu0 %v1186
    %1267 = vmatprep.mubr.bf16.mxu0 %v788
    %1268 = vmatmul.mubr.bf16.gmra.mrb[0].mxu0 %v787
    %v1269 = vpop.f32.mrb[0].mxu0
    %v1270 = vadd.f32 0.0, %v1269
    %v1271 = vpop.f32.mrb[0].mxu0
    %v1272 = vpop.f32.mrb[0].mxu0
    %v1273 = vadd.f32 0.0, %v1272
    %v1274 = vpop.f32.mrb[0].mxu0
    %1275 = vmatprep.mubr.bf16.mxu0 %v792
    %1276 = vmatmul.mubr.bf16.gmra.mrb[0].mxu0 %v791
    %v1277 = vpop.f32.mrb[0].mxu0
    %v1278 = vadd.f32 0.0, %v1277
    %v1279 = vpop.f32.mrb[0].mxu0
    %v1280 = vpop.f32.mrb[0].mxu0
    %v1281 = vadd.f32 0.0, %v1280
    %v1282 = vpop.f32.mrb[0].mxu0
    %1283 = vmatprep.mubr.bf16.mxu0 %v796
    %1284 = vmatmul.mubr.bf16.gmra.mrb[0].mxu0 %v795
    %v1285 = vpop.f32.mrb[0].mxu0
    %v1286 = vadd.f32 0.0, %v1285
    %v1287 = vpop.f32.mrb[0].mxu0
    %v1288 = vpop.f32.mrb[0].mxu0
    %v1289 = vadd.f32 0.0, %v1288
    %v1290 = vpop.f32.mrb[0].mxu0
    %1291 = vmatprep.mubr.bf16.mxu0 %v800
    %1292 = vmatmul.mubr.bf16.gmra.mrb[0].mxu0 %v799
    %v1293 = vpop.f32.mrb[0].mxu0
    %v1294 = vadd.f32 0.0, %v1293
    %v1295 = vpop.f32.mrb[0].mxu0
    %v1296 = vpop.f32.mrb[0].mxu0
    %v1297 = vadd.f32 0.0, %v1296
    %v1298 = vpop.f32.mrb[0].mxu0
    %1299 = vmatprep.mubr.bf16.mxu0 %v804
    %1300 = vmatmul.mubr.bf16.gmra.mrb[0].mxu0 %v803
    %v1301 = vpop.f32.mrb[0].mxu0
    %v1302 = vadd.f32 0.0, %v1301
    %v1303 = vpop.f32.mrb[0].mxu0
    %v1304 = vpop.f32.mrb[0].mxu0
    %v1305 = vadd.f32 0.0, %v1304
    %v1306 = vpop.f32.mrb[0].mxu0
    %1307 = vmatprep.mubr.bf16.mxu0 %v808
    %1308 = vmatmul.mubr.bf16.gmra.mrb[0].mxu0 %v807
    %v1309 = vpop.f32.mrb[0].mxu0
    %v1310 = vadd.f32 0.0, %v1309
    %v1311 = vpop.f32.mrb[0].mxu0
    %v1312 = vpop.f32.mrb[0].mxu0
    %v1313 = vadd.f32 0.0, %v1312
    %v1314 = vpop.f32.mrb[0].mxu0
    %1315 = vmatprep.mubr.bf16.mxu0 %v812
    %1316 = vmatmul.mubr.bf16.gmra.mrb[0].mxu0 %v811
    %v1317 = vpop.f32.mrb[0].mxu0
    %v1318 = vadd.f32 0.0, %v1317
    %v1319 = vpop.f32.mrb[0].mxu0
    %v1320 = vpop.f32.mrb[0].mxu0
    %v1321 = vadd.f32 0.0, %v1320
    %v1322 = vpop.f32.mrb[0].mxu0
    %1323 = vmatprep.mubr.bf16.mxu0 %v816
    %1324 = vmatmul.mubr.bf16.gmra.mrb[0].mxu0 %v815
    %v1325 = vpop.f32.mrb[0].mxu0
    %v1326 = vadd.f32 0.0, %v1325
    %v1327 = vpop.f32.mrb[0].mxu0
    %v1328 = vpop.f32.mrb[0].mxu0
    %v1329 = vadd.f32 0.0, %v1328
    %v1330 = vpop.f32.mrb[0].mxu0
    %1331 = vmatprep.mubr.bf16.mxu0 %v820
    %1332 = vmatmul.mubr.bf16.gmra.mrb[0].mxu0 %v819
    %v1333 = vpop.f32.mrb[0].mxu0
    %v1334 = vadd.f32 0.0, %v1333
    %v1335 = vpop.f32.mrb[0].mxu0
    %v1336 = vpop.f32.mrb[0].mxu0
    %v1337 = vadd.f32 0.0, %v1336
    %v1338 = vpop.f32.mrb[0].mxu0
    %1339 = vmatprep.mubr.bf16.mxu0 %v824
    %1340 = vmatmul.mubr.bf16.gmra.mrb[0].mxu0 %v823
    %v1341 = vpop.f32.mrb[0].mxu0
    %v1342 = vadd.f32 0.0, %v1341
    %v1343 = vpop.f32.mrb[0].mxu0
    %v1344 = vpop.f32.mrb[0].mxu0
    %v1345 = vadd.f32 0.0, %v1344
    %v1346 = vpop.f32.mrb[0].mxu0
    %1347 = vmatprep.mubr.bf16.mxu0 %v828
    %1348 = vmatmul.mubr.bf16.gmra.mrb[0].mxu0 %v827
    %v1349 = vpop.f32.mrb[0].mxu0
    %v1350 = vadd.f32 0.0, %v1349
    %v1351 = vpop.f32.mrb[0].mxu0
    %v1352 = vpop.f32.mrb[0].mxu0
    %v1353 = vadd.f32 0.0, %v1352
    %v1354 = vpop.f32.mrb[0].mxu0
    %1355 = vmatprep.mubr.bf16.mxu0 %v832
    %1356 = vmatmul.mubr.bf16.gmra.mrb[0].mxu0 %v831
    %v1357 = vpop.f32.mrb[0].mxu0
    %v1358 = vadd.f32 0.0, %v1357
    %v1359 = vpop.f32.mrb[0].mxu0
    %v1360 = vpop.f32.mrb[0].mxu0
    %v1361 = vadd.f32 0.0, %v1360
    %v1362 = vpop.f32.mrb[0].mxu0
    %1363 = vmatprep.mubr.bf16.mxu0 %v836
    %1364 = vmatmul.mubr.bf16.gmra.mrb[0].mxu0 %v835
    %v1365 = vpop.f32.mrb[0].mxu0
    %v1366 = vadd.f32 0.0, %v1365
    %v1367 = vpop.f32.mrb[0].mxu0
    %v1368 = vpop.f32.mrb[0].mxu0
    %v1369 = vadd.f32 0.0, %v1368
    %v1370 = vpop.f32.mrb[0].mxu0
    %1371 = vmatprep.mubr.bf16.mxu0 %v840
    %1372 = vmatmul.mubr.bf16.gmra.mrb[0].mxu0 %v839
    %v1373 = vpop.f32.mrb[0].mxu0
    %v1374 = vadd.f32 0.0, %v1373
    %v1375 = vpop.f32.mrb[0].mxu0
    %v1376 = vpop.f32.mrb[0].mxu0
    %v1377 = vadd.f32 0.0, %v1376
    %v1378 = vpop.f32.mrb[0].mxu0
    %1379 = vmatprep.mubr.bf16.mxu0 %v844
    %1380 = vmatmul.mubr.bf16.gmra.mrb[0].mxu0 %v843
    %v1381 = vpop.f32.mrb[0].mxu0
    %v1382 = vadd.f32 0.0, %v1381
    %v1383 = vpop.f32.mrb[0].mxu0
    %v1384 = vpop.f32.mrb[0].mxu0
    %v1385 = vadd.f32 0.0, %v1384
    %v1386 = vpop.f32.mrb[0].mxu0
    %1387 = vmatprep.mubr.bf16.mxu0 %v848
    %1388 = vmatmul.mubr.bf16.gmra.mrb[0].mxu0 %v847
    %v1389 = vpop.f32.mrb[0].mxu0
    %v1390 = vadd.f32 0.0, %v1389
    %v1391 = vpop.f32.mrb[0].mxu0
    %v1392 = vpop.f32.mrb[0].mxu0
    %v1393 = vadd.f32 0.0, %v1392
    %v1394 = vpop.f32.mrb[0].mxu0
    %1395 = vmatprep.mubr.bf16.mxu0 %v852
    %1396 = vmatmul.mubr.bf16.gmra.mrb[0].mxu0 %v851
    %v1397 = vpop.f32.mrb[0].mxu0
    %v1398 = vadd.f32 0.0, %v1397
    %v1399 = vpop.f32.mrb[0].mxu0
    %v1400 = vpop.f32.mrb[0].mxu0
    %v1401 = vadd.f32 0.0, %v1400
    %v1402 = vpop.f32.mrb[0].mxu0
    %1403 = vmatprep.mubr.bf16.mxu0 %v856
    %1404 = vmatmul.mubr.bf16.gmra.mrb[0].mxu0 %v855
    %v1405 = vpop.f32.mrb[0].mxu0
    %v1406 = vadd.f32 0.0, %v1405
    %v1407 = vpop.f32.mrb[0].mxu0
    %v1408 = vpop.f32.mrb[0].mxu0
    %v1409 = vadd.f32 0.0, %v1408
    %v1410 = vpop.f32.mrb[0].mxu0
    %1411 = vmatprep.mubr.bf16.mxu0 %v860
    %1412 = vmatmul.mubr.bf16.gmra.mrb[0].mxu0 %v859
    %v1413 = vpop.f32.mrb[0].mxu0
    %v1414 = vadd.f32 0.0, %v1413
    %v1415 = vpop.f32.mrb[0].mxu0
    %v1416 = vpop.f32.mrb[0].mxu0
    %v1417 = vadd.f32 0.0, %v1416
    %v1418 = vpop.f32.mrb[0].mxu0
    %1419 = vmatprep.mubr.bf16.mxu0 %v864
    %1420 = vmatmul.mubr.bf16.gmra.mrb[0].mxu0 %v863
    %v1421 = vpop.f32.mrb[0].mxu0
    %v1422 = vadd.f32 0.0, %v1421
    %v1423 = vpop.f32.mrb[0].mxu0
    %v1424 = vpop.f32.mrb[0].mxu0
    %v1425 = vadd.f32 0.0, %v1424
    %v1426 = vpop.f32.mrb[0].mxu0
    %1427 = vmatprep.mubr.bf16.mxu0 %v868
    %1428 = vmatmul.mubr.bf16.gmra.mrb[0].mxu0 %v867
    %v1429 = vpop.f32.mrb[0].mxu0
    %v1430 = vadd.f32 0.0, %v1429
    %v1431 = vpop.f32.mrb[0].mxu0
    %v1432 = vpop.f32.mrb[0].mxu0
    %v1433 = vadd.f32 0.0, %v1432
    %v1434 = vpop.f32.mrb[0].mxu0
    %1435 = vmatprep.mubr.bf16.mxu0 %v872
    %1436 = vmatmul.mubr.bf16.gmra.mrb[0].mxu0 %v871
    %v1437 = vpop.f32.mrb[0].mxu0
    %v1438 = vadd.f32 0.0, %v1437
    %v1439 = vpop.f32.mrb[0].mxu0
    %v1440 = vpop.f32.mrb[0].mxu0
    %v1441 = vadd.f32 0.0, %v1440
    %v1442 = vpop.f32.mrb[0].mxu0
    %1443 = vmatprep.mubr.bf16.mxu0 %v876
    %1444 = vmatmul.mubr.bf16.gmra.mrb[0].mxu0 %v875
    %v1445 = vpop.f32.mrb[0].mxu0
    %v1446 = vadd.f32 0.0, %v1445
    %v1447 = vpop.f32.mrb[0].mxu0
    %v1448 = vpop.f32.mrb[0].mxu0
    %v1449 = vadd.f32 0.0, %v1448
    %v1450 = vpop.f32.mrb[0].mxu0
    %1451 = vmatprep.mubr.bf16.mxu0 %v880
    %1452 = vmatmul.mubr.bf16.gmra.mrb[0].mxu0 %v879
    %v1453 = vpop.f32.mrb[0].mxu0
    %v1454 = vadd.f32 0.0, %v1453
    %v1455 = vpop.f32.mrb[0].mxu0
    %v1456 = vpop.f32.mrb[0].mxu0
    %v1457 = vadd.f32 0.0, %v1456
    %v1458 = vpop.f32.mrb[0].mxu0
    %1459 = vmatprep.mubr.bf16.mxu0 %v884
    %1460 = vmatmul.mubr.bf16.gmra.mrb[0].mxu0 %v883
    %v1461 = vpop.f32.mrb[0].mxu0
    %v1462 = vadd.f32 0.0, %v1461
    %v1463 = vpop.f32.mrb[0].mxu0
    %v1464 = vpop.f32.mrb[0].mxu0
    %v1465 = vadd.f32 0.0, %v1464
    %v1466 = vpop.f32.mrb[0].mxu0
    %1467 = vmatprep.mubr.bf16.mxu0 %v888
    %1468 = vmatmul.mubr.bf16.gmra.mrb[0].mxu0 %v887
    %v1469 = vpop.f32.mrb[0].mxu0
    %v1470 = vadd.f32 0.0, %v1469
    %v1471 = vpop.f32.mrb[0].mxu0
    %v1472 = vpop.f32.mrb[0].mxu0
    %v1473 = vadd.f32 0.0, %v1472
    %v1474 = vpop.f32.mrb[0].mxu0
    %1475 = vmatprep.mubr.bf16.mxu0 %v892
    %1476 = vmatmul.mubr.bf16.gmra.mrb[0].mxu0 %v891
    %v1477 = vpop.f32.mrb[0].mxu0
    %v1478 = vadd.f32 0.0, %v1477
    %v1479 = vpop.f32.mrb[0].mxu0
    %v1480 = vpop.f32.mrb[0].mxu0
    %v1481 = vadd.f32 0.0, %v1480
    %v1482 = vpop.f32.mrb[0].mxu0
    %1483 = vmatprep.mubr.bf16.mxu0 %v896
    %1484 = vmatmul.mubr.bf16.gmra.mrb[0].mxu0 %v895
    %v1485 = vpop.f32.mrb[0].mxu0
    %v1486 = vadd.f32 0.0, %v1485
    %v1487 = vpop.f32.mrb[0].mxu0
    %v1488 = vpop.f32.mrb[0].mxu0
    %v1489 = vadd.f32 0.0, %v1488
    %v1490 = vpop.f32.mrb[0].mxu0
    %1491 = vmatprep.mubr.bf16.mxu0 %v900
    %1492 = vmatmul.mubr.bf16.gmra.mrb[0].mxu0 %v899
    %v1493 = vpop.f32.mrb[0].mxu0
    %v1494 = vadd.f32 0.0, %v1493
    %v1495 = vpop.f32.mrb[0].mxu0
    %v1496 = vpop.f32.mrb[0].mxu0
    %v1497 = vadd.f32 0.0, %v1496
    %v1498 = vpop.f32.mrb[0].mxu0
    %1499 = vmatprep.mubr.bf16.mxu0 %v904
    %1500 = vmatmul.mubr.bf16.gmra.mrb[0].mxu0 %v903
    %v1501 = vpop.f32.mrb[0].mxu0
    %v1502 = vadd.f32 0.0, %v1501
    %v1503 = vpop.f32.mrb[0].mxu0
    %v1504 = vpop.f32.mrb[0].mxu0
    %v1505 = vadd.f32 0.0, %v1504
    %v1506 = vpop.f32.mrb[0].mxu0
    %1507 = vmatprep.mubr.bf16.mxu0 %v908
    %1508 = vmatmul.mubr.bf16.gmra.mrb[0].mxu0 %v907
    %v1509 = vpop.f32.mrb[0].mxu0
    %v1510 = vadd.f32 0.0, %v1509
    %v1511 = vpop.f32.mrb[0].mxu0
    %v1512 = vpop.f32.mrb[0].mxu0
    %v1513 = vadd.f32 0.0, %v1512
    %v1514 = vpop.f32.mrb[0].mxu0
    %1515 = vmatprep.mubr.bf16.mxu0 %v912
    %1516 = vmatmul.mubr.bf16.gmra.mrb[0].mxu0 %v911
    %v1517 = vpop.f32.mrb[0].mxu0
    %v1518 = vadd.f32 0.0, %v1517
    %v1519 = vpop.f32.mrb[0].mxu0
    %v1520 = vpop.f32.mrb[0].mxu0
    %v1521 = vadd.f32 0.0, %v1520
    %v1522 = vpop.f32.mrb[0].mxu0
    %1523 = vdwg.mxu0
    %1524 = vmatprep.subr.bf16.mxu0 0
    %1525 = vmatpush1.bf16.msra.mxu0 %v1187
    %1526 = vmatprep.subr.bf16.mxu0 0
    %1527 = vmatpush1.bf16.msra.mxu0 %v1188
    %1528 = vmatprep.subr.bf16.mxu0 0
    %1529 = vmatpush1.bf16.msra.mxu0 %v1189
    %1530 = vmatprep.subr.bf16.mxu0 0
    %1531 = vmatpush1.bf16.msra.mxu0 %v1190
    %1532 = vmatprep.subr.bf16.mxu0 0
    %1533 = vmatpush1.bf16.msra.mxu0 %v1191
    %1534 = vmatprep.subr.bf16.mxu0 0
    %1535 = vmatpush1.bf16.msra.mxu0 %v1192
    %1536 = vmatprep.subr.bf16.mxu0 0
    %1537 = vmatpush1.bf16.msra.mxu0 %v1193
    %1538 = vmatprep.subr.bf16.mxu0 0
    %1539 = vmatpush1.bf16.msra.mxu0 %v1194
    %1540 = vmatprep.subr.bf16.mxu0 0
    %1541 = vmatpush1.bf16.msra.mxu0 %v1195
    %1542 = vmatprep.subr.bf16.mxu0 0
    %1543 = vmatpush1.bf16.msra.mxu0 %v1196
    %1544 = vmatprep.subr.bf16.mxu0 0
    %1545 = vmatpush1.bf16.msra.mxu0 %v1197
    %1546 = vmatprep.subr.bf16.mxu0 0
    %1547 = vmatpush1.bf16.msra.mxu0 %v1198
    %1548 = vmatprep.subr.bf16.mxu0 0
    %1549 = vmatpush1.bf16.msra.mxu0 %v1199
    %1550 = vmatprep.subr.bf16.mxu0 0
    %1551 = vmatpush1.bf16.msra.mxu0 %v1200
    %1552 = vmatprep.subr.bf16.mxu0 0
    %1553 = vmatpush1.bf16.msra.mxu0 %v1201
    %1554 = vmatprep.subr.bf16.mxu0 0
    %1555 = vmatpush1.bf16.msra.mxu0 %v1202
    %1556 = vmatprep.mubr.bf16.mxu0 %v790
    %1557 = vmatmul.mubr.bf16.gmra.mrb[0].mxu0 %v789
    %v1558 = vpop.f32.mrb[0].mxu0
    %v1559 = vadd.f32 %v1270, %v1558
    %v1560 = vpop.f32.mrb[0].mxu0
    %v1561 = vpop.f32.mrb[0].mxu0
    %v1562 = vadd.f32 %v1273, %v1561
    %v1563 = vpop.f32.mrb[0].mxu0
    %1564 = vmatprep.mubr.bf16.mxu0 %v794
    %1565 = vmatmul.mubr.bf16.gmra.mrb[0].mxu0 %v793
    %v1566 = vpop.f32.mrb[0].mxu0
    %v1567 = vadd.f32 %v1278, %v1566
    %v1568 = vpop.f32.mrb[0].mxu0
    %v1569 = vpop.f32.mrb[0].mxu0
    %v1570 = vadd.f32 %v1281, %v1569
    %v1571 = vpop.f32.mrb[0].mxu0
    %1572 = vmatprep.mubr.bf16.mxu0 %v798
    %1573 = vmatmul.mubr.bf16.gmra.mrb[0].mxu0 %v797
    %v1574 = vpop.f32.mrb[0].mxu0
    %v1575 = vadd.f32 %v1286, %v1574
    %v1576 = vpop.f32.mrb[0].mxu0
    %v1577 = vpop.f32.mrb[0].mxu0
    %v1578 = vadd.f32 %v1289, %v1577
    %v1579 = vpop.f32.mrb[0].mxu0
    %1580 = vmatprep.mubr.bf16.mxu0 %v802
    %1581 = vmatmul.mubr.bf16.gmra.mrb[0].mxu0 %v801
    %v1582 = vpop.f32.mrb[0].mxu0
    %v1583 = vadd.f32 %v1294, %v1582
    %v1584 = vpop.f32.mrb[0].mxu0
    %v1585 = vpop.f32.mrb[0].mxu0
    %v1586 = vadd.f32 %v1297, %v1585
    %v1587 = vpop.f32.mrb[0].mxu0
    %1588 = vmatprep.mubr.bf16.mxu0 %v806
    %1589 = vmatmul.mubr.bf16.gmra.mrb[0].mxu0 %v805
    %v1590 = vpop.f32.mrb[0].mxu0
    %v1591 = vadd.f32 %v1302, %v1590
    %v1592 = vpop.f32.mrb[0].mxu0
    %v1593 = vpop.f32.mrb[0].mxu0
    %v1594 = vadd.f32 %v1305, %v1593
    %v1595 = vpop.f32.mrb[0].mxu0
    %1596 = vmatprep.mubr.bf16.mxu0 %v810
    %1597 = vmatmul.mubr.bf16.gmra.mrb[0].mxu0 %v809
    %v1598 = vpop.f32.mrb[0].mxu0
    %v1599 = vadd.f32 %v1310, %v1598
    %v1600 = vpop.f32.mrb[0].mxu0
    %v1601 = vpop.f32.mrb[0].mxu0
    %v1602 = vadd.f32 %v1313, %v1601
    %v1603 = vpop.f32.mrb[0].mxu0
    %1604 = vmatprep.mubr.bf16.mxu0 %v814
    %1605 = vmatmul.mubr.bf16.gmra.mrb[0].mxu0 %v813
    %v1606 = vpop.f32.mrb[0].mxu0
    %v1607 = vadd.f32 %v1318, %v1606
    %v1608 = vpop.f32.mrb[0].mxu0
    %v1609 = vpop.f32.mrb[0].mxu0
    %v1610 = vadd.f32 %v1321, %v1609
    %v1611 = vpop.f32.mrb[0].mxu0
    %1612 = vmatprep.mubr.bf16.mxu0 %v818
    %1613 = vmatmul.mubr.bf16.gmra.mrb[0].mxu0 %v817
    %v1614 = vpop.f32.mrb[0].mxu0
    %v1615 = vadd.f32 %v1326, %v1614
    %v1616 = vpop.f32.mrb[0].mxu0
    %v1617 = vpop.f32.mrb[0].mxu0
    %v1618 = vadd.f32 %v1329, %v1617
    %v1619 = vpop.f32.mrb[0].mxu0
    %1620 = vmatprep.mubr.bf16.mxu0 %v822
    %1621 = vmatmul.mubr.bf16.gmra.mrb[0].mxu0 %v821
    %v1622 = vpop.f32.mrb[0].mxu0
    %v1623 = vadd.f32 %v1334, %v1622
    %v1624 = vpop.f32.mrb[0].mxu0
    %v1625 = vpop.f32.mrb[0].mxu0
    %v1626 = vadd.f32 %v1337, %v1625
    %v1627 = vpop.f32.mrb[0].mxu0
    %1628 = vmatprep.mubr.bf16.mxu0 %v826
    %1629 = vmatmul.mubr.bf16.gmra.mrb[0].mxu0 %v825
    %v1630 = vpop.f32.mrb[0].mxu0
    %v1631 = vadd.f32 %v1342, %v1630
    %v1632 = vpop.f32.mrb[0].mxu0
    %v1633 = vpop.f32.mrb[0].mxu0
    %v1634 = vadd.f32 %v1345, %v1633
    %v1635 = vpop.f32.mrb[0].mxu0
    %1636 = vmatprep.mubr.bf16.mxu0 %v830
    %1637 = vmatmul.mubr.bf16.gmra.mrb[0].mxu0 %v829
    %v1638 = vpop.f32.mrb[0].mxu0
    %v1639 = vadd.f32 %v1350, %v1638
    %v1640 = vpop.f32.mrb[0].mxu0
    %v1641 = vpop.f32.mrb[0].mxu0
    %v1642 = vadd.f32 %v1353, %v1641
    %v1643 = vpop.f32.mrb[0].mxu0
    %1644 = vmatprep.mubr.bf16.mxu0 %v834
    %1645 = vmatmul.mubr.bf16.gmra.mrb[0].mxu0 %v833
    %v1646 = vpop.f32.mrb[0].mxu0
    %v1647 = vadd.f32 %v1358, %v1646
    %v1648 = vpop.f32.mrb[0].mxu0
    %v1649 = vpop.f32.mrb[0].mxu0
    %v1650 = vadd.f32 %v1361, %v1649
    %v1651 = vpop.f32.mrb[0].mxu0
    %1652 = vmatprep.mubr.bf16.mxu0 %v838
    %1653 = vmatmul.mubr.bf16.gmra.mrb[0].mxu0 %v837
    %v1654 = vpop.f32.mrb[0].mxu0
    %v1655 = vadd.f32 %v1366, %v1654
    %v1656 = vpop.f32.mrb[0].mxu0
    %v1657 = vpop.f32.mrb[0].mxu0
    %v1658 = vadd.f32 %v1369, %v1657
    %v1659 = vpop.f32.mrb[0].mxu0
    %1660 = vmatprep.mubr.bf16.mxu0 %v842
    %1661 = vmatmul.mubr.bf16.gmra.mrb[0].mxu0 %v841
    %v1662 = vpop.f32.mrb[0].mxu0
    %v1663 = vadd.f32 %v1374, %v1662
    %v1664 = vpop.f32.mrb[0].mxu0
    %v1665 = vpop.f32.mrb[0].mxu0
    %v1666 = vadd.f32 %v1377, %v1665
    %v1667 = vpop.f32.mrb[0].mxu0
    %1668 = vmatprep.mubr.bf16.mxu0 %v846
    %1669 = vmatmul.mubr.bf16.gmra.mrb[0].mxu0 %v845
    %v1670 = vpop.f32.mrb[0].mxu0
    %v1671 = vadd.f32 %v1382, %v1670
    %v1672 = vpop.f32.mrb[0].mxu0
    %v1673 = vpop.f32.mrb[0].mxu0
    %v1674 = vadd.f32 %v1385, %v1673
    %v1675 = vpop.f32.mrb[0].mxu0
    %1676 = vmatprep.mubr.bf16.mxu0 %v850
    %1677 = vmatmul.mubr.bf16.gmra.mrb[0].mxu0 %v849
    %v1678 = vpop.f32.mrb[0].mxu0
    %v1679 = vadd.f32 %v1390, %v1678
    %v1680 = vpop.f32.mrb[0].mxu0
    %v1681 = vpop.f32.mrb[0].mxu0
    %v1682 = vadd.f32 %v1393, %v1681
    %v1683 = vpop.f32.mrb[0].mxu0
    %1684 = vmatprep.mubr.bf16.mxu0 %v854
    %1685 = vmatmul.mubr.bf16.gmra.mrb[0].mxu0 %v853
    %v1686 = vpop.f32.mrb[0].mxu0
    %v1687 = vadd.f32 %v1398, %v1686
    %v1688 = vpop.f32.mrb[0].mxu0
    %v1689 = vpop.f32.mrb[0].mxu0
    %v1690 = vadd.f32 %v1401, %v1689
    %v1691 = vpop.f32.mrb[0].mxu0
    %1692 = vmatprep.mubr.bf16.mxu0 %v858
    %1693 = vmatmul.mubr.bf16.gmra.mrb[0].mxu0 %v857
    %v1694 = vpop.f32.mrb[0].mxu0
    %v1695 = vadd.f32 %v1406, %v1694
    %v1696 = vpop.f32.mrb[0].mxu0
    %v1697 = vpop.f32.mrb[0].mxu0
    %v1698 = vadd.f32 %v1409, %v1697
    %v1699 = vpop.f32.mrb[0].mxu0
    %1700 = vmatprep.mubr.bf16.mxu0 %v862
    %1701 = vmatmul.mubr.bf16.gmra.mrb[0].mxu0 %v861
    %v1702 = vpop.f32.mrb[0].mxu0
    %v1703 = vadd.f32 %v1414, %v1702
    %v1704 = vpop.f32.mrb[0].mxu0
    %v1705 = vpop.f32.mrb[0].mxu0
    %v1706 = vadd.f32 %v1417, %v1705
    %v1707 = vpop.f32.mrb[0].mxu0
    %1708 = vmatprep.mubr.bf16.mxu0 %v866
    %1709 = vmatmul.mubr.bf16.gmra.mrb[0].mxu0 %v865
    %v1710 = vpop.f32.mrb[0].mxu0
    %v1711 = vadd.f32 %v1422, %v1710
    %v1712 = vpop.f32.mrb[0].mxu0
    %v1713 = vpop.f32.mrb[0].mxu0
    %v1714 = vadd.f32 %v1425, %v1713
    %v1715 = vpop.f32.mrb[0].mxu0
    %1716 = vmatprep.mubr.bf16.mxu0 %v870
    %1717 = vmatmul.mubr.bf16.gmra.mrb[0].mxu0 %v869
    %v1718 = vpop.f32.mrb[0].mxu0
    %v1719 = vadd.f32 %v1430, %v1718
    %v1720 = vpop.f32.mrb[0].mxu0
    %v1721 = vpop.f32.mrb[0].mxu0
    %v1722 = vadd.f32 %v1433, %v1721
    %v1723 = vpop.f32.mrb[0].mxu0
    %1724 = vmatprep.mubr.bf16.mxu0 %v874
    %1725 = vmatmul.mubr.bf16.gmra.mrb[0].mxu0 %v873
    %v1726 = vpop.f32.mrb[0].mxu0
    %v1727 = vadd.f32 %v1438, %v1726
    %v1728 = vpop.f32.mrb[0].mxu0
    %v1729 = vpop.f32.mrb[0].mxu0
    %v1730 = vadd.f32 %v1441, %v1729
    %v1731 = vpop.f32.mrb[0].mxu0
    %1732 = vmatprep.mubr.bf16.mxu0 %v878
    %1733 = vmatmul.mubr.bf16.gmra.mrb[0].mxu0 %v877
    %v1734 = vpop.f32.mrb[0].mxu0
    %v1735 = vadd.f32 %v1446, %v1734
    %v1736 = vpop.f32.mrb[0].mxu0
    %v1737 = vpop.f32.mrb[0].mxu0
    %v1738 = vadd.f32 %v1449, %v1737
    %v1739 = vpop.f32.mrb[0].mxu0
    %1740 = vmatprep.mubr.bf16.mxu0 %v882
    %1741 = vmatmul.mubr.bf16.gmra.mrb[0].mxu0 %v881
    %v1742 = vpop.f32.mrb[0].mxu0
    %v1743 = vadd.f32 %v1454, %v1742
    %v1744 = vpop.f32.mrb[0].mxu0
    %v1745 = vpop.f32.mrb[0].mxu0
    %v1746 = vadd.f32 %v1457, %v1745
    %v1747 = vpop.f32.mrb[0].mxu0
    %1748 = vmatprep.mubr.bf16.mxu0 %v886
    %1749 = vmatmul.mubr.bf16.gmra.mrb[0].mxu0 %v885
    %v1750 = vpop.f32.mrb[0].mxu0
    %v1751 = vadd.f32 %v1462, %v1750
    %v1752 = vpop.f32.mrb[0].mxu0
    %v1753 = vpop.f32.mrb[0].mxu0
    %v1754 = vadd.f32 %v1465, %v1753
    %v1755 = vpop.f32.mrb[0].mxu0
    %1756 = vmatprep.mubr.bf16.mxu0 %v890
    %1757 = vmatmul.mubr.bf16.gmra.mrb[0].mxu0 %v889
    %v1758 = vpop.f32.mrb[0].mxu0
    %v1759 = vadd.f32 %v1470, %v1758
    %v1760 = vpop.f32.mrb[0].mxu0
    %v1761 = vpop.f32.mrb[0].mxu0
    %v1762 = vadd.f32 %v1473, %v1761
    %v1763 = vpop.f32.mrb[0].mxu0
    %1764 = vmatprep.mubr.bf16.mxu0 %v894
    %1765 = vmatmul.mubr.bf16.gmra.mrb[0].mxu0 %v893
    %v1766 = vpop.f32.mrb[0].mxu0
    %v1767 = vadd.f32 %v1478, %v1766
    %v1768 = vpop.f32.mrb[0].mxu0
    %v1769 = vpop.f32.mrb[0].mxu0
    %v1770 = vadd.f32 %v1481, %v1769
    %v1771 = vpop.f32.mrb[0].mxu0
    %1772 = vmatprep.mubr.bf16.mxu0 %v898
    %1773 = vmatmul.mubr.bf16.gmra.mrb[0].mxu0 %v897
    %v1774 = vpop.f32.mrb[0].mxu0
    %v1775 = vadd.f32 %v1486, %v1774
    %v1776 = vpop.f32.mrb[0].mxu0
    %v1777 = vpop.f32.mrb[0].mxu0
    %v1778 = vadd.f32 %v1489, %v1777
    %v1779 = vpop.f32.mrb[0].mxu0
    %1780 = vmatprep.mubr.bf16.mxu0 %v902
    %1781 = vmatmul.mubr.bf16.gmra.mrb[0].mxu0 %v901
    %v1782 = vpop.f32.mrb[0].mxu0
    %v1783 = vadd.f32 %v1494, %v1782
    %v1784 = vpop.f32.mrb[0].mxu0
    %v1785 = vpop.f32.mrb[0].mxu0
    %v1786 = vadd.f32 %v1497, %v1785
    %v1787 = vpop.f32.mrb[0].mxu0
    %1788 = vmatprep.mubr.bf16.mxu0 %v906
    %1789 = vmatmul.mubr.bf16.gmra.mrb[0].mxu0 %v905
    %v1790 = vpop.f32.mrb[0].mxu0
    %v1791 = vadd.f32 %v1502, %v1790
    %v1792 = vpop.f32.mrb[0].mxu0
    %v1793 = vpop.f32.mrb[0].mxu0
    %v1794 = vadd.f32 %v1505, %v1793
    %v1795 = vpop.f32.mrb[0].mxu0
    %1796 = vmatprep.mubr.bf16.mxu0 %v910
    %1797 = vmatmul.mubr.bf16.gmra.mrb[0].mxu0 %v909
    %v1798 = vpop.f32.mrb[0].mxu0
    %v1799 = vadd.f32 %v1510, %v1798
    %v1800 = vpop.f32.mrb[0].mxu0
    %v1801 = vpop.f32.mrb[0].mxu0
    %v1802 = vadd.f32 %v1513, %v1801
    %v1803 = vpop.f32.mrb[0].mxu0
    %1804 = vmatprep.mubr.bf16.mxu0 %v914
    %1805 = vmatmul.mubr.bf16.gmra.mrb[0].mxu0 %v913
    %v1806 = vpop.f32.mrb[0].mxu0
    %v1807 = vadd.f32 %v1518, %v1806
    %v1808 = vpop.f32.mrb[0].mxu0
    %v1809 = vpop.f32.mrb[0].mxu0
    %v1810 = vadd.f32 %v1521, %v1809
    %v1811 = vpop.f32.mrb[0].mxu0
    %1812 = vdwg.mxu0
    %v1813 = vadd.f32 %v147, %v1559
    %v1814 = vadd.f32 %v148, %v1562
    %v1815 = vadd.f32 %v149, %v1567
    %v1816 = vadd.f32 %v150, %v1570
    %v1817 = vadd.f32 %v151, %v1575
    %v1818 = vadd.f32 %v152, %v1578
    %v1819 = vadd.f32 %v153, %v1583
    %v1820 = vadd.f32 %v154, %v1586
    %v1821 = vadd.f32 %v155, %v1591
    %v1822 = vadd.f32 %v156, %v1594
    %v1823 = vadd.f32 %v157, %v1599
    %v1824 = vadd.f32 %v158, %v1602
    %v1825 = vadd.f32 %v159, %v1607
    %v1826 = vadd.f32 %v160, %v1610
    %v1827 = vadd.f32 %v161, %v1615
    %v1828 = vadd.f32 %v162, %v1618
    %v1829 = vadd.f32 %v163, %v1623
    %v1830 = vadd.f32 %v164, %v1626
    %v1831 = vadd.f32 %v165, %v1631
    %v1832 = vadd.f32 %v166, %v1634
    %v1833 = vadd.f32 %v167, %v1639
    %v1834 = vadd.f32 %v168, %v1642
    %v1835 = vadd.f32 %v169, %v1647
    %v1836 = vadd.f32 %v170, %v1650
    %v1837 = vadd.f32 %v171, %v1655
    %v1838 = vadd.f32 %v172, %v1658
    %v1839 = vadd.f32 %v173, %v1663
    %v1840 = vadd.f32 %v174, %v1666
    %v1841 = vadd.f32 %v175, %v1671
    %v1842 = vadd.f32 %v176, %v1674
    %v1843 = vadd.f32 %v177, %v1679
    %v1844 = vadd.f32 %v178, %v1682
    %v1845 = vadd.f32 %v179, %v1687
    %v1846 = vadd.f32 %v180, %v1690
    %v1847 = vadd.f32 %v181, %v1695
    %v1848 = vadd.f32 %v182, %v1698
    %v1849 = vadd.f32 %v183, %v1703
    %v1850 = vadd.f32 %v184, %v1706
    %v1851 = vadd.f32 %v185, %v1711
    %v1852 = vadd.f32 %v186, %v1714
    %v1853 = vadd.f32 %v187, %v1719
    %v1854 = vadd.f32 %v188, %v1722
    %v1855 = vadd.f32 %v189, %v1727
    %v1856 = vadd.f32 %v190, %v1730
    %v1857 = vadd.f32 %v191, %v1735
    %v1858 = vadd.f32 %v192, %v1738
    %v1859 = vadd.f32 %v193, %v1743
    %v1860 = vadd.f32 %v194, %v1746
    %v1861 = vadd.f32 %v195, %v1751
    %v1862 = vadd.f32 %v196, %v1754
    %v1863 = vadd.f32 %v197, %v1759
    %v1864 = vadd.f32 %v198, %v1762
    %v1865 = vadd.f32 %v199, %v1767
    %v1866 = vadd.f32 %v200, %v1770
    %v1867 = vadd.f32 %v201, %v1775
    %v1868 = vadd.f32 %v202, %v1778
    %v1869 = vadd.f32 %v203, %v1783
    %v1870 = vadd.f32 %v204, %v1786
    %v1871 = vadd.f32 %v205, %v1791
    %v1872 = vadd.f32 %v206, %v1794
    %v1873 = vadd.f32 %v207, %v1799
    %v1874 = vadd.f32 %v208, %v1802
    %v1875 = vadd.f32 %v209, %v1807
    %v1876 = vadd.f32 %v210, %v1810
    %1877 = vst [vmem:[#allocation2] sm:$0xff] %v1813
    %1878 = vst [vmem:[#allocation2 + $0x8] sm:$0xff] %v1814
    %1879 = vst [vmem:[#allocation2 + $0x10] sm:$0xff] %v1815
    %1880 = vst [vmem:[#allocation2 + $0x18] sm:$0xff] %v1816
    %1881 = vst [vmem:[#allocation2 + $0x20] sm:$0xff] %v1817
    %1882 = vst [vmem:[#allocation2 + $0x28] sm:$0xff] %v1818
    %1883 = vst [vmem:[#allocation2 + $0x30] sm:$0xff] %v1819
    %1884 = vst [vmem:[#allocation2 + $0x38] sm:$0xff] %v1820
    %1885 = vst [vmem:[#allocation2 + $0x40] sm:$0xff] %v1821
    %1886 = vst [vmem:[#allocation2 + $0x48] sm:$0xff] %v1822
    %1887 = vst [vmem:[#allocation2 + $0x50] sm:$0xff] %v1823
    %1888 = vst [vmem:[#allocation2 + $0x58] sm:$0xff] %v1824
    %1889 = vst [vmem:[#allocation2 + $0x60] sm:$0xff] %v1825
    %1890 = vst [vmem:[#allocation2 + $0x68] sm:$0xff] %v1826
    %1891 = vst [vmem:[#allocation2 + $0x70] sm:$0xff] %v1827
    %1892 = vst [vmem:[#allocation2 + $0x78] sm:$0xff] %v1828
    %1893 = vst [vmem:[#allocation2 + $0x80] sm:$0xff] %v1829
    %1894 = vst [vmem:[#allocation2 + $0x88] sm:$0xff] %v1830
    %1895 = vst [vmem:[#allocation2 + $0x90] sm:$0xff] %v1831
    %1896 = vst [vmem:[#allocation2 + $0x98] sm:$0xff] %v1832
    %1897 = vst [vmem:[#allocation2 + $0xa0] sm:$0xff] %v1833
    %1898 = vst [vmem:[#allocation2 + $0xa8] sm:$0xff] %v1834
    %1899 = vst [vmem:[#allocation2 + $0xb0] sm:$0xff] %v1835
    %1900 = vst [vmem:[#allocation2 + $0xb8] sm:$0xff] %v1836
    %1901 = vst [vmem:[#allocation2 + $0xc0] sm:$0xff] %v1837
    %1902 = vst [vmem:[#allocation2 + $0xc8] sm:$0xff] %v1838
    %1903 = vst [vmem:[#allocation2 + $0xd0] sm:$0xff] %v1839
    %1904 = vst [vmem:[#allocation2 + $0xd8] sm:$0xff] %v1840
    %1905 = vst [vmem:[#allocation2 + $0xe0] sm:$0xff] %v1841
    %1906 = vst [vmem:[#allocation2 + $0xe8] sm:$0xff] %v1842
    %1907 = vst [vmem:[#allocation2 + $0xf0] sm:$0xff] %v1843
    %1908 = vst [vmem:[#allocation2 + $0xf8] sm:$0xff] %v1844
    %1909 = vst [vmem:[#allocation2 + $0x100] sm:$0xff] %v1845
    %1910 = vst [vmem:[#allocation2 + $0x108] sm:$0xff] %v1846
    %1911 = vst [vmem:[#allocation2 + $0x110] sm:$0xff] %v1847
    %1912 = vst [vmem:[#allocation2 + $0x118] sm:$0xff] %v1848
    %1913 = vst [vmem:[#allocation2 + $0x120] sm:$0xff] %v1849
    %1914 = vst [vmem:[#allocation2 + $0x128] sm:$0xff] %v1850
    %1915 = vst [vmem:[#allocation2 + $0x130] sm:$0xff] %v1851
    %1916 = vst [vmem:[#allocation2 + $0x138] sm:$0xff] %v1852
    %1917 = vst [vmem:[#allocation2 + $0x140] sm:$0xff] %v1853
    %1918 = vst [vmem:[#allocation2 + $0x148] sm:$0xff] %v1854
    %1919 = vst [vmem:[#allocation2 + $0x150] sm:$0xff] %v1855
    %1920 = vst [vmem:[#allocation2 + $0x158] sm:$0xff] %v1856
    %1921 = vst [vmem:[#allocation2 + $0x160] sm:$0xff] %v1857
    %1922 = vst [vmem:[#allocation2 + $0x168] sm:$0xff] %v1858
    %1923 = vst [vmem:[#allocation2 + $0x170] sm:$0xff] %v1859
    %1924 = vst [vmem:[#allocation2 + $0x178] sm:$0xff] %v1860
    %1925 = vst [vmem:[#allocation2 + $0x180] sm:$0xff] %v1861
    %1926 = vst [vmem:[#allocation2 + $0x188] sm:$0xff] %v1862
    %1927 = vst [vmem:[#allocation2 + $0x190] sm:$0xff] %v1863
    %1928 = vst [vmem:[#allocation2 + $0x198] sm:$0xff] %v1864
    %1929 = vst [vmem:[#allocation2 + $0x1a0] sm:$0xff] %v1865
    %1930 = vst [vmem:[#allocation2 + $0x1a8] sm:$0xff] %v1866
    %1931 = vst [vmem:[#allocation2 + $0x1b0] sm:$0xff] %v1867
    %1932 = vst [vmem:[#allocation2 + $0x1b8] sm:$0xff] %v1868
    %1933 = vst [vmem:[#allocation2 + $0x1c0] sm:$0xff] %v1869
    %1934 = vst [vmem:[#allocation2 + $0x1c8] sm:$0xff] %v1870
    %1935 = vst [vmem:[#allocation2 + $0x1d0] sm:$0xff] %v1871
    %1936 = vst [vmem:[#allocation2 + $0x1d8] sm:$0xff] %v1872
    %1937 = vst [vmem:[#allocation2 + $0x1e0] sm:$0xff] %v1873
    %1938 = vst [vmem:[#allocation2 + $0x1e8] sm:$0xff] %v1874
    %1939 = vst [vmem:[#allocation2 + $0x1f0] sm:$0xff] %v1875
    %1940 = vst [vmem:[#allocation2 + $0x1f8] sm:$0xff] %v1876
  $region21: #{graphsage_forward.7} parent=0 // pred_fallthru
    _
  // Predicated region
  $region22: #{graphsage_forward.7} parent=0 // pred_check
    %p1941 = pneg %p73
  $region23: #{graphsage_forward.7} parent=0 // pred_check_branch
    %1943 = sbr.rel (%p1941) target = $region25
  $region24: #{graphsage_forward.7} parent=0 // pred_region
    %v1944 = vld [vmem:[#allocation2] sm:$0xff]
    %v1945 = vld [vmem:[#allocation2 + $0x8] sm:$0xff]
    %v1946 = vld [vmem:[#allocation2 + $0x10] sm:$0xff]
    %v1947 = vld [vmem:[#allocation2 + $0x18] sm:$0xff]
    %v1948 = vld [vmem:[#allocation2 + $0x20] sm:$0xff]
    %v1949 = vld [vmem:[#allocation2 + $0x28] sm:$0xff]
    %v1950 = vld [vmem:[#allocation2 + $0x30] sm:$0xff]
    %v1951 = vld [vmem:[#allocation2 + $0x38] sm:$0xff]
    %v1952 = vld [vmem:[#allocation2 + $0x40] sm:$0xff]
    %v1953 = vld [vmem:[#allocation2 + $0x48] sm:$0xff]
    %v1954 = vld [vmem:[#allocation2 + $0x50] sm:$0xff]
    %v1955 = vld [vmem:[#allocation2 + $0x58] sm:$0xff]
    %v1956 = vld [vmem:[#allocation2 + $0x60] sm:$0xff]
    %v1957 = vld [vmem:[#allocation2 + $0x68] sm:$0xff]
    %v1958 = vld [vmem:[#allocation2 + $0x70] sm:$0xff]
    %v1959 = vld [vmem:[#allocation2 + $0x78] sm:$0xff]
    %v1960 = vld [vmem:[#allocation2 + $0x80] sm:$0xff]
    %v1961 = vld [vmem:[#allocation2 + $0x88] sm:$0xff]
    %v1962 = vld [vmem:[#allocation2 + $0x90] sm:$0xff]
    %v1963 = vld [vmem:[#allocation2 + $0x98] sm:$0xff]
    %v1964 = vld [vmem:[#allocation2 + $0xa0] sm:$0xff]
    %v1965 = vld [vmem:[#allocation2 + $0xa8] sm:$0xff]
    %v1966 = vld [vmem:[#allocation2 + $0xb0] sm:$0xff]
    %v1967 = vld [vmem:[#allocation2 + $0xb8] sm:$0xff]
    %v1968 = vld [vmem:[#allocation2 + $0xc0] sm:$0xff]
    %v1969 = vld [vmem:[#allocation2 + $0xc8] sm:$0xff]
    %v1970 = vld [vmem:[#allocation2 + $0xd0] sm:$0xff]
    %v1971 = vld [vmem:[#allocation2 + $0xd8] sm:$0xff]
    %v1972 = vld [vmem:[#allocation2 + $0xe0] sm:$0xff]
    %v1973 = vld [vmem:[#allocation2 + $0xe8] sm:$0xff]
    %v1974 = vld [vmem:[#allocation2 + $0xf0] sm:$0xff]
    %v1975 = vld [vmem:[#allocation2 + $0xf8] sm:$0xff]
    %v1976 = vld [vmem:[#allocation2 + $0x100] sm:$0xff]
    %v1977 = vld [vmem:[#allocation2 + $0x108] sm:$0xff]
    %v1978 = vld [vmem:[#allocation2 + $0x110] sm:$0xff]
    %v1979 = vld [vmem:[#allocation2 + $0x118] sm:$0xff]
    %v1980 = vld [vmem:[#allocation2 + $0x120] sm:$0xff]
    %v1981 = vld [vmem:[#allocation2 + $0x128] sm:$0xff]
    %v1982 = vld [vmem:[#allocation2 + $0x130] sm:$0xff]
    %v1983 = vld [vmem:[#allocation2 + $0x138] sm:$0xff]
    %v1984 = vld [vmem:[#allocation2 + $0x140] sm:$0xff]
    %v1985 = vld [vmem:[#allocation2 + $0x148] sm:$0xff]
    %v1986 = vld [vmem:[#allocation2 + $0x150] sm:$0xff]
    %v1987 = vld [vmem:[#allocation2 + $0x158] sm:$0xff]
    %v1988 = vld [vmem:[#allocation2 + $0x160] sm:$0xff]
    %v1989 = vld [vmem:[#allocation2 + $0x168] sm:$0xff]
    %v1990 = vld [vmem:[#allocation2 + $0x170] sm:$0xff]
    %v1991 = vld [vmem:[#allocation2 + $0x178] sm:$0xff]
    %v1992 = vld [vmem:[#allocation2 + $0x180] sm:$0xff]
    %v1993 = vld [vmem:[#allocation2 + $0x188] sm:$0xff]
    %v1994 = vld [vmem:[#allocation2 + $0x190] sm:$0xff]
    %v1995 = vld [vmem:[#allocation2 + $0x198] sm:$0xff]
    %v1996 = vld [vmem:[#allocation2 + $0x1a0] sm:$0xff]
    %v1997 = vld [vmem:[#allocation2 + $0x1a8] sm:$0xff]
    %v1998 = vld [vmem:[#allocation2 + $0x1b0] sm:$0xff]
    %v1999 = vld [vmem:[#allocation2 + $0x1b8] sm:$0xff]
    %v2000 = vld [vmem:[#allocation2 + $0x1c0] sm:$0xff]
    %v2001 = vld [vmem:[#allocation2 + $0x1c8] sm:$0xff]
    %v2002 = vld [vmem:[#allocation2 + $0x1d0] sm:$0xff]
    %v2003 = vld [vmem:[#allocation2 + $0x1d8] sm:$0xff]
    %v2004 = vld [vmem:[#allocation2 + $0x1e0] sm:$0xff]
    %v2005 = vld [vmem:[#allocation2 + $0x1e8] sm:$0xff]
    %v2006 = vld [vmem:[#allocation2 + $0x1f0] sm:$0xff]
    %v2007 = vld [vmem:[#allocation2 + $0x1f8] sm:$0xff]
    %v2008 = vld [vmem:[%s4] sm:$0xff]
    %v2009 = vld [vmem:[%s4 + $0x8] sm:$0xff]
    %v2010 = vld [vmem:[%s4 + $0x10] sm:$0xff]
    %v2011 = vld [vmem:[%s4 + $0x18] sm:$0xff]
    %v2012 = vld [vmem:[%s4 + $0x20] sm:$0xff]
    %v2013 = vld [vmem:[%s4 + $0x28] sm:$0xff]
    %v2014 = vld [vmem:[%s4 + $0x30] sm:$0xff]
    %v2015 = vld [vmem:[%s4 + $0x38] sm:$0xff]
    %v2016 = vld [vmem:[%s4 + $0x40] sm:$0xff]
    %v2017 = vld [vmem:[%s4 + $0x48] sm:$0xff]
    %v2018 = vld [vmem:[%s4 + $0x50] sm:$0xff]
    %v2019 = vld [vmem:[%s4 + $0x58] sm:$0xff]
    %v2020 = vld [vmem:[%s4 + $0x60] sm:$0xff]
    %v2021 = vld [vmem:[%s4 + $0x68] sm:$0xff]
    %v2022 = vld [vmem:[%s4 + $0x70] sm:$0xff]
    %v2023 = vld [vmem:[%s4 + $0x78] sm:$0xff]
    %v2024 = vld [vmem:[%s4 + $0x80] sm:$0xff]
    %v2025 = vld [vmem:[%s4 + $0x88] sm:$0xff]
    %v2026 = vld [vmem:[%s4 + $0x90] sm:$0xff]
    %v2027 = vld [vmem:[%s4 + $0x98] sm:$0xff]
    %v2028 = vld [vmem:[%s4 + $0xa0] sm:$0xff]
    %v2029 = vld [vmem:[%s4 + $0xa8] sm:$0xff]
    %v2030 = vld [vmem:[%s4 + $0xb0] sm:$0xff]
    %v2031 = vld [vmem:[%s4 + $0xb8] sm:$0xff]
    %v2032 = vld [vmem:[%s4 + $0xc0] sm:$0xff]
    %v2033 = vld [vmem:[%s4 + $0xc8] sm:$0xff]
    %v2034 = vld [vmem:[%s4 + $0xd0] sm:$0xff]
    %v2035 = vld [vmem:[%s4 + $0xd8] sm:$0xff]
    %v2036 = vld [vmem:[%s4 + $0xe0] sm:$0xff]
    %v2037 = vld [vmem:[%s4 + $0xe8] sm:$0xff]
    %v2038 = vld [vmem:[%s4 + $0xf0] sm:$0xff]
    %v2039 = vld [vmem:[%s4 + $0xf8] sm:$0xff]
    %v2040 = vld [vmem:[%s4 + $0x100] sm:$0xff]
    %v2041 = vld [vmem:[%s4 + $0x108] sm:$0xff]
    %v2042 = vld [vmem:[%s4 + $0x110] sm:$0xff]
    %v2043 = vld [vmem:[%s4 + $0x118] sm:$0xff]
    %v2044 = vld [vmem:[%s4 + $0x120] sm:$0xff]
    %v2045 = vld [vmem:[%s4 + $0x128] sm:$0xff]
    %v2046 = vld [vmem:[%s4 + $0x130] sm:$0xff]
    %v2047 = vld [vmem:[%s4 + $0x138] sm:$0xff]
    %v2048 = vld [vmem:[%s4 + $0x140] sm:$0xff]
    %v2049 = vld [vmem:[%s4 + $0x148] sm:$0xff]
    %v2050 = vld [vmem:[%s4 + $0x150] sm:$0xff]
    %v2051 = vld [vmem:[%s4 + $0x158] sm:$0xff]
    %v2052 = vld [vmem:[%s4 + $0x160] sm:$0xff]
    %v2053 = vld [vmem:[%s4 + $0x168] sm:$0xff]
    %v2054 = vld [vmem:[%s4 + $0x170] sm:$0xff]
    %v2055 = vld [vmem:[%s4 + $0x178] sm:$0xff]
    %v2056 = vld [vmem:[%s4 + $0x180] sm:$0xff]
    %v2057 = vld [vmem:[%s4 + $0x188] sm:$0xff]
    %v2058 = vld [vmem:[%s4 + $0x190] sm:$0xff]
    %v2059 = vld [vmem:[%s4 + $0x198] sm:$0xff]
    %v2060 = vld [vmem:[%s4 + $0x1a0] sm:$0xff]
    %v2061 = vld [vmem:[%s4 + $0x1a8] sm:$0xff]
    %v2062 = vld [vmem:[%s4 + $0x1b0] sm:$0xff]
    %v2063 = vld [vmem:[%s4 + $0x1b8] sm:$0xff]
    %v2064 = vld [vmem:[%s4 + $0x1c0] sm:$0xff]
    %v2065 = vld [vmem:[%s4 + $0x1c8] sm:$0xff]
    %v2066 = vld [vmem:[%s4 + $0x1d0] sm:$0xff]
    %v2067 = vld [vmem:[%s4 + $0x1d8] sm:$0xff]
    %v2068 = vld [vmem:[%s4 + $0x1e0] sm:$0xff]
    %v2069 = vld [vmem:[%s4 + $0x1e8] sm:$0xff]
    %v2070 = vld [vmem:[%s4 + $0x1f0] sm:$0xff]
    %v2071 = vld [vmem:[%s4 + $0x1f8] sm:$0xff]
    %v2072 = vadd.f32 %v1944, %v2008
    %v2073 = vadd.f32 %v1945, %v2009
    %v2074 = vadd.f32 %v1946, %v2010
    %v2075 = vadd.f32 %v1947, %v2011
    %v2076 = vadd.f32 %v1948, %v2012
    %v2077 = vadd.f32 %v1949, %v2013
    %v2078 = vadd.f32 %v1950, %v2014
    %v2079 = vadd.f32 %v1951, %v2015
    %v2080 = vadd.f32 %v1952, %v2016
    %v2081 = vadd.f32 %v1953, %v2017
    %v2082 = vadd.f32 %v1954, %v2018
    %v2083 = vadd.f32 %v1955, %v2019
    %v2084 = vadd.f32 %v1956, %v2020
    %v2085 = vadd.f32 %v1957, %v2021
    %v2086 = vadd.f32 %v1958, %v2022
    %v2087 = vadd.f32 %v1959, %v2023
    %v2088 = vadd.f32 %v1960, %v2024
    %v2089 = vadd.f32 %v1961, %v2025
    %v2090 = vadd.f32 %v1962, %v2026
    %v2091 = vadd.f32 %v1963, %v2027
    %v2092 = vadd.f32 %v1964, %v2028
    %v2093 = vadd.f32 %v1965, %v2029
    %v2094 = vadd.f32 %v1966, %v2030
    %v2095 = vadd.f32 %v1967, %v2031
    %v2096 = vadd.f32 %v1968, %v2032
    %v2097 = vadd.f32 %v1969, %v2033
    %v2098 = vadd.f32 %v1970, %v2034
    %v2099 = vadd.f32 %v1971, %v2035
    %v2100 = vadd.f32 %v1972, %v2036
    %v2101 = vadd.f32 %v1973, %v2037
    %v2102 = vadd.f32 %v1974, %v2038
    %v2103 = vadd.f32 %v1975, %v2039
    %v2104 = vadd.f32 %v1976, %v2040
    %v2105 = vadd.f32 %v1977, %v2041
    %v2106 = vadd.f32 %v1978, %v2042
    %v2107 = vadd.f32 %v1979, %v2043
    %v2108 = vadd.f32 %v1980, %v2044
    %v2109 = vadd.f32 %v1981, %v2045
    %v2110 = vadd.f32 %v1982, %v2046
    %v2111 = vadd.f32 %v1983, %v2047
    %v2112 = vadd.f32 %v1984, %v2048
    %v2113 = vadd.f32 %v1985, %v2049
    %v2114 = vadd.f32 %v1986, %v2050
    %v2115 = vadd.f32 %v1987, %v2051
    %v2116 = vadd.f32 %v1988, %v2052
    %v2117 = vadd.f32 %v1989, %v2053
    %v2118 = vadd.f32 %v1990, %v2054
    %v2119 = vadd.f32 %v1991, %v2055
    %v2120 = vadd.f32 %v1992, %v2056
    %v2121 = vadd.f32 %v1993, %v2057
    %v2122 = vadd.f32 %v1994, %v2058
    %v2123 = vadd.f32 %v1995, %v2059
    %v2124 = vadd.f32 %v1996, %v2060
    %v2125 = vadd.f32 %v1997, %v2061
    %v2126 = vadd.f32 %v1998, %v2062
    %v2127 = vadd.f32 %v1999, %v2063
    %v2128 = vadd.f32 %v2000, %v2064
    %v2129 = vadd.f32 %v2001, %v2065
    %v2130 = vadd.f32 %v2002, %v2066
    %v2131 = vadd.f32 %v2003, %v2067
    %v2132 = vadd.f32 %v2004, %v2068
    %v2133 = vadd.f32 %v2005, %v2069
    %v2134 = vadd.f32 %v2006, %v2070
    %v2135 = vadd.f32 %v2007, %v2071
    %2136 = vst [vmem:[%s5] sm:$0xff] %v2072
    %2137 = vst [vmem:[%s5 + $0x8] sm:$0xff] %v2073
    %2138 = vst [vmem:[%s5 + $0x10] sm:$0xff] %v2074
    %2139 = vst [vmem:[%s5 + $0x18] sm:$0xff] %v2075
    %2140 = vst [vmem:[%s5 + $0x20] sm:$0xff] %v2076
    %2141 = vst [vmem:[%s5 + $0x28] sm:$0xff] %v2077
    %2142 = vst [vmem:[%s5 + $0x30] sm:$0xff] %v2078
    %2143 = vst [vmem:[%s5 + $0x38] sm:$0xff] %v2079
    %2144 = vst [vmem:[%s5 + $0x40] sm:$0xff] %v2080
    %2145 = vst [vmem:[%s5 + $0x48] sm:$0xff] %v2081
    %2146 = vst [vmem:[%s5 + $0x50] sm:$0xff] %v2082
    %2147 = vst [vmem:[%s5 + $0x58] sm:$0xff] %v2083
    %2148 = vst [vmem:[%s5 + $0x60] sm:$0xff] %v2084
    %2149 = vst [vmem:[%s5 + $0x68] sm:$0xff] %v2085
    %2150 = vst [vmem:[%s5 + $0x70] sm:$0xff] %v2086
    %2151 = vst [vmem:[%s5 + $0x78] sm:$0xff] %v2087
    %2152 = vst [vmem:[%s5 + $0x80] sm:$0xff] %v2088
    %2153 = vst [vmem:[%s5 + $0x88] sm:$0xff] %v2089
    %2154 = vst [vmem:[%s5 + $0x90] sm:$0xff] %v2090
    %2155 = vst [vmem:[%s5 + $0x98] sm:$0xff] %v2091
    %2156 = vst [vmem:[%s5 + $0xa0] sm:$0xff] %v2092
    %2157 = vst [vmem:[%s5 + $0xa8] sm:$0xff] %v2093
    %2158 = vst [vmem:[%s5 + $0xb0] sm:$0xff] %v2094
    %2159 = vst [vmem:[%s5 + $0xb8] sm:$0xff] %v2095
    %2160 = vst [vmem:[%s5 + $0xc0] sm:$0xff] %v2096
    %2161 = vst [vmem:[%s5 + $0xc8] sm:$0xff] %v2097
    %2162 = vst [vmem:[%s5 + $0xd0] sm:$0xff] %v2098
    %2163 = vst [vmem:[%s5 + $0xd8] sm:$0xff] %v2099
    %2164 = vst [vmem:[%s5 + $0xe0] sm:$0xff] %v2100
    %2165 = vst [vmem:[%s5 + $0xe8] sm:$0xff] %v2101
    %2166 = vst [vmem:[%s5 + $0xf0] sm:$0xff] %v2102
    %2167 = vst [vmem:[%s5 + $0xf8] sm:$0xff] %v2103
    %2168 = vst [vmem:[%s5 + $0x100] sm:$0xff] %v2104
    %2169 = vst [vmem:[%s5 + $0x108] sm:$0xff] %v2105
    %2170 = vst [vmem:[%s5 + $0x110] sm:$0xff] %v2106
    %2171 = vst [vmem:[%s5 + $0x118] sm:$0xff] %v2107
    %2172 = vst [vmem:[%s5 + $0x120] sm:$0xff] %v2108
    %2173 = vst [vmem:[%s5 + $0x128] sm:$0xff] %v2109
    %2174 = vst [vmem:[%s5 + $0x130] sm:$0xff] %v2110
    %2175 = vst [vmem:[%s5 + $0x138] sm:$0xff] %v2111
    %2176 = vst [vmem:[%s5 + $0x140] sm:$0xff] %v2112
    %2177 = vst [vmem:[%s5 + $0x148] sm:$0xff] %v2113
    %2178 = vst [vmem:[%s5 + $0x150] sm:$0xff] %v2114
    %2179 = vst [vmem:[%s5 + $0x158] sm:$0xff] %v2115
    %2180 = vst [vmem:[%s5 + $0x160] sm:$0xff] %v2116
    %2181 = vst [vmem:[%s5 + $0x168] sm:$0xff] %v2117
    %2182 = vst [vmem:[%s5 + $0x170] sm:$0xff] %v2118
    %2183 = vst [vmem:[%s5 + $0x178] sm:$0xff] %v2119
    %2184 = vst [vmem:[%s5 + $0x180] sm:$0xff] %v2120
    %2185 = vst [vmem:[%s5 + $0x188] sm:$0xff] %v2121
    %2186 = vst [vmem:[%s5 + $0x190] sm:$0xff] %v2122
    %2187 = vst [vmem:[%s5 + $0x198] sm:$0xff] %v2123
    %2188 = vst [vmem:[%s5 + $0x1a0] sm:$0xff] %v2124
    %2189 = vst [vmem:[%s5 + $0x1a8] sm:$0xff] %v2125
    %2190 = vst [vmem:[%s5 + $0x1b0] sm:$0xff] %v2126
    %2191 = vst [vmem:[%s5 + $0x1b8] sm:$0xff] %v2127
    %2192 = vst [vmem:[%s5 + $0x1c0] sm:$0xff] %v2128
    %2193 = vst [vmem:[%s5 + $0x1c8] sm:$0xff] %v2129
    %2194 = vst [vmem:[%s5 + $0x1d0] sm:$0xff] %v2130
    %2195 = vst [vmem:[%s5 + $0x1d8] sm:$0xff] %v2131
    %2196 = vst [vmem:[%s5 + $0x1e0] sm:$0xff] %v2132
    %2197 = vst [vmem:[%s5 + $0x1e8] sm:$0xff] %v2133
    %2198 = vst [vmem:[%s5 + $0x1f0] sm:$0xff] %v2134
    %2199 = vst [vmem:[%s5 + $0x1f8] sm:$0xff] %v2135
  $region25: #{graphsage_forward.7} parent=0 // pred_fallthru
    _
  // Predicated region
  $region26: #{graphsage_forward.7} parent=0 // pred_check
    _
  $region27: #{graphsage_forward.7} parent=0 // pred_check_branch
    %2201 = sbr.rel (0) target = $region29
  $region28: #{graphsage_forward.7} parent=0 // pred_region
    _
  $region29: #{graphsage_forward.7} parent=0 // pred_fallthru
    _
  // Predicated region
  $region30: #{graphsage_forward.7} parent=0 // pred_check
    _
  $region31: #{graphsage_forward.7} parent=0 // pred_check_branch
    %2203 = sbr.rel (0) target = $region33
  $region32: #{graphsage_forward.7} parent=0 // pred_region
    _
  $region33: #{graphsage_forward.7} parent=0 // pred_fallthru
    _

// kernel: graphsage_forward.5
$region0: #{graphsage_forward.5}
  #allocation0 [shape = 'u32[]', space=smem, size = 0x4, offset = 0x4, fixed_abs, tag = 'smem constant byte address 0x4 - core index']
  #allocation1 [shape = 'u32[144,128]{1,0:T(1,128)}', space=vmem, size = 0x12000, scoped, tag = 'internal scratch']
  #allocation2 [shape = 'f32[512,128]{1,0:T(8,128)}', space=vmem, size = 0x40000, scoped, tag = 'scratch operand']
  #allocation3 [shape = 's32[1]{0}', space=sflag, size = 0x4, scoped, tag = 'scoped memory for graphsage_forward.5']
  #allocation4 [shape = 's32[1]{0:T(128)S(6)}', space=smem, size = 0x200, scoped, tag = 'prefetched SMEM operand 0']
  #allocation5 [shape = 's32[1]{0:T(128)S(6)}', space=smem, size = 0x200, scoped, tag = 'prefetched SMEM operand 1']
  %s0 = inlined_call_operand.<no memory space> [shape: s32[1], index: 0, kind: input, shape index: {}]
  %s1 = inlined_call_operand.<no memory space> [shape: s32[1], index: 1, kind: input, shape index: {}]
  %s2 = inlined_call_operand.vmem [shape: bf16[512,512], index: 2, kind: input, shape index: {}]
  %s3 = inlined_call_operand.vmem [shape: bf16[512,128], index: 3, kind: input, shape index: {}]
  %s4 = inlined_call_operand.vmem [shape: f32[512,128], index: 4, kind: input, shape index: {}]
  %s5 = inlined_call_operand.vmem [shape: bf16[512,128], index: 5, kind: output, shape index: {}]
  %s6 = sld [smem:[#allocation0]]
  $region34: #{graphsage_forward.5} parent=0
    _
  %s8 = ssub.s32 1, %s6
  %s9 = scalar_select 0, %s8, %s6
  %10 = sst [smem:[#allocation4]] %s0
  %11 = sst [smem:[#allocation5]] %s1
  // Predicated region
  $region2: #{graphsage_forward.5} parent=0 // pred_check
    _
  $region3: #{graphsage_forward.5} parent=0 // pred_check_branch
    %13 = sbr.rel (0) target = $region5
  $region4: #{graphsage_forward.5} parent=0 // pred_region
    %s14 = sadd.s32 0, 0
    %s15 = sld [smem:[#allocation5 + %s14]]
    %s16 = smul.u32 4, %s15
    %p17 = scmp.lt.s32.totalorder %s16, 3
    %s18 = scalar_select %p17, %s16, 3
    %s19 = smul.addr %s18, 4
    %s20 = scalar_lea.vmem %s2, %s19
    %s21 = sadd.s32 0, 0
    %s22 = sld [smem:[#allocation5 + %s21]]
    %s23 = smul.u32 4, %s22
  $region5: #{graphsage_forward.5} parent=0 // pred_fallthru
    _
  // Predicated region
  $region6: #{graphsage_forward.5} parent=0 // pred_check
    _
  $region7: #{graphsage_forward.5} parent=0 // pred_check_branch
    %25 = sbr.rel (0) target = $region9
  $region8: #{graphsage_forward.5} parent=0 // pred_region
    %s26 = sadd.s32 0, 0
    %s27 = sld [smem:[#allocation5 + %s26]]
    %s28 = smul.u32 64, %s27
    %p29 = scmp.lt.s32.totalorder %s28, 63
    %s30 = scalar_select %p29, %s28, 63
    %s31 = smul.addr %s30, 4
    %s32 = scalar_lea.vmem %s3, %s31
    %s33 = sadd.s32 0, 0
    %s34 = sld [smem:[#allocation5 + %s33]]
    %s35 = smul.u32 64, %s34
  $region9: #{graphsage_forward.5} parent=0 // pred_fallthru
    _
  // Predicated region
  $region10: #{graphsage_forward.5} parent=0 // pred_check
    _
  $region11: #{graphsage_forward.5} parent=0 // pred_check_branch
    %37 = sbr.rel (0) target = $region13
  $region12: #{graphsage_forward.5} parent=0 // pred_region
    _
  $region13: #{graphsage_forward.5} parent=0 // pred_fallthru
    _
  %s38 = sadd.s32 0, 0
  %s39 = sld [smem:[#allocation5 + %s38]]
  %s40 = smul.u32 4, %s39
  %p41 = scmp.lt.s32.totalorder %s40, 3
  %s42 = scalar_select %p41, %s40, 3
  %s43 = smul.addr %s42, 4
  %s44 = scalar_lea.vmem %s2, %s43
  %s45 = sadd.s32 0, 0
  %s46 = sld [smem:[#allocation5 + %s45]]
  %s47 = smul.u32 64, %s46
  %p48 = scmp.lt.s32.totalorder %s47, 63
  %s49 = scalar_select %p48, %s47, 63
  %s50 = smul.addr %s49, 4
  %s51 = scalar_lea.vmem %s3, %s50
  %s52 = sadd.s32 0, 0
  %s53 = sld [smem:[#allocation5 + %s52]]
  %s54 = smul.u32 4, %s53
  %p55 = scmp.lt.s32.totalorder %s54, 3
  %s56 = scalar_select %p55, %s54, 3
  %s57 = smul.addr %s56, 4
  %s58 = scalar_lea.vmem %s2, %s57
  %s59 = sadd.s32 0, 0
  %s60 = sld [smem:[#allocation5 + %s59]]
  %s61 = smul.u32 4, %s60
  %s62 = sadd.s32 0, 0
  %s63 = sld [smem:[#allocation5 + %s62]]
  %s64 = smul.u32 64, %s63
  %p65 = scmp.lt.s32.totalorder %s64, 63
  %s66 = scalar_select %p65, %s64, 63
  %s67 = smul.addr %s66, 4
  %s68 = scalar_lea.vmem %s3, %s67
  %s69 = sadd.s32 0, 0
  %s70 = sld [smem:[#allocation5 + %s69]]
  %s71 = smul.u32 64, %s70
  %p73 = scmp.eq.s32.totalorder 0, 0
  // Predicated region
  $region14: #{graphsage_forward.5} parent=0 // pred_check
    %p74 = pneg %p73
  $region15: #{graphsage_forward.5} parent=0 // pred_check_branch
    %76 = sbr.rel (%p74) target = $region17
  $region16: #{graphsage_forward.5} parent=0 // pred_region
    %77 = vst [vmem:[#allocation2] sm:$0xff] 0.0
    %78 = vst [vmem:[#allocation2 + $0x8] sm:$0xff] 0.0
    %79 = vst [vmem:[#allocation2 + $0x10] sm:$0xff] 0.0
    %80 = vst [vmem:[#allocation2 + $0x18] sm:$0xff] 0.0
    %81 = vst [vmem:[#allocation2 + $0x20] sm:$0xff] 0.0
    %82 = vst [vmem:[#allocation2 + $0x28] sm:$0xff] 0.0
    %83 = vst [vmem:[#allocation2 + $0x30] sm:$0xff] 0.0
    %84 = vst [vmem:[#allocation2 + $0x38] sm:$0xff] 0.0
    %85 = vst [vmem:[#allocation2 + $0x40] sm:$0xff] 0.0
    %86 = vst [vmem:[#allocation2 + $0x48] sm:$0xff] 0.0
    %87 = vst [vmem:[#allocation2 + $0x50] sm:$0xff] 0.0
    %88 = vst [vmem:[#allocation2 + $0x58] sm:$0xff] 0.0
    %89 = vst [vmem:[#allocation2 + $0x60] sm:$0xff] 0.0
    %90 = vst [vmem:[#allocation2 + $0x68] sm:$0xff] 0.0
    %91 = vst [vmem:[#allocation2 + $0x70] sm:$0xff] 0.0
    %92 = vst [vmem:[#allocation2 + $0x78] sm:$0xff] 0.0
    %93 = vst [vmem:[#allocation2 + $0x80] sm:$0xff] 0.0
    %94 = vst [vmem:[#allocation2 + $0x88] sm:$0xff] 0.0
    %95 = vst [vmem:[#allocation2 + $0x90] sm:$0xff] 0.0
    %96 = vst [vmem:[#allocation2 + $0x98] sm:$0xff] 0.0
    %97 = vst [vmem:[#allocation2 + $0xa0] sm:$0xff] 0.0
    %98 = vst [vmem:[#allocation2 + $0xa8] sm:$0xff] 0.0
    %99 = vst [vmem:[#allocation2 + $0xb0] sm:$0xff] 0.0
    %100 = vst [vmem:[#allocation2 + $0xb8] sm:$0xff] 0.0
    %101 = vst [vmem:[#allocation2 + $0xc0] sm:$0xff] 0.0
    %102 = vst [vmem:[#allocation2 + $0xc8] sm:$0xff] 0.0
    %103 = vst [vmem:[#allocation2 + $0xd0] sm:$0xff] 0.0
    %104 = vst [vmem:[#allocation2 + $0xd8] sm:$0xff] 0.0
    %105 = vst [vmem:[#allocation2 + $0xe0] sm:$0xff] 0.0
    %106 = vst [vmem:[#allocation2 + $0xe8] sm:$0xff] 0.0
    %107 = vst [vmem:[#allocation2 + $0xf0] sm:$0xff] 0.0
    %108 = vst [vmem:[#allocation2 + $0xf8] sm:$0xff] 0.0
    %109 = vst [vmem:[#allocation2 + $0x100] sm:$0xff] 0.0
    %110 = vst [vmem:[#allocation2 + $0x108] sm:$0xff] 0.0
    %111 = vst [vmem:[#allocation2 + $0x110] sm:$0xff] 0.0
    %112 = vst [vmem:[#allocation2 + $0x118] sm:$0xff] 0.0
    %113 = vst [vmem:[#allocation2 + $0x120] sm:$0xff] 0.0
    %114 = vst [vmem:[#allocation2 + $0x128] sm:$0xff] 0.0
    %115 = vst [vmem:[#allocation2 + $0x130] sm:$0xff] 0.0
    %116 = vst [vmem:[#allocation2 + $0x138] sm:$0xff] 0.0
    %117 = vst [vmem:[#allocation2 + $0x140] sm:$0xff] 0.0
    %118 = vst [vmem:[#allocation2 + $0x148] sm:$0xff] 0.0
    %119 = vst [vmem:[#allocation2 + $0x150] sm:$0xff] 0.0
    %120 = vst [vmem:[#allocation2 + $0x158] sm:$0xff] 0.0
    %121 = vst [vmem:[#allocation2 + $0x160] sm:$0xff] 0.0
    %122 = vst [vmem:[#allocation2 + $0x168] sm:$0xff] 0.0
    %123 = vst [vmem:[#allocation2 + $0x170] sm:$0xff] 0.0
    %124 = vst [vmem:[#allocation2 + $0x178] sm:$0xff] 0.0
    %125 = vst [vmem:[#allocation2 + $0x180] sm:$0xff] 0.0
    %126 = vst [vmem:[#allocation2 + $0x188] sm:$0xff] 0.0
    %127 = vst [vmem:[#allocation2 + $0x190] sm:$0xff] 0.0
    %128 = vst [vmem:[#allocation2 + $0x198] sm:$0xff] 0.0
    %129 = vst [vmem:[#allocation2 + $0x1a0] sm:$0xff] 0.0
    %130 = vst [vmem:[#allocation2 + $0x1a8] sm:$0xff] 0.0
    %131 = vst [vmem:[#allocation2 + $0x1b0] sm:$0xff] 0.0
    %132 = vst [vmem:[#allocation2 + $0x1b8] sm:$0xff] 0.0
    %133 = vst [vmem:[#allocation2 + $0x1c0] sm:$0xff] 0.0
    %134 = vst [vmem:[#allocation2 + $0x1c8] sm:$0xff] 0.0
    %135 = vst [vmem:[#allocation2 + $0x1d0] sm:$0xff] 0.0
    %136 = vst [vmem:[#allocation2 + $0x1d8] sm:$0xff] 0.0
    %137 = vst [vmem:[#allocation2 + $0x1e0] sm:$0xff] 0.0
    %138 = vst [vmem:[#allocation2 + $0x1e8] sm:$0xff] 0.0
    %139 = vst [vmem:[#allocation2 + $0x1f0] sm:$0xff] 0.0
    %140 = vst [vmem:[#allocation2 + $0x1f8] sm:$0xff] 0.0
  $region17: #{graphsage_forward.5} parent=0 // pred_fallthru
    _
  %s141 = sadd.s32 0, 0
  %s142 = sld [smem:[#allocation4 + %s141]]
  %p143 = scmp.gt.s32.totalorder %s142, 0
  // Predicated region
  $region18: #{graphsage_forward.5} parent=0 // pred_check
    %p144 = pneg %p143
  $region19: #{graphsage_forward.5} parent=0 // pred_check_branch
    %146 = sbr.rel (%p144) target = $region21
  $region20: #{graphsage_forward.5} parent=0 // pred_region
    %v147 = vld [vmem:[#allocation2] sm:$0xff]
    %v148 = vld [vmem:[#allocation2 + $0x8] sm:$0xff]
    %v149 = vld [vmem:[#allocation2 + $0x10] sm:$0xff]
    %v150 = vld [vmem:[#allocation2 + $0x18] sm:$0xff]
    %v151 = vld [vmem:[#allocation2 + $0x20] sm:$0xff]
    %v152 = vld [vmem:[#allocation2 + $0x28] sm:$0xff]
    %v153 = vld [vmem:[#allocation2 + $0x30] sm:$0xff]
    %v154 = vld [vmem:[#allocation2 + $0x38] sm:$0xff]
    %v155 = vld [vmem:[#allocation2 + $0x40] sm:$0xff]
    %v156 = vld [vmem:[#allocation2 + $0x48] sm:$0xff]
    %v157 = vld [vmem:[#allocation2 + $0x50] sm:$0xff]
    %v158 = vld [vmem:[#allocation2 + $0x58] sm:$0xff]
    %v159 = vld [vmem:[#allocation2 + $0x60] sm:$0xff]
    %v160 = vld [vmem:[#allocation2 + $0x68] sm:$0xff]
    %v161 = vld [vmem:[#allocation2 + $0x70] sm:$0xff]
    %v162 = vld [vmem:[#allocation2 + $0x78] sm:$0xff]
    %v163 = vld [vmem:[#allocation2 + $0x80] sm:$0xff]
    %v164 = vld [vmem:[#allocation2 + $0x88] sm:$0xff]
    %v165 = vld [vmem:[#allocation2 + $0x90] sm:$0xff]
    %v166 = vld [vmem:[#allocation2 + $0x98] sm:$0xff]
    %v167 = vld [vmem:[#allocation2 + $0xa0] sm:$0xff]
    %v168 = vld [vmem:[#allocation2 + $0xa8] sm:$0xff]
    %v169 = vld [vmem:[#allocation2 + $0xb0] sm:$0xff]
    %v170 = vld [vmem:[#allocation2 + $0xb8] sm:$0xff]
    %v171 = vld [vmem:[#allocation2 + $0xc0] sm:$0xff]
    %v172 = vld [vmem:[#allocation2 + $0xc8] sm:$0xff]
    %v173 = vld [vmem:[#allocation2 + $0xd0] sm:$0xff]
    %v174 = vld [vmem:[#allocation2 + $0xd8] sm:$0xff]
    %v175 = vld [vmem:[#allocation2 + $0xe0] sm:$0xff]
    %v176 = vld [vmem:[#allocation2 + $0xe8] sm:$0xff]
    %v177 = vld [vmem:[#allocation2 + $0xf0] sm:$0xff]
    %v178 = vld [vmem:[#allocation2 + $0xf8] sm:$0xff]
    %v179 = vld [vmem:[#allocation2 + $0x100] sm:$0xff]
    %v180 = vld [vmem:[#allocation2 + $0x108] sm:$0xff]
    %v181 = vld [vmem:[#allocation2 + $0x110] sm:$0xff]
    %v182 = vld [vmem:[#allocation2 + $0x118] sm:$0xff]
    %v183 = vld [vmem:[#allocation2 + $0x120] sm:$0xff]
    %v184 = vld [vmem:[#allocation2 + $0x128] sm:$0xff]
    %v185 = vld [vmem:[#allocation2 + $0x130] sm:$0xff]
    %v186 = vld [vmem:[#allocation2 + $0x138] sm:$0xff]
    %v187 = vld [vmem:[#allocation2 + $0x140] sm:$0xff]
    %v188 = vld [vmem:[#allocation2 + $0x148] sm:$0xff]
    %v189 = vld [vmem:[#allocation2 + $0x150] sm:$0xff]
    %v190 = vld [vmem:[#allocation2 + $0x158] sm:$0xff]
    %v191 = vld [vmem:[#allocation2 + $0x160] sm:$0xff]
    %v192 = vld [vmem:[#allocation2 + $0x168] sm:$0xff]
    %v193 = vld [vmem:[#allocation2 + $0x170] sm:$0xff]
    %v194 = vld [vmem:[#allocation2 + $0x178] sm:$0xff]
    %v195 = vld [vmem:[#allocation2 + $0x180] sm:$0xff]
    %v196 = vld [vmem:[#allocation2 + $0x188] sm:$0xff]
    %v197 = vld [vmem:[#allocation2 + $0x190] sm:$0xff]
    %v198 = vld [vmem:[#allocation2 + $0x198] sm:$0xff]
    %v199 = vld [vmem:[#allocation2 + $0x1a0] sm:$0xff]
    %v200 = vld [vmem:[#allocation2 + $0x1a8] sm:$0xff]
    %v201 = vld [vmem:[#allocation2 + $0x1b0] sm:$0xff]
    %v202 = vld [vmem:[#allocation2 + $0x1b8] sm:$0xff]
    %v203 = vld [vmem:[#allocation2 + $0x1c0] sm:$0xff]
    %v204 = vld [vmem:[#allocation2 + $0x1c8] sm:$0xff]
    %v205 = vld [vmem:[#allocation2 + $0x1d0] sm:$0xff]
    %v206 = vld [vmem:[#allocation2 + $0x1d8] sm:$0xff]
    %v207 = vld [vmem:[#allocation2 + $0x1e0] sm:$0xff]
    %v208 = vld [vmem:[#allocation2 + $0x1e8] sm:$0xff]
    %v209 = vld [vmem:[#allocation2 + $0x1f0] sm:$0xff]
    %v210 = vld [vmem:[#allocation2 + $0x1f8] sm:$0xff]
    %v211 = vld [vmem:[%s58] sm:$0xff]
    %v212 = vld [vmem:[%s58 + $0x8] sm:$0xff]
    %v213 = vld [vmem:[%s58 + $0x10] sm:$0xff]
    %v214 = vld [vmem:[%s58 + $0x18] sm:$0xff]
    %v215 = vld [vmem:[%s58 + $0x20] sm:$0xff]
    %v216 = vld [vmem:[%s58 + $0x28] sm:$0xff]
    %v217 = vld [vmem:[%s58 + $0x30] sm:$0xff]
    %v218 = vld [vmem:[%s58 + $0x38] sm:$0xff]
    %v219 = vld [vmem:[%s58 + $0x40] sm:$0xff]
    %v220 = vld [vmem:[%s58 + $0x48] sm:$0xff]
    %v221 = vld [vmem:[%s58 + $0x50] sm:$0xff]
    %v222 = vld [vmem:[%s58 + $0x58] sm:$0xff]
    %v223 = vld [vmem:[%s58 + $0x60] sm:$0xff]
    %v224 = vld [vmem:[%s58 + $0x68] sm:$0xff]
    %v225 = vld [vmem:[%s58 + $0x70] sm:$0xff]
    %v226 = vld [vmem:[%s58 + $0x78] sm:$0xff]
    %v227 = vld [vmem:[%s58 + $0x80] sm:$0xff]
    %v228 = vld [vmem:[%s58 + $0x88] sm:$0xff]
    %v229 = vld [vmem:[%s58 + $0x90] sm:$0xff]
    %v230 = vld [vmem:[%s58 + $0x98] sm:$0xff]
    %v231 = vld [vmem:[%s58 + $0xa0] sm:$0xff]
    %v232 = vld [vmem:[%s58 + $0xa8] sm:$0xff]
    %v233 = vld [vmem:[%s58 + $0xb0] sm:$0xff]
    %v234 = vld [vmem:[%s58 + $0xb8] sm:$0xff]
    %v235 = vld [vmem:[%s58 + $0xc0] sm:$0xff]
    %v236 = vld [vmem:[%s58 + $0xc8] sm:$0xff]
    %v237 = vld [vmem:[%s58 + $0xd0] sm:$0xff]
    %v238 = vld [vmem:[%s58 + $0xd8] sm:$0xff]
    %v239 = vld [vmem:[%s58 + $0xe0] sm:$0xff]
    %v240 = vld [vmem:[%s58 + $0xe8] sm:$0xff]
    %v241 = vld [vmem:[%s58 + $0xf0] sm:$0xff]
    %v242 = vld [vmem:[%s58 + $0xf8] sm:$0xff]
    %v243 = vld [vmem:[%s58 + $0x100] sm:$0xff]
    %v244 = vld [vmem:[%s58 + $0x108] sm:$0xff]
    %v245 = vld [vmem:[%s58 + $0x110] sm:$0xff]
    %v246 = vld [vmem:[%s58 + $0x118] sm:$0xff]
    %v247 = vld [vmem:[%s58 + $0x120] sm:$0xff]
    %v248 = vld [vmem:[%s58 + $0x128] sm:$0xff]
    %v249 = vld [vmem:[%s58 + $0x130] sm:$0xff]
    %v250 = vld [vmem:[%s58 + $0x138] sm:$0xff]
    %v251 = vld [vmem:[%s58 + $0x140] sm:$0xff]
    %v252 = vld [vmem:[%s58 + $0x148] sm:$0xff]
    %v253 = vld [vmem:[%s58 + $0x150] sm:$0xff]
    %v254 = vld [vmem:[%s58 + $0x158] sm:$0xff]
    %v255 = vld [vmem:[%s58 + $0x160] sm:$0xff]
    %v256 = vld [vmem:[%s58 + $0x168] sm:$0xff]
    %v257 = vld [vmem:[%s58 + $0x170] sm:$0xff]
    %v258 = vld [vmem:[%s58 + $0x178] sm:$0xff]
    %v259 = vld [vmem:[%s58 + $0x180] sm:$0xff]
    %v260 = vld [vmem:[%s58 + $0x188] sm:$0xff]
    %v261 = vld [vmem:[%s58 + $0x190] sm:$0xff]
    %v262 = vld [vmem:[%s58 + $0x198] sm:$0xff]
    %v263 = vld [vmem:[%s58 + $0x1a0] sm:$0xff]
    %v264 = vld [vmem:[%s58 + $0x1a8] sm:$0xff]
    %v265 = vld [vmem:[%s58 + $0x1b0] sm:$0xff]
    %v266 = vld [vmem:[%s58 + $0x1b8] sm:$0xff]
    %v267 = vld [vmem:[%s58 + $0x1c0] sm:$0xff]
    %v268 = vld [vmem:[%s58 + $0x1c8] sm:$0xff]
    %v269 = vld [vmem:[%s58 + $0x1d0] sm:$0xff]
    %v270 = vld [vmem:[%s58 + $0x1d8] sm:$0xff]
    %v271 = vld [vmem:[%s58 + $0x1e0] sm:$0xff]
    %v272 = vld [vmem:[%s58 + $0x1e8] sm:$0xff]
    %v273 = vld [vmem:[%s58 + $0x1f0] sm:$0xff]
    %v274 = vld [vmem:[%s58 + $0x1f8] sm:$0xff]
    %v275 = vld [vmem:[%s58 + $0x200] sm:$0xff]
    %v276 = vld [vmem:[%s58 + $0x208] sm:$0xff]
    %v277 = vld [vmem:[%s58 + $0x210] sm:$0xff]
    %v278 = vld [vmem:[%s58 + $0x218] sm:$0xff]
    %v279 = vld [vmem:[%s58 + $0x220] sm:$0xff]
    %v280 = vld [vmem:[%s58 + $0x228] sm:$0xff]
    %v281 = vld [vmem:[%s58 + $0x230] sm:$0xff]
    %v282 = vld [vmem:[%s58 + $0x238] sm:$0xff]
    %v283 = vld [vmem:[%s58 + $0x240] sm:$0xff]
    %v284 = vld [vmem:[%s58 + $0x248] sm:$0xff]
    %v285 = vld [vmem:[%s58 + $0x250] sm:$0xff]
    %v286 = vld [vmem:[%s58 + $0x258] sm:$0xff]
    %v287 = vld [vmem:[%s58 + $0x260] sm:$0xff]
    %v288 = vld [vmem:[%s58 + $0x268] sm:$0xff]
    %v289 = vld [vmem:[%s58 + $0x270] sm:$0xff]
    %v290 = vld [vmem:[%s58 + $0x278] sm:$0xff]
    %v291 = vld [vmem:[%s58 + $0x280] sm:$0xff]
    %v292 = vld [vmem:[%s58 + $0x288] sm:$0xff]
    %v293 = vld [vmem:[%s58 + $0x290] sm:$0xff]
    %v294 = vld [vmem:[%s58 + $0x298] sm:$0xff]
    %v295 = vld [vmem:[%s58 + $0x2a0] sm:$0xff]
    %v296 = vld [vmem:[%s58 + $0x2a8] sm:$0xff]
    %v297 = vld [vmem:[%s58 + $0x2b0] sm:$0xff]
    %v298 = vld [vmem:[%s58 + $0x2b8] sm:$0xff]
    %v299 = vld [vmem:[%s58 + $0x2c0] sm:$0xff]
    %v300 = vld [vmem:[%s58 + $0x2c8] sm:$0xff]
    %v301 = vld [vmem:[%s58 + $0x2d0] sm:$0xff]
    %v302 = vld [vmem:[%s58 + $0x2d8] sm:$0xff]
    %v303 = vld [vmem:[%s58 + $0x2e0] sm:$0xff]
    %v304 = vld [vmem:[%s58 + $0x2e8] sm:$0xff]
    %v305 = vld [vmem:[%s58 + $0x2f0] sm:$0xff]
    %v306 = vld [vmem:[%s58 + $0x2f8] sm:$0xff]
    %v307 = vld [vmem:[%s58 + $0x300] sm:$0xff]
    %v308 = vld [vmem:[%s58 + $0x308] sm:$0xff]
    %v309 = vld [vmem:[%s58 + $0x310] sm:$0xff]
    %v310 = vld [vmem:[%s58 + $0x318] sm:$0xff]
    %v311 = vld [vmem:[%s58 + $0x320] sm:$0xff]
    %v312 = vld [vmem:[%s58 + $0x328] sm:$0xff]
    %v313 = vld [vmem:[%s58 + $0x330] sm:$0xff]
    %v314 = vld [vmem:[%s58 + $0x338] sm:$0xff]
    %v315 = vld [vmem:[%s58 + $0x340] sm:$0xff]
    %v316 = vld [vmem:[%s58 + $0x348] sm:$0xff]
    %v317 = vld [vmem:[%s58 + $0x350] sm:$0xff]
    %v318 = vld [vmem:[%s58 + $0x358] sm:$0xff]
    %v319 = vld [vmem:[%s58 + $0x360] sm:$0xff]
    %v320 = vld [vmem:[%s58 + $0x368] sm:$0xff]
    %v321 = vld [vmem:[%s58 + $0x370] sm:$0xff]
    %v322 = vld [vmem:[%s58 + $0x378] sm:$0xff]
    %v323 = vld [vmem:[%s58 + $0x380] sm:$0xff]
    %v324 = vld [vmem:[%s58 + $0x388] sm:$0xff]
    %v325 = vld [vmem:[%s58 + $0x390] sm:$0xff]
    %v326 = vld [vmem:[%s58 + $0x398] sm:$0xff]
    %v327 = vld [vmem:[%s58 + $0x3a0] sm:$0xff]
    %v328 = vld [vmem:[%s58 + $0x3a8] sm:$0xff]
    %v329 = vld [vmem:[%s58 + $0x3b0] sm:$0xff]
    %v330 = vld [vmem:[%s58 + $0x3b8] sm:$0xff]
    %v331 = vld [vmem:[%s58 + $0x3c0] sm:$0xff]
    %v332 = vld [vmem:[%s58 + $0x3c8] sm:$0xff]
    %v333 = vld [vmem:[%s58 + $0x3d0] sm:$0xff]
    %v334 = vld [vmem:[%s58 + $0x3d8] sm:$0xff]
    %v335 = vld [vmem:[%s58 + $0x3e0] sm:$0xff]
    %v336 = vld [vmem:[%s58 + $0x3e8] sm:$0xff]
    %v337 = vld [vmem:[%s58 + $0x3f0] sm:$0xff]
    %v338 = vld [vmem:[%s58 + $0x3f8] sm:$0xff]
    %v339 = vld [vmem:[%s68] sm:$0xf]
    %v340 = vld [vmem:[%s68 + $0x4] sm:$0xf]
    %v341 = vld [vmem:[%s68 + $0x8] sm:$0xf]
    %v342 = vld [vmem:[%s68 + $0xc] sm:$0xf]
    %v343 = vld [vmem:[%s68 + $0x10] sm:$0xf]
    %v344 = vld [vmem:[%s68 + $0x14] sm:$0xf]
    %v345 = vld [vmem:[%s68 + $0x18] sm:$0xf]
    %v346 = vld [vmem:[%s68 + $0x1c] sm:$0xf]
    %v347 = vld [vmem:[%s68 + $0x20] sm:$0xf]
    %v348 = vld [vmem:[%s68 + $0x24] sm:$0xf]
    %v349 = vld [vmem:[%s68 + $0x28] sm:$0xf]
    %v350 = vld [vmem:[%s68 + $0x2c] sm:$0xf]
    %v351 = vld [vmem:[%s68 + $0x30] sm:$0xf]
    %v352 = vld [vmem:[%s68 + $0x34] sm:$0xf]
    %v353 = vld [vmem:[%s68 + $0x38] sm:$0xf]
    %v354 = vld [vmem:[%s68 + $0x3c] sm:$0xf]
    %v355 = vld [vmem:[%s68 + $0x40] sm:$0xf]
    %v356 = vld [vmem:[%s68 + $0x44] sm:$0xf]
    %v357 = vld [vmem:[%s68 + $0x48] sm:$0xf]
    %v358 = vld [vmem:[%s68 + $0x4c] sm:$0xf]
    %v359 = vld [vmem:[%s68 + $0x50] sm:$0xf]
    %v360 = vld [vmem:[%s68 + $0x54] sm:$0xf]
    %v361 = vld [vmem:[%s68 + $0x58] sm:$0xf]
    %v362 = vld [vmem:[%s68 + $0x5c] sm:$0xf]
    %v363 = vld [vmem:[%s68 + $0x60] sm:$0xf]
    %v364 = vld [vmem:[%s68 + $0x64] sm:$0xf]
    %v365 = vld [vmem:[%s68 + $0x68] sm:$0xf]
    %v366 = vld [vmem:[%s68 + $0x6c] sm:$0xf]
    %v367 = vld [vmem:[%s68 + $0x70] sm:$0xf]
    %v368 = vld [vmem:[%s68 + $0x74] sm:$0xf]
    %v369 = vld [vmem:[%s68 + $0x78] sm:$0xf]
    %v370 = vld [vmem:[%s68 + $0x7c] sm:$0xf]
    %v371 = vld [vmem:[%s68 + $0x80] sm:$0xf]
    %v372 = vld [vmem:[%s68 + $0x84] sm:$0xf]
    %v373 = vld [vmem:[%s68 + $0x88] sm:$0xf]
    %v374 = vld [vmem:[%s68 + $0x8c] sm:$0xf]
    %v375 = vld [vmem:[%s68 + $0x90] sm:$0xf]
    %v376 = vld [vmem:[%s68 + $0x94] sm:$0xf]
    %v377 = vld [vmem:[%s68 + $0x98] sm:$0xf]
    %v378 = vld [vmem:[%s68 + $0x9c] sm:$0xf]
    %v379 = vld [vmem:[%s68 + $0xa0] sm:$0xf]
    %v380 = vld [vmem:[%s68 + $0xa4] sm:$0xf]
    %v381 = vld [vmem:[%s68 + $0xa8] sm:$0xf]
    %v382 = vld [vmem:[%s68 + $0xac] sm:$0xf]
    %v383 = vld [vmem:[%s68 + $0xb0] sm:$0xf]
    %v384 = vld [vmem:[%s68 + $0xb4] sm:$0xf]
    %v385 = vld [vmem:[%s68 + $0xb8] sm:$0xf]
    %v386 = vld [vmem:[%s68 + $0xbc] sm:$0xf]
    %v387 = vld [vmem:[%s68 + $0xc0] sm:$0xf]
    %v388 = vld [vmem:[%s68 + $0xc4] sm:$0xf]
    %v389 = vld [vmem:[%s68 + $0xc8] sm:$0xf]
    %v390 = vld [vmem:[%s68 + $0xcc] sm:$0xf]
    %v391 = vld [vmem:[%s68 + $0xd0] sm:$0xf]
    %v392 = vld [vmem:[%s68 + $0xd4] sm:$0xf]
    %v393 = vld [vmem:[%s68 + $0xd8] sm:$0xf]
    %v394 = vld [vmem:[%s68 + $0xdc] sm:$0xf]
    %v395 = vld [vmem:[%s68 + $0xe0] sm:$0xf]
    %v396 = vld [vmem:[%s68 + $0xe4] sm:$0xf]
    %v397 = vld [vmem:[%s68 + $0xe8] sm:$0xf]
    %v398 = vld [vmem:[%s68 + $0xec] sm:$0xf]
    %v399 = vld [vmem:[%s68 + $0xf0] sm:$0xf]
    %v400 = vld [vmem:[%s68 + $0xf4] sm:$0xf]
    %v401 = vld [vmem:[%s68 + $0xf8] sm:$0xf]
    %v402 = vld [vmem:[%s68 + $0xfc] sm:$0xf]
    %v531 = vunpack.c.l.b16 %v211
    %v532 = vunpack.c.h.b16 %v211
    %v533 = vunpack.c.l.b16 %v212
    %v534 = vunpack.c.h.b16 %v212
    %v535 = vunpack.c.l.b16 %v213
    %v536 = vunpack.c.h.b16 %v213
    %v537 = vunpack.c.l.b16 %v214
    %v538 = vunpack.c.h.b16 %v214
    %v539 = vunpack.c.l.b16 %v215
    %v540 = vunpack.c.h.b16 %v215
    %v541 = vunpack.c.l.b16 %v216
    %v542 = vunpack.c.h.b16 %v216
    %v543 = vunpack.c.l.b16 %v217
    %v544 = vunpack.c.h.b16 %v217
    %v545 = vunpack.c.l.b16 %v218
    %v546 = vunpack.c.h.b16 %v218
    %v547 = vunpack.c.l.b16 %v219
    %v548 = vunpack.c.h.b16 %v219
    %v549 = vunpack.c.l.b16 %v220
    %v550 = vunpack.c.h.b16 %v220
    %v551 = vunpack.c.l.b16 %v221
    %v552 = vunpack.c.h.b16 %v221
    %v553 = vunpack.c.l.b16 %v222
    %v554 = vunpack.c.h.b16 %v222
    %v555 = vunpack.c.l.b16 %v223
    %v556 = vunpack.c.h.b16 %v223
    %v557 = vunpack.c.l.b16 %v224
    %v558 = vunpack.c.h.b16 %v224
    %v559 = vunpack.c.l.b16 %v225
    %v560 = vunpack.c.h.b16 %v225
    %v561 = vunpack.c.l.b16 %v226
    %v562 = vunpack.c.h.b16 %v226
    %v563 = vunpack.c.l.b16 %v227
    %v564 = vunpack.c.h.b16 %v227
    %v565 = vunpack.c.l.b16 %v228
    %v566 = vunpack.c.h.b16 %v228
    %v567 = vunpack.c.l.b16 %v229
    %v568 = vunpack.c.h.b16 %v229
    %v569 = vunpack.c.l.b16 %v230
    %v570 = vunpack.c.h.b16 %v230
    %v571 = vunpack.c.l.b16 %v231
    %v572 = vunpack.c.h.b16 %v231
    %v573 = vunpack.c.l.b16 %v232
    %v574 = vunpack.c.h.b16 %v232
    %v575 = vunpack.c.l.b16 %v233
    %v576 = vunpack.c.h.b16 %v233
    %v577 = vunpack.c.l.b16 %v234
    %v578 = vunpack.c.h.b16 %v234
    %v579 = vunpack.c.l.b16 %v235
    %v580 = vunpack.c.h.b16 %v235
    %v581 = vunpack.c.l.b16 %v236
    %v582 = vunpack.c.h.b16 %v236
    %v583 = vunpack.c.l.b16 %v237
    %v584 = vunpack.c.h.b16 %v237
    %v585 = vunpack.c.l.b16 %v238
    %v586 = vunpack.c.h.b16 %v238
    %v587 = vunpack.c.l.b16 %v239
    %v588 = vunpack.c.h.b16 %v239
    %v589 = vunpack.c.l.b16 %v240
    %v590 = vunpack.c.h.b16 %v240
    %v591 = vunpack.c.l.b16 %v241
    %v592 = vunpack.c.h.b16 %v241
    %v593 = vunpack.c.l.b16 %v242
    %v594 = vunpack.c.h.b16 %v242
    %v595 = vunpack.c.l.b16 %v243
    %v596 = vunpack.c.h.b16 %v243
    %v597 = vunpack.c.l.b16 %v244
    %v598 = vunpack.c.h.b16 %v244
    %v599 = vunpack.c.l.b16 %v245
    %v600 = vunpack.c.h.b16 %v245
    %v601 = vunpack.c.l.b16 %v246
    %v602 = vunpack.c.h.b16 %v246
    %v603 = vunpack.c.l.b16 %v247
    %v604 = vunpack.c.h.b16 %v247
    %v605 = vunpack.c.l.b16 %v248
    %v606 = vunpack.c.h.b16 %v248
    %v607 = vunpack.c.l.b16 %v249
    %v608 = vunpack.c.h.b16 %v249
    %v609 = vunpack.c.l.b16 %v250
    %v610 = vunpack.c.h.b16 %v250
    %v611 = vunpack.c.l.b16 %v251
    %v612 = vunpack.c.h.b16 %v251
    %v613 = vunpack.c.l.b16 %v252
    %v614 = vunpack.c.h.b16 %v252
    %v615 = vunpack.c.l.b16 %v253
    %v616 = vunpack.c.h.b16 %v253
    %v617 = vunpack.c.l.b16 %v254
    %v618 = vunpack.c.h.b16 %v254
    %v619 = vunpack.c.l.b16 %v255
    %v620 = vunpack.c.h.b16 %v255
    %v621 = vunpack.c.l.b16 %v256
    %v622 = vunpack.c.h.b16 %v256
    %v623 = vunpack.c.l.b16 %v257
    %v624 = vunpack.c.h.b16 %v257
    %v625 = vunpack.c.l.b16 %v258
    %v626 = vunpack.c.h.b16 %v258
    %v627 = vunpack.c.l.b16 %v259
    %v628 = vunpack.c.h.b16 %v259
    %v629 = vunpack.c.l.b16 %v260
    %v630 = vunpack.c.h.b16 %v260
    %v631 = vunpack.c.l.b16 %v261
    %v632 = vunpack.c.h.b16 %v261
    %v633 = vunpack.c.l.b16 %v262
    %v634 = vunpack.c.h.b16 %v262
    %v635 = vunpack.c.l.b16 %v263
    %v636 = vunpack.c.h.b16 %v263
    %v637 = vunpack.c.l.b16 %v264
    %v638 = vunpack.c.h.b16 %v264
    %v639 = vunpack.c.l.b16 %v265
    %v640 = vunpack.c.h.b16 %v265
    %v641 = vunpack.c.l.b16 %v266
    %v642 = vunpack.c.h.b16 %v266
    %v643 = vunpack.c.l.b16 %v267
    %v644 = vunpack.c.h.b16 %v267
    %v645 = vunpack.c.l.b16 %v268
    %v646 = vunpack.c.h.b16 %v268
    %v647 = vunpack.c.l.b16 %v269
    %v648 = vunpack.c.h.b16 %v269
    %v649 = vunpack.c.l.b16 %v270
    %v650 = vunpack.c.h.b16 %v270
    %v651 = vunpack.c.l.b16 %v271
    %v652 = vunpack.c.h.b16 %v271
    %v653 = vunpack.c.l.b16 %v272
    %v654 = vunpack.c.h.b16 %v272
    %v655 = vunpack.c.l.b16 %v273
    %v656 = vunpack.c.h.b16 %v273
    %v657 = vunpack.c.l.b16 %v274
    %v658 = vunpack.c.h.b16 %v274
    %v659 = vunpack.c.l.b16 %v275
    %v660 = vunpack.c.h.b16 %v275
    %v661 = vunpack.c.l.b16 %v276
    %v662 = vunpack.c.h.b16 %v276
    %v663 = vunpack.c.l.b16 %v277
    %v664 = vunpack.c.h.b16 %v277
    %v665 = vunpack.c.l.b16 %v278
    %v666 = vunpack.c.h.b16 %v278
    %v667 = vunpack.c.l.b16 %v279
    %v668 = vunpack.c.h.b16 %v279
    %v669 = vunpack.c.l.b16 %v280
    %v670 = vunpack.c.h.b16 %v280
    %v671 = vunpack.c.l.b16 %v281
    %v672 = vunpack.c.h.b16 %v281
    %v673 = vunpack.c.l.b16 %v282
    %v674 = vunpack.c.h.b16 %v282
    %v675 = vunpack.c.l.b16 %v283
    %v676 = vunpack.c.h.b16 %v283
    %v677 = vunpack.c.l.b16 %v284
    %v678 = vunpack.c.h.b16 %v284
    %v679 = vunpack.c.l.b16 %v285
    %v680 = vunpack.c.h.b16 %v285
    %v681 = vunpack.c.l.b16 %v286
    %v682 = vunpack.c.h.b16 %v286
    %v683 = vunpack.c.l.b16 %v287
    %v684 = vunpack.c.h.b16 %v287
    %v685 = vunpack.c.l.b16 %v288
    %v686 = vunpack.c.h.b16 %v288
    %v687 = vunpack.c.l.b16 %v289
    %v688 = vunpack.c.h.b16 %v289
    %v689 = vunpack.c.l.b16 %v290
    %v690 = vunpack.c.h.b16 %v290
    %v691 = vunpack.c.l.b16 %v291
    %v692 = vunpack.c.h.b16 %v291
    %v693 = vunpack.c.l.b16 %v292
    %v694 = vunpack.c.h.b16 %v292
    %v695 = vunpack.c.l.b16 %v293
    %v696 = vunpack.c.h.b16 %v293
    %v697 = vunpack.c.l.b16 %v294
    %v698 = vunpack.c.h.b16 %v294
    %v699 = vunpack.c.l.b16 %v295
    %v700 = vunpack.c.h.b16 %v295
    %v701 = vunpack.c.l.b16 %v296
    %v702 = vunpack.c.h.b16 %v296
    %v703 = vunpack.c.l.b16 %v297
    %v704 = vunpack.c.h.b16 %v297
    %v705 = vunpack.c.l.b16 %v298
    %v706 = vunpack.c.h.b16 %v298
    %v707 = vunpack.c.l.b16 %v299
    %v708 = vunpack.c.h.b16 %v299
    %v709 = vunpack.c.l.b16 %v300
    %v710 = vunpack.c.h.b16 %v300
    %v711 = vunpack.c.l.b16 %v301
    %v712 = vunpack.c.h.b16 %v301
    %v713 = vunpack.c.l.b16 %v302
    %v714 = vunpack.c.h.b16 %v302
    %v715 = vunpack.c.l.b16 %v303
    %v716 = vunpack.c.h.b16 %v303
    %v717 = vunpack.c.l.b16 %v304
    %v718 = vunpack.c.h.b16 %v304
    %v719 = vunpack.c.l.b16 %v305
    %v720 = vunpack.c.h.b16 %v305
    %v721 = vunpack.c.l.b16 %v306
    %v722 = vunpack.c.h.b16 %v306
    %v723 = vunpack.c.l.b16 %v307
    %v724 = vunpack.c.h.b16 %v307
    %v725 = vunpack.c.l.b16 %v308
    %v726 = vunpack.c.h.b16 %v308
    %v727 = vunpack.c.l.b16 %v309
    %v728 = vunpack.c.h.b16 %v309
    %v729 = vunpack.c.l.b16 %v310
    %v730 = vunpack.c.h.b16 %v310
    %v731 = vunpack.c.l.b16 %v311
    %v732 = vunpack.c.h.b16 %v311
    %v733 = vunpack.c.l.b16 %v312
    %v734 = vunpack.c.h.b16 %v312
    %v735 = vunpack.c.l.b16 %v313
    %v736 = vunpack.c.h.b16 %v313
    %v737 = vunpack.c.l.b16 %v314
    %v738 = vunpack.c.h.b16 %v314
    %v739 = vunpack.c.l.b16 %v315
    %v740 = vunpack.c.h.b16 %v315
    %v741 = vunpack.c.l.b16 %v316
    %v742 = vunpack.c.h.b16 %v316
    %v743 = vunpack.c.l.b16 %v317
    %v744 = vunpack.c.h.b16 %v317
    %v745 = vunpack.c.l.b16 %v318
    %v746 = vunpack.c.h.b16 %v318
    %v747 = vunpack.c.l.b16 %v319
    %v748 = vunpack.c.h.b16 %v319
    %v749 = vunpack.c.l.b16 %v320
    %v750 = vunpack.c.h.b16 %v320
    %v751 = vunpack.c.l.b16 %v321
    %v752 = vunpack.c.h.b16 %v321
    %v753 = vunpack.c.l.b16 %v322
    %v754 = vunpack.c.h.b16 %v322
    %v755 = vunpack.c.l.b16 %v323
    %v756 = vunpack.c.h.b16 %v323
    %v757 = vunpack.c.l.b16 %v324
    %v758 = vunpack.c.h.b16 %v324
    %v759 = vunpack.c.l.b16 %v325
    %v760 = vunpack.c.h.b16 %v325
    %v761 = vunpack.c.l.b16 %v326
    %v762 = vunpack.c.h.b16 %v326
    %v763 = vunpack.c.l.b16 %v327
    %v764 = vunpack.c.h.b16 %v327
    %v765 = vunpack.c.l.b16 %v328
    %v766 = vunpack.c.h.b16 %v328
    %v767 = vunpack.c.l.b16 %v329
    %v768 = vunpack.c.h.b16 %v329
    %v769 = vunpack.c.l.b16 %v330
    %v770 = vunpack.c.h.b16 %v330
    %v771 = vunpack.c.l.b16 %v331
    %v772 = vunpack.c.h.b16 %v331
    %v773 = vunpack.c.l.b16 %v332
    %v774 = vunpack.c.h.b16 %v332
    %v775 = vunpack.c.l.b16 %v333
    %v776 = vunpack.c.h.b16 %v333
    %v777 = vunpack.c.l.b16 %v334
    %v778 = vunpack.c.h.b16 %v334
    %v779 = vunpack.c.l.b16 %v335
    %v780 = vunpack.c.h.b16 %v335
    %v781 = vunpack.c.l.b16 %v336
    %v782 = vunpack.c.h.b16 %v336
    %v783 = vunpack.c.l.b16 %v337
    %v784 = vunpack.c.h.b16 %v337
    %v785 = vunpack.c.l.b16 %v338
    %v786 = vunpack.c.h.b16 %v338
    %v787 = vpack.c.b16 %v535, %v531
    %v788 = vpack.c.b16 %v536, %v532
    %v789 = vpack.c.b16 %v537, %v533
    %v790 = vpack.c.b16 %v538, %v534
    %v791 = vpack.c.b16 %v543, %v539
    %v792 = vpack.c.b16 %v544, %v540
    %v793 = vpack.c.b16 %v545, %v541
    %v794 = vpack.c.b16 %v546, %v542
    %v795 = vpack.c.b16 %v551, %v547
    %v796 = vpack.c.b16 %v552, %v548
    %v797 = vpack.c.b16 %v553, %v549
    %v798 = vpack.c.b16 %v554, %v550
    %v799 = vpack.c.b16 %v559, %v555
    %v800 = vpack.c.b16 %v560, %v556
    %v801 = vpack.c.b16 %v561, %v557
    %v802 = vpack.c.b16 %v562, %v558
    %v803 = vpack.c.b16 %v567, %v563
    %v804 = vpack.c.b16 %v568, %v564
    %v805 = vpack.c.b16 %v569, %v565
    %v806 = vpack.c.b16 %v570, %v566
    %v807 = vpack.c.b16 %v575, %v571
    %v808 = vpack.c.b16 %v576, %v572
    %v809 = vpack.c.b16 %v577, %v573
    %v810 = vpack.c.b16 %v578, %v574
    %v811 = vpack.c.b16 %v583, %v579
    %v812 = vpack.c.b16 %v584, %v580
    %v813 = vpack.c.b16 %v585, %v581
    %v814 = vpack.c.b16 %v586, %v582
    %v815 = vpack.c.b16 %v591, %v587
    %v816 = vpack.c.b16 %v592, %v588
    %v817 = vpack.c.b16 %v593, %v589
    %v818 = vpack.c.b16 %v594, %v590
    %v819 = vpack.c.b16 %v599, %v595
    %v820 = vpack.c.b16 %v600, %v596
    %v821 = vpack.c.b16 %v601, %v597
    %v822 = vpack.c.b16 %v602, %v598
    %v823 = vpack.c.b16 %v607, %v603
    %v824 = vpack.c.b16 %v608, %v604
    %v825 = vpack.c.b16 %v609, %v605
    %v826 = vpack.c.b16 %v610, %v606
    %v827 = vpack.c.b16 %v615, %v611
    %v828 = vpack.c.b16 %v616, %v612
    %v829 = vpack.c.b16 %v617, %v613
    %v830 = vpack.c.b16 %v618, %v614
    %v831 = vpack.c.b16 %v623, %v619
    %v832 = vpack.c.b16 %v624, %v620
    %v833 = vpack.c.b16 %v625, %v621
    %v834 = vpack.c.b16 %v626, %v622
    %v835 = vpack.c.b16 %v631, %v627
    %v836 = vpack.c.b16 %v632, %v628
    %v837 = vpack.c.b16 %v633, %v629
    %v838 = vpack.c.b16 %v634, %v630
    %v839 = vpack.c.b16 %v639, %v635
    %v840 = vpack.c.b16 %v640, %v636
    %v841 = vpack.c.b16 %v641, %v637
    %v842 = vpack.c.b16 %v642, %v638
    %v843 = vpack.c.b16 %v647, %v643
    %v844 = vpack.c.b16 %v648, %v644
    %v845 = vpack.c.b16 %v649, %v645
    %v846 = vpack.c.b16 %v650, %v646
    %v847 = vpack.c.b16 %v655, %v651
    %v848 = vpack.c.b16 %v656, %v652
    %v849 = vpack.c.b16 %v657, %v653
    %v850 = vpack.c.b16 %v658, %v654
    %v851 = vpack.c.b16 %v663, %v659
    %v852 = vpack.c.b16 %v664, %v660
    %v853 = vpack.c.b16 %v665, %v661
    %v854 = vpack.c.b16 %v666, %v662
    %v855 = vpack.c.b16 %v671, %v667
    %v856 = vpack.c.b16 %v672, %v668
    %v857 = vpack.c.b16 %v673, %v669
    %v858 = vpack.c.b16 %v674, %v670
    %v859 = vpack.c.b16 %v679, %v675
    %v860 = vpack.c.b16 %v680, %v676
    %v861 = vpack.c.b16 %v681, %v677
    %v862 = vpack.c.b16 %v682, %v678
    %v863 = vpack.c.b16 %v687, %v683
    %v864 = vpack.c.b16 %v688, %v684
    %v865 = vpack.c.b16 %v689, %v685
    %v866 = vpack.c.b16 %v690, %v686
    %v867 = vpack.c.b16 %v695, %v691
    %v868 = vpack.c.b16 %v696, %v692
    %v869 = vpack.c.b16 %v697, %v693
    %v870 = vpack.c.b16 %v698, %v694
    %v871 = vpack.c.b16 %v703, %v699
    %v872 = vpack.c.b16 %v704, %v700
    %v873 = vpack.c.b16 %v705, %v701
    %v874 = vpack.c.b16 %v706, %v702
    %v875 = vpack.c.b16 %v711, %v707
    %v876 = vpack.c.b16 %v712, %v708
    %v877 = vpack.c.b16 %v713, %v709
    %v878 = vpack.c.b16 %v714, %v710
    %v879 = vpack.c.b16 %v719, %v715
    %v880 = vpack.c.b16 %v720, %v716
    %v881 = vpack.c.b16 %v721, %v717
    %v882 = vpack.c.b16 %v722, %v718
    %v883 = vpack.c.b16 %v727, %v723
    %v884 = vpack.c.b16 %v728, %v724
    %v885 = vpack.c.b16 %v729, %v725
    %v886 = vpack.c.b16 %v730, %v726
    %v887 = vpack.c.b16 %v735, %v731
    %v888 = vpack.c.b16 %v736, %v732
    %v889 = vpack.c.b16 %v737, %v733
    %v890 = vpack.c.b16 %v738, %v734
    %v891 = vpack.c.b16 %v743, %v739
    %v892 = vpack.c.b16 %v744, %v740
    %v893 = vpack.c.b16 %v745, %v741
    %v894 = vpack.c.b16 %v746, %v742
    %v895 = vpack.c.b16 %v751, %v747
    %v896 = vpack.c.b16 %v752, %v748
    %v897 = vpack.c.b16 %v753, %v749
    %v898 = vpack.c.b16 %v754, %v750
    %v899 = vpack.c.b16 %v759, %v755
    %v900 = vpack.c.b16 %v760, %v756
    %v901 = vpack.c.b16 %v761, %v757
    %v902 = vpack.c.b16 %v762, %v758
    %v903 = vpack.c.b16 %v767, %v763
    %v904 = vpack.c.b16 %v768, %v764
    %v905 = vpack.c.b16 %v769, %v765
    %v906 = vpack.c.b16 %v770, %v766
    %v907 = vpack.c.b16 %v775, %v771
    %v908 = vpack.c.b16 %v776, %v772
    %v909 = vpack.c.b16 %v777, %v773
    %v910 = vpack.c.b16 %v778, %v774
    %v911 = vpack.c.b16 %v783, %v779
    %v912 = vpack.c.b16 %v784, %v780
    %v913 = vpack.c.b16 %v785, %v781
    %v914 = vpack.c.b16 %v786, %v782
    %v1107 = vunpack.c.l.b16 %v339
    %v1108 = vunpack.c.l.b16 %v340
    %v1109 = vunpack.c.l.b16 %v341
    %v1110 = vunpack.c.l.b16 %v342
    %v1111 = vunpack.c.l.b16 %v343
    %v1112 = vunpack.c.l.b16 %v344
    %v1113 = vunpack.c.l.b16 %v345
    %v1114 = vunpack.c.l.b16 %v346
    %v1115 = vunpack.c.l.b16 %v347
    %v1116 = vunpack.c.l.b16 %v348
    %v1117 = vunpack.c.l.b16 %v349
    %v1118 = vunpack.c.l.b16 %v350
    %v1119 = vunpack.c.l.b16 %v351
    %v1120 = vunpack.c.l.b16 %v352
    %v1121 = vunpack.c.l.b16 %v353
    %v1122 = vunpack.c.l.b16 %v354
    %v1123 = vunpack.c.l.b16 %v355
    %v1124 = vunpack.c.l.b16 %v356
    %v1125 = vunpack.c.l.b16 %v357
    %v1126 = vunpack.c.l.b16 %v358
    %v1127 = vunpack.c.l.b16 %v359
    %v1128 = vunpack.c.l.b16 %v360
    %v1129 = vunpack.c.l.b16 %v361
    %v1130 = vunpack.c.l.b16 %v362
    %v1131 = vunpack.c.l.b16 %v363
    %v1132 = vunpack.c.l.b16 %v364
    %v1133 = vunpack.c.l.b16 %v365
    %v1134 = vunpack.c.l.b16 %v366
    %v1135 = vunpack.c.l.b16 %v367
    %v1136 = vunpack.c.l.b16 %v368
    %v1137 = vunpack.c.l.b16 %v369
    %v1138 = vunpack.c.l.b16 %v370
    %v1139 = vunpack.c.l.b16 %v371
    %v1140 = vunpack.c.l.b16 %v372
    %v1141 = vunpack.c.l.b16 %v373
    %v1142 = vunpack.c.l.b16 %v374
    %v1143 = vunpack.c.l.b16 %v375
    %v1144 = vunpack.c.l.b16 %v376
    %v1145 = vunpack.c.l.b16 %v377
    %v1146 = vunpack.c.l.b16 %v378
    %v1147 = vunpack.c.l.b16 %v379
    %v1148 = vunpack.c.l.b16 %v380
    %v1149 = vunpack.c.l.b16 %v381
    %v1150 = vunpack.c.l.b16 %v382
    %v1151 = vunpack.c.l.b16 %v383
    %v1152 = vunpack.c.l.b16 %v384
    %v1153 = vunpack.c.l.b16 %v385
    %v1154 = vunpack.c.l.b16 %v386
    %v1155 = vunpack.c.l.b16 %v387
    %v1156 = vunpack.c.l.b16 %v388
    %v1157 = vunpack.c.l.b16 %v389
    %v1158 = vunpack.c.l.b16 %v390
    %v1159 = vunpack.c.l.b16 %v391
    %v1160 = vunpack.c.l.b16 %v392
    %v1161 = vunpack.c.l.b16 %v393
    %v1162 = vunpack.c.l.b16 %v394
    %v1163 = vunpack.c.l.b16 %v395
    %v1164 = vunpack.c.l.b16 %v396
    %v1165 = vunpack.c.l.b16 %v397
    %v1166 = vunpack.c.l.b16 %v398
    %v1167 = vunpack.c.l.b16 %v399
    %v1168 = vunpack.c.l.b16 %v400
    %v1169 = vunpack.c.l.b16 %v401
    %v1170 = vunpack.c.l.b16 %v402
    %v1171 = vpack.c.b16 %v1108, %v1107
    %v1172 = vpack.c.b16 %v1110, %v1109
    %v1173 = vpack.c.b16 %v1112, %v1111
    %v1174 = vpack.c.b16 %v1114, %v1113
    %v1175 = vpack.c.b16 %v1116, %v1115
    %v1176 = vpack.c.b16 %v1118, %v1117
    %v1177 = vpack.c.b16 %v1120, %v1119
    %v1178 = vpack.c.b16 %v1122, %v1121
    %v1179 = vpack.c.b16 %v1124, %v1123
    %v1180 = vpack.c.b16 %v1126, %v1125
    %v1181 = vpack.c.b16 %v1128, %v1127
    %v1182 = vpack.c.b16 %v1130, %v1129
    %v1183 = vpack.c.b16 %v1132, %v1131
    %v1184 = vpack.c.b16 %v1134, %v1133
    %v1185 = vpack.c.b16 %v1136, %v1135
    %v1186 = vpack.c.b16 %v1138, %v1137
    %v1187 = vpack.c.b16 %v1140, %v1139
    %v1188 = vpack.c.b16 %v1142, %v1141
    %v1189 = vpack.c.b16 %v1144, %v1143
    %v1190 = vpack.c.b16 %v1146, %v1145
    %v1191 = vpack.c.b16 %v1148, %v1147
    %v1192 = vpack.c.b16 %v1150, %v1149
    %v1193 = vpack.c.b16 %v1152, %v1151
    %v1194 = vpack.c.b16 %v1154, %v1153
    %v1195 = vpack.c.b16 %v1156, %v1155
    %v1196 = vpack.c.b16 %v1158, %v1157
    %v1197 = vpack.c.b16 %v1160, %v1159
    %v1198 = vpack.c.b16 %v1162, %v1161
    %v1199 = vpack.c.b16 %v1164, %v1163
    %v1200 = vpack.c.b16 %v1166, %v1165
    %v1201 = vpack.c.b16 %v1168, %v1167
    %v1202 = vpack.c.b16 %v1170, %v1169
    %1235 = vmatprep.subr.bf16.mxu0 0
    %1236 = vmatpush1.bf16.msra.mxu0 %v1171
    %1237 = vmatprep.subr.bf16.mxu0 0
    %1238 = vmatpush1.bf16.msra.mxu0 %v1172
    %1239 = vmatprep.subr.bf16.mxu0 0
    %1240 = vmatpush1.bf16.msra.mxu0 %v1173
    %1241 = vmatprep.subr.bf16.mxu0 0
    %1242 = vmatpush1.bf16.msra.mxu0 %v1174
    %1243 = vmatprep.subr.bf16.mxu0 0
    %1244 = vmatpush1.bf16.msra.mxu0 %v1175
    %1245 = vmatprep.subr.bf16.mxu0 0
    %1246 = vmatpush1.bf16.msra.mxu0 %v1176
    %1247 = vmatprep.subr.bf16.mxu0 0
    %1248 = vmatpush1.bf16.msra.mxu0 %v1177
    %1249 = vmatprep.subr.bf16.mxu0 0
    %1250 = vmatpush1.bf16.msra.mxu0 %v1178
    %1251 = vmatprep.subr.bf16.mxu0 0
    %1252 = vmatpush1.bf16.msra.mxu0 %v1179
    %1253 = vmatprep.subr.bf16.mxu0 0
    %1254 = vmatpush1.bf16.msra.mxu0 %v1180
    %1255 = vmatprep.subr.bf16.mxu0 0
    %1256 = vmatpush1.bf16.msra.mxu0 %v1181
    %1257 = vmatprep.subr.bf16.mxu0 0
    %1258 = vmatpush1.bf16.msra.mxu0 %v1182
    %1259 = vmatprep.subr.bf16.mxu0 0
    %1260 = vmatpush1.bf16.msra.mxu0 %v1183
    %1261 = vmatprep.subr.bf16.mxu0 0
    %1262 = vmatpush1.bf16.msra.mxu0 %v1184
    %1263 = vmatprep.subr.bf16.mxu0 0
    %1264 = vmatpush1.bf16.msra.mxu0 %v1185
    %1265 = vmatprep.subr.bf16.mxu0 0
    %1266 = vmatpush1.bf16.msra.mxu0 %v1186
    %1267 = vmatprep.mubr.bf16.mxu0 %v788
    %1268 = vmatmul.mubr.bf16.gmra.mrb[0].mxu0 %v787
    %v1269 = vpop.f32.mrb[0].mxu0
    %v1270 = vadd.f32 0.0, %v1269
    %v1271 = vpop.f32.mrb[0].mxu0
    %v1272 = vpop.f32.mrb[0].mxu0
    %v1273 = vadd.f32 0.0, %v1272
    %v1274 = vpop.f32.mrb[0].mxu0
    %1275 = vmatprep.mubr.bf16.mxu0 %v792
    %1276 = vmatmul.mubr.bf16.gmra.mrb[0].mxu0 %v791
    %v1277 = vpop.f32.mrb[0].mxu0
    %v1278 = vadd.f32 0.0, %v1277
    %v1279 = vpop.f32.mrb[0].mxu0
    %v1280 = vpop.f32.mrb[0].mxu0
    %v1281 = vadd.f32 0.0, %v1280
    %v1282 = vpop.f32.mrb[0].mxu0
    %1283 = vmatprep.mubr.bf16.mxu0 %v796
    %1284 = vmatmul.mubr.bf16.gmra.mrb[0].mxu0 %v795
    %v1285 = vpop.f32.mrb[0].mxu0
    %v1286 = vadd.f32 0.0, %v1285
    %v1287 = vpop.f32.mrb[0].mxu0
    %v1288 = vpop.f32.mrb[0].mxu0
    %v1289 = vadd.f32 0.0, %v1288
    %v1290 = vpop.f32.mrb[0].mxu0
    %1291 = vmatprep.mubr.bf16.mxu0 %v800
    %1292 = vmatmul.mubr.bf16.gmra.mrb[0].mxu0 %v799
    %v1293 = vpop.f32.mrb[0].mxu0
    %v1294 = vadd.f32 0.0, %v1293
    %v1295 = vpop.f32.mrb[0].mxu0
    %v1296 = vpop.f32.mrb[0].mxu0
    %v1297 = vadd.f32 0.0, %v1296
    %v1298 = vpop.f32.mrb[0].mxu0
    %1299 = vmatprep.mubr.bf16.mxu0 %v804
    %1300 = vmatmul.mubr.bf16.gmra.mrb[0].mxu0 %v803
    %v1301 = vpop.f32.mrb[0].mxu0
    %v1302 = vadd.f32 0.0, %v1301
    %v1303 = vpop.f32.mrb[0].mxu0
    %v1304 = vpop.f32.mrb[0].mxu0
    %v1305 = vadd.f32 0.0, %v1304
    %v1306 = vpop.f32.mrb[0].mxu0
    %1307 = vmatprep.mubr.bf16.mxu0 %v808
    %1308 = vmatmul.mubr.bf16.gmra.mrb[0].mxu0 %v807
    %v1309 = vpop.f32.mrb[0].mxu0
    %v1310 = vadd.f32 0.0, %v1309
    %v1311 = vpop.f32.mrb[0].mxu0
    %v1312 = vpop.f32.mrb[0].mxu0
    %v1313 = vadd.f32 0.0, %v1312
    %v1314 = vpop.f32.mrb[0].mxu0
    %1315 = vmatprep.mubr.bf16.mxu0 %v812
    %1316 = vmatmul.mubr.bf16.gmra.mrb[0].mxu0 %v811
    %v1317 = vpop.f32.mrb[0].mxu0
    %v1318 = vadd.f32 0.0, %v1317
    %v1319 = vpop.f32.mrb[0].mxu0
    %v1320 = vpop.f32.mrb[0].mxu0
    %v1321 = vadd.f32 0.0, %v1320
    %v1322 = vpop.f32.mrb[0].mxu0
    %1323 = vmatprep.mubr.bf16.mxu0 %v816
    %1324 = vmatmul.mubr.bf16.gmra.mrb[0].mxu0 %v815
    %v1325 = vpop.f32.mrb[0].mxu0
    %v1326 = vadd.f32 0.0, %v1325
    %v1327 = vpop.f32.mrb[0].mxu0
    %v1328 = vpop.f32.mrb[0].mxu0
    %v1329 = vadd.f32 0.0, %v1328
    %v1330 = vpop.f32.mrb[0].mxu0
    %1331 = vmatprep.mubr.bf16.mxu0 %v820
    %1332 = vmatmul.mubr.bf16.gmra.mrb[0].mxu0 %v819
    %v1333 = vpop.f32.mrb[0].mxu0
    %v1334 = vadd.f32 0.0, %v1333
    %v1335 = vpop.f32.mrb[0].mxu0
    %v1336 = vpop.f32.mrb[0].mxu0
    %v1337 = vadd.f32 0.0, %v1336
    %v1338 = vpop.f32.mrb[0].mxu0
    %1339 = vmatprep.mubr.bf16.mxu0 %v824
    %1340 = vmatmul.mubr.bf16.gmra.mrb[0].mxu0 %v823
    %v1341 = vpop.f32.mrb[0].mxu0
    %v1342 = vadd.f32 0.0, %v1341
    %v1343 = vpop.f32.mrb[0].mxu0
    %v1344 = vpop.f32.mrb[0].mxu0
    %v1345 = vadd.f32 0.0, %v1344
    %v1346 = vpop.f32.mrb[0].mxu0
    %1347 = vmatprep.mubr.bf16.mxu0 %v828
    %1348 = vmatmul.mubr.bf16.gmra.mrb[0].mxu0 %v827
    %v1349 = vpop.f32.mrb[0].mxu0
    %v1350 = vadd.f32 0.0, %v1349
    %v1351 = vpop.f32.mrb[0].mxu0
    %v1352 = vpop.f32.mrb[0].mxu0
    %v1353 = vadd.f32 0.0, %v1352
    %v1354 = vpop.f32.mrb[0].mxu0
    %1355 = vmatprep.mubr.bf16.mxu0 %v832
    %1356 = vmatmul.mubr.bf16.gmra.mrb[0].mxu0 %v831
    %v1357 = vpop.f32.mrb[0].mxu0
    %v1358 = vadd.f32 0.0, %v1357
    %v1359 = vpop.f32.mrb[0].mxu0
    %v1360 = vpop.f32.mrb[0].mxu0
    %v1361 = vadd.f32 0.0, %v1360
    %v1362 = vpop.f32.mrb[0].mxu0
    %1363 = vmatprep.mubr.bf16.mxu0 %v836
    %1364 = vmatmul.mubr.bf16.gmra.mrb[0].mxu0 %v835
    %v1365 = vpop.f32.mrb[0].mxu0
    %v1366 = vadd.f32 0.0, %v1365
    %v1367 = vpop.f32.mrb[0].mxu0
    %v1368 = vpop.f32.mrb[0].mxu0
    %v1369 = vadd.f32 0.0, %v1368
    %v1370 = vpop.f32.mrb[0].mxu0
    %1371 = vmatprep.mubr.bf16.mxu0 %v840
    %1372 = vmatmul.mubr.bf16.gmra.mrb[0].mxu0 %v839
    %v1373 = vpop.f32.mrb[0].mxu0
    %v1374 = vadd.f32 0.0, %v1373
    %v1375 = vpop.f32.mrb[0].mxu0
    %v1376 = vpop.f32.mrb[0].mxu0
    %v1377 = vadd.f32 0.0, %v1376
    %v1378 = vpop.f32.mrb[0].mxu0
    %1379 = vmatprep.mubr.bf16.mxu0 %v844
    %1380 = vmatmul.mubr.bf16.gmra.mrb[0].mxu0 %v843
    %v1381 = vpop.f32.mrb[0].mxu0
    %v1382 = vadd.f32 0.0, %v1381
    %v1383 = vpop.f32.mrb[0].mxu0
    %v1384 = vpop.f32.mrb[0].mxu0
    %v1385 = vadd.f32 0.0, %v1384
    %v1386 = vpop.f32.mrb[0].mxu0
    %1387 = vmatprep.mubr.bf16.mxu0 %v848
    %1388 = vmatmul.mubr.bf16.gmra.mrb[0].mxu0 %v847
    %v1389 = vpop.f32.mrb[0].mxu0
    %v1390 = vadd.f32 0.0, %v1389
    %v1391 = vpop.f32.mrb[0].mxu0
    %v1392 = vpop.f32.mrb[0].mxu0
    %v1393 = vadd.f32 0.0, %v1392
    %v1394 = vpop.f32.mrb[0].mxu0
    %1395 = vmatprep.mubr.bf16.mxu0 %v852
    %1396 = vmatmul.mubr.bf16.gmra.mrb[0].mxu0 %v851
    %v1397 = vpop.f32.mrb[0].mxu0
    %v1398 = vadd.f32 0.0, %v1397
    %v1399 = vpop.f32.mrb[0].mxu0
    %v1400 = vpop.f32.mrb[0].mxu0
    %v1401 = vadd.f32 0.0, %v1400
    %v1402 = vpop.f32.mrb[0].mxu0
    %1403 = vmatprep.mubr.bf16.mxu0 %v856
    %1404 = vmatmul.mubr.bf16.gmra.mrb[0].mxu0 %v855
    %v1405 = vpop.f32.mrb[0].mxu0
    %v1406 = vadd.f32 0.0, %v1405
    %v1407 = vpop.f32.mrb[0].mxu0
    %v1408 = vpop.f32.mrb[0].mxu0
    %v1409 = vadd.f32 0.0, %v1408
    %v1410 = vpop.f32.mrb[0].mxu0
    %1411 = vmatprep.mubr.bf16.mxu0 %v860
    %1412 = vmatmul.mubr.bf16.gmra.mrb[0].mxu0 %v859
    %v1413 = vpop.f32.mrb[0].mxu0
    %v1414 = vadd.f32 0.0, %v1413
    %v1415 = vpop.f32.mrb[0].mxu0
    %v1416 = vpop.f32.mrb[0].mxu0
    %v1417 = vadd.f32 0.0, %v1416
    %v1418 = vpop.f32.mrb[0].mxu0
    %1419 = vmatprep.mubr.bf16.mxu0 %v864
    %1420 = vmatmul.mubr.bf16.gmra.mrb[0].mxu0 %v863
    %v1421 = vpop.f32.mrb[0].mxu0
    %v1422 = vadd.f32 0.0, %v1421
    %v1423 = vpop.f32.mrb[0].mxu0
    %v1424 = vpop.f32.mrb[0].mxu0
    %v1425 = vadd.f32 0.0, %v1424
    %v1426 = vpop.f32.mrb[0].mxu0
    %1427 = vmatprep.mubr.bf16.mxu0 %v868
    %1428 = vmatmul.mubr.bf16.gmra.mrb[0].mxu0 %v867
    %v1429 = vpop.f32.mrb[0].mxu0
    %v1430 = vadd.f32 0.0, %v1429
    %v1431 = vpop.f32.mrb[0].mxu0
    %v1432 = vpop.f32.mrb[0].mxu0
    %v1433 = vadd.f32 0.0, %v1432
    %v1434 = vpop.f32.mrb[0].mxu0
    %1435 = vmatprep.mubr.bf16.mxu0 %v872
    %1436 = vmatmul.mubr.bf16.gmra.mrb[0].mxu0 %v871
    %v1437 = vpop.f32.mrb[0].mxu0
    %v1438 = vadd.f32 0.0, %v1437
    %v1439 = vpop.f32.mrb[0].mxu0
    %v1440 = vpop.f32.mrb[0].mxu0
    %v1441 = vadd.f32 0.0, %v1440
    %v1442 = vpop.f32.mrb[0].mxu0
    %1443 = vmatprep.mubr.bf16.mxu0 %v876
    %1444 = vmatmul.mubr.bf16.gmra.mrb[0].mxu0 %v875
    %v1445 = vpop.f32.mrb[0].mxu0
    %v1446 = vadd.f32 0.0, %v1445
    %v1447 = vpop.f32.mrb[0].mxu0
    %v1448 = vpop.f32.mrb[0].mxu0
    %v1449 = vadd.f32 0.0, %v1448
    %v1450 = vpop.f32.mrb[0].mxu0
    %1451 = vmatprep.mubr.bf16.mxu0 %v880
    %1452 = vmatmul.mubr.bf16.gmra.mrb[0].mxu0 %v879
    %v1453 = vpop.f32.mrb[0].mxu0
    %v1454 = vadd.f32 0.0, %v1453
    %v1455 = vpop.f32.mrb[0].mxu0
    %v1456 = vpop.f32.mrb[0].mxu0
    %v1457 = vadd.f32 0.0, %v1456
    %v1458 = vpop.f32.mrb[0].mxu0
    %1459 = vmatprep.mubr.bf16.mxu0 %v884
    %1460 = vmatmul.mubr.bf16.gmra.mrb[0].mxu0 %v883
    %v1461 = vpop.f32.mrb[0].mxu0
    %v1462 = vadd.f32 0.0, %v1461
    %v1463 = vpop.f32.mrb[0].mxu0
    %v1464 = vpop.f32.mrb[0].mxu0
    %v1465 = vadd.f32 0.0, %v1464
    %v1466 = vpop.f32.mrb[0].mxu0
    %1467 = vmatprep.mubr.bf16.mxu0 %v888
    %1468 = vmatmul.mubr.bf16.gmra.mrb[0].mxu0 %v887
    %v1469 = vpop.f32.mrb[0].mxu0
    %v1470 = vadd.f32 0.0, %v1469
    %v1471 = vpop.f32.mrb[0].mxu0
    %v1472 = vpop.f32.mrb[0].mxu0
    %v1473 = vadd.f32 0.0, %v1472
    %v1474 = vpop.f32.mrb[0].mxu0
    %1475 = vmatprep.mubr.bf16.mxu0 %v892
    %1476 = vmatmul.mubr.bf16.gmra.mrb[0].mxu0 %v891
    %v1477 = vpop.f32.mrb[0].mxu0
    %v1478 = vadd.f32 0.0, %v1477
    %v1479 = vpop.f32.mrb[0].mxu0
    %v1480 = vpop.f32.mrb[0].mxu0
    %v1481 = vadd.f32 0.0, %v1480
    %v1482 = vpop.f32.mrb[0].mxu0
    %1483 = vmatprep.mubr.bf16.mxu0 %v896
    %1484 = vmatmul.mubr.bf16.gmra.mrb[0].mxu0 %v895
    %v1485 = vpop.f32.mrb[0].mxu0
    %v1486 = vadd.f32 0.0, %v1485
    %v1487 = vpop.f32.mrb[0].mxu0
    %v1488 = vpop.f32.mrb[0].mxu0
    %v1489 = vadd.f32 0.0, %v1488
    %v1490 = vpop.f32.mrb[0].mxu0
    %1491 = vmatprep.mubr.bf16.mxu0 %v900
    %1492 = vmatmul.mubr.bf16.gmra.mrb[0].mxu0 %v899
    %v1493 = vpop.f32.mrb[0].mxu0
    %v1494 = vadd.f32 0.0, %v1493
    %v1495 = vpop.f32.mrb[0].mxu0
    %v1496 = vpop.f32.mrb[0].mxu0
    %v1497 = vadd.f32 0.0, %v1496
    %v1498 = vpop.f32.mrb[0].mxu0
    %1499 = vmatprep.mubr.bf16.mxu0 %v904
    %1500 = vmatmul.mubr.bf16.gmra.mrb[0].mxu0 %v903
    %v1501 = vpop.f32.mrb[0].mxu0
    %v1502 = vadd.f32 0.0, %v1501
    %v1503 = vpop.f32.mrb[0].mxu0
    %v1504 = vpop.f32.mrb[0].mxu0
    %v1505 = vadd.f32 0.0, %v1504
    %v1506 = vpop.f32.mrb[0].mxu0
    %1507 = vmatprep.mubr.bf16.mxu0 %v908
    %1508 = vmatmul.mubr.bf16.gmra.mrb[0].mxu0 %v907
    %v1509 = vpop.f32.mrb[0].mxu0
    %v1510 = vadd.f32 0.0, %v1509
    %v1511 = vpop.f32.mrb[0].mxu0
    %v1512 = vpop.f32.mrb[0].mxu0
    %v1513 = vadd.f32 0.0, %v1512
    %v1514 = vpop.f32.mrb[0].mxu0
    %1515 = vmatprep.mubr.bf16.mxu0 %v912
    %1516 = vmatmul.mubr.bf16.gmra.mrb[0].mxu0 %v911
    %v1517 = vpop.f32.mrb[0].mxu0
    %v1518 = vadd.f32 0.0, %v1517
    %v1519 = vpop.f32.mrb[0].mxu0
    %v1520 = vpop.f32.mrb[0].mxu0
    %v1521 = vadd.f32 0.0, %v1520
    %v1522 = vpop.f32.mrb[0].mxu0
    %1523 = vdwg.mxu0
    %1524 = vmatprep.subr.bf16.mxu0 0
    %1525 = vmatpush1.bf16.msra.mxu0 %v1187
    %1526 = vmatprep.subr.bf16.mxu0 0
    %1527 = vmatpush1.bf16.msra.mxu0 %v1188
    %1528 = vmatprep.subr.bf16.mxu0 0
    %1529 = vmatpush1.bf16.msra.mxu0 %v1189
    %1530 = vmatprep.subr.bf16.mxu0 0
    %1531 = vmatpush1.bf16.msra.mxu0 %v1190
    %1532 = vmatprep.subr.bf16.mxu0 0
    %1533 = vmatpush1.bf16.msra.mxu0 %v1191
    %1534 = vmatprep.subr.bf16.mxu0 0
    %1535 = vmatpush1.bf16.msra.mxu0 %v1192
    %1536 = vmatprep.subr.bf16.mxu0 0
    %1537 = vmatpush1.bf16.msra.mxu0 %v1193
    %1538 = vmatprep.subr.bf16.mxu0 0
    %1539 = vmatpush1.bf16.msra.mxu0 %v1194
    %1540 = vmatprep.subr.bf16.mxu0 0
    %1541 = vmatpush1.bf16.msra.mxu0 %v1195
    %1542 = vmatprep.subr.bf16.mxu0 0
    %1543 = vmatpush1.bf16.msra.mxu0 %v1196
    %1544 = vmatprep.subr.bf16.mxu0 0
    %1545 = vmatpush1.bf16.msra.mxu0 %v1197
    %1546 = vmatprep.subr.bf16.mxu0 0
    %1547 = vmatpush1.bf16.msra.mxu0 %v1198
    %1548 = vmatprep.subr.bf16.mxu0 0
    %1549 = vmatpush1.bf16.msra.mxu0 %v1199
    %1550 = vmatprep.subr.bf16.mxu0 0
    %1551 = vmatpush1.bf16.msra.mxu0 %v1200
    %1552 = vmatprep.subr.bf16.mxu0 0
    %1553 = vmatpush1.bf16.msra.mxu0 %v1201
    %1554 = vmatprep.subr.bf16.mxu0 0
    %1555 = vmatpush1.bf16.msra.mxu0 %v1202
    %1556 = vmatprep.mubr.bf16.mxu0 %v790
    %1557 = vmatmul.mubr.bf16.gmra.mrb[0].mxu0 %v789
    %v1558 = vpop.f32.mrb[0].mxu0
    %v1559 = vadd.f32 %v1270, %v1558
    %v1560 = vpop.f32.mrb[0].mxu0
    %v1561 = vpop.f32.mrb[0].mxu0
    %v1562 = vadd.f32 %v1273, %v1561
    %v1563 = vpop.f32.mrb[0].mxu0
    %1564 = vmatprep.mubr.bf16.mxu0 %v794
    %1565 = vmatmul.mubr.bf16.gmra.mrb[0].mxu0 %v793
    %v1566 = vpop.f32.mrb[0].mxu0
    %v1567 = vadd.f32 %v1278, %v1566
    %v1568 = vpop.f32.mrb[0].mxu0
    %v1569 = vpop.f32.mrb[0].mxu0
    %v1570 = vadd.f32 %v1281, %v1569
    %v1571 = vpop.f32.mrb[0].mxu0
    %1572 = vmatprep.mubr.bf16.mxu0 %v798
    %1573 = vmatmul.mubr.bf16.gmra.mrb[0].mxu0 %v797
    %v1574 = vpop.f32.mrb[0].mxu0
    %v1575 = vadd.f32 %v1286, %v1574
    %v1576 = vpop.f32.mrb[0].mxu0
    %v1577 = vpop.f32.mrb[0].mxu0
    %v1578 = vadd.f32 %v1289, %v1577
    %v1579 = vpop.f32.mrb[0].mxu0
    %1580 = vmatprep.mubr.bf16.mxu0 %v802
    %1581 = vmatmul.mubr.bf16.gmra.mrb[0].mxu0 %v801
    %v1582 = vpop.f32.mrb[0].mxu0
    %v1583 = vadd.f32 %v1294, %v1582
    %v1584 = vpop.f32.mrb[0].mxu0
    %v1585 = vpop.f32.mrb[0].mxu0
    %v1586 = vadd.f32 %v1297, %v1585
    %v1587 = vpop.f32.mrb[0].mxu0
    %1588 = vmatprep.mubr.bf16.mxu0 %v806
    %1589 = vmatmul.mubr.bf16.gmra.mrb[0].mxu0 %v805
    %v1590 = vpop.f32.mrb[0].mxu0
    %v1591 = vadd.f32 %v1302, %v1590
    %v1592 = vpop.f32.mrb[0].mxu0
    %v1593 = vpop.f32.mrb[0].mxu0
    %v1594 = vadd.f32 %v1305, %v1593
    %v1595 = vpop.f32.mrb[0].mxu0
    %1596 = vmatprep.mubr.bf16.mxu0 %v810
    %1597 = vmatmul.mubr.bf16.gmra.mrb[0].mxu0 %v809
    %v1598 = vpop.f32.mrb[0].mxu0
    %v1599 = vadd.f32 %v1310, %v1598
    %v1600 = vpop.f32.mrb[0].mxu0
    %v1601 = vpop.f32.mrb[0].mxu0
    %v1602 = vadd.f32 %v1313, %v1601
    %v1603 = vpop.f32.mrb[0].mxu0
    %1604 = vmatprep.mubr.bf16.mxu0 %v814
    %1605 = vmatmul.mubr.bf16.gmra.mrb[0].mxu0 %v813
    %v1606 = vpop.f32.mrb[0].mxu0
    %v1607 = vadd.f32 %v1318, %v1606
    %v1608 = vpop.f32.mrb[0].mxu0
    %v1609 = vpop.f32.mrb[0].mxu0
    %v1610 = vadd.f32 %v1321, %v1609
    %v1611 = vpop.f32.mrb[0].mxu0
    %1612 = vmatprep.mubr.bf16.mxu0 %v818
    %1613 = vmatmul.mubr.bf16.gmra.mrb[0].mxu0 %v817
    %v1614 = vpop.f32.mrb[0].mxu0
    %v1615 = vadd.f32 %v1326, %v1614
    %v1616 = vpop.f32.mrb[0].mxu0
    %v1617 = vpop.f32.mrb[0].mxu0
    %v1618 = vadd.f32 %v1329, %v1617
    %v1619 = vpop.f32.mrb[0].mxu0
    %1620 = vmatprep.mubr.bf16.mxu0 %v822
    %1621 = vmatmul.mubr.bf16.gmra.mrb[0].mxu0 %v821
    %v1622 = vpop.f32.mrb[0].mxu0
    %v1623 = vadd.f32 %v1334, %v1622
    %v1624 = vpop.f32.mrb[0].mxu0
    %v1625 = vpop.f32.mrb[0].mxu0
    %v1626 = vadd.f32 %v1337, %v1625
    %v1627 = vpop.f32.mrb[0].mxu0
    %1628 = vmatprep.mubr.bf16.mxu0 %v826
    %1629 = vmatmul.mubr.bf16.gmra.mrb[0].mxu0 %v825
    %v1630 = vpop.f32.mrb[0].mxu0
    %v1631 = vadd.f32 %v1342, %v1630
    %v1632 = vpop.f32.mrb[0].mxu0
    %v1633 = vpop.f32.mrb[0].mxu0
    %v1634 = vadd.f32 %v1345, %v1633
    %v1635 = vpop.f32.mrb[0].mxu0
    %1636 = vmatprep.mubr.bf16.mxu0 %v830
    %1637 = vmatmul.mubr.bf16.gmra.mrb[0].mxu0 %v829
    %v1638 = vpop.f32.mrb[0].mxu0
    %v1639 = vadd.f32 %v1350, %v1638
    %v1640 = vpop.f32.mrb[0].mxu0
    %v1641 = vpop.f32.mrb[0].mxu0
    %v1642 = vadd.f32 %v1353, %v1641
    %v1643 = vpop.f32.mrb[0].mxu0
    %1644 = vmatprep.mubr.bf16.mxu0 %v834
    %1645 = vmatmul.mubr.bf16.gmra.mrb[0].mxu0 %v833
    %v1646 = vpop.f32.mrb[0].mxu0
    %v1647 = vadd.f32 %v1358, %v1646
    %v1648 = vpop.f32.mrb[0].mxu0
    %v1649 = vpop.f32.mrb[0].mxu0
    %v1650 = vadd.f32 %v1361, %v1649
    %v1651 = vpop.f32.mrb[0].mxu0
    %1652 = vmatprep.mubr.bf16.mxu0 %v838
    %1653 = vmatmul.mubr.bf16.gmra.mrb[0].mxu0 %v837
    %v1654 = vpop.f32.mrb[0].mxu0
    %v1655 = vadd.f32 %v1366, %v1654
    %v1656 = vpop.f32.mrb[0].mxu0
    %v1657 = vpop.f32.mrb[0].mxu0
    %v1658 = vadd.f32 %v1369, %v1657
    %v1659 = vpop.f32.mrb[0].mxu0
    %1660 = vmatprep.mubr.bf16.mxu0 %v842
    %1661 = vmatmul.mubr.bf16.gmra.mrb[0].mxu0 %v841
    %v1662 = vpop.f32.mrb[0].mxu0
    %v1663 = vadd.f32 %v1374, %v1662
    %v1664 = vpop.f32.mrb[0].mxu0
    %v1665 = vpop.f32.mrb[0].mxu0
    %v1666 = vadd.f32 %v1377, %v1665
    %v1667 = vpop.f32.mrb[0].mxu0
    %1668 = vmatprep.mubr.bf16.mxu0 %v846
    %1669 = vmatmul.mubr.bf16.gmra.mrb[0].mxu0 %v845
    %v1670 = vpop.f32.mrb[0].mxu0
    %v1671 = vadd.f32 %v1382, %v1670
    %v1672 = vpop.f32.mrb[0].mxu0
    %v1673 = vpop.f32.mrb[0].mxu0
    %v1674 = vadd.f32 %v1385, %v1673
    %v1675 = vpop.f32.mrb[0].mxu0
    %1676 = vmatprep.mubr.bf16.mxu0 %v850
    %1677 = vmatmul.mubr.bf16.gmra.mrb[0].mxu0 %v849
    %v1678 = vpop.f32.mrb[0].mxu0
    %v1679 = vadd.f32 %v1390, %v1678
    %v1680 = vpop.f32.mrb[0].mxu0
    %v1681 = vpop.f32.mrb[0].mxu0
    %v1682 = vadd.f32 %v1393, %v1681
    %v1683 = vpop.f32.mrb[0].mxu0
    %1684 = vmatprep.mubr.bf16.mxu0 %v854
    %1685 = vmatmul.mubr.bf16.gmra.mrb[0].mxu0 %v853
    %v1686 = vpop.f32.mrb[0].mxu0
    %v1687 = vadd.f32 %v1398, %v1686
    %v1688 = vpop.f32.mrb[0].mxu0
    %v1689 = vpop.f32.mrb[0].mxu0
    %v1690 = vadd.f32 %v1401, %v1689
    %v1691 = vpop.f32.mrb[0].mxu0
    %1692 = vmatprep.mubr.bf16.mxu0 %v858
    %1693 = vmatmul.mubr.bf16.gmra.mrb[0].mxu0 %v857
    %v1694 = vpop.f32.mrb[0].mxu0
    %v1695 = vadd.f32 %v1406, %v1694
    %v1696 = vpop.f32.mrb[0].mxu0
    %v1697 = vpop.f32.mrb[0].mxu0
    %v1698 = vadd.f32 %v1409, %v1697
    %v1699 = vpop.f32.mrb[0].mxu0
    %1700 = vmatprep.mubr.bf16.mxu0 %v862
    %1701 = vmatmul.mubr.bf16.gmra.mrb[0].mxu0 %v861
    %v1702 = vpop.f32.mrb[0].mxu0
    %v1703 = vadd.f32 %v1414, %v1702
    %v1704 = vpop.f32.mrb[0].mxu0
    %v1705 = vpop.f32.mrb[0].mxu0
    %v1706 = vadd.f32 %v1417, %v1705
    %v1707 = vpop.f32.mrb[0].mxu0
    %1708 = vmatprep.mubr.bf16.mxu0 %v866
    %1709 = vmatmul.mubr.bf16.gmra.mrb[0].mxu0 %v865
    %v1710 = vpop.f32.mrb[0].mxu0
    %v1711 = vadd.f32 %v1422, %v1710
    %v1712 = vpop.f32.mrb[0].mxu0
    %v1713 = vpop.f32.mrb[0].mxu0
    %v1714 = vadd.f32 %v1425, %v1713
    %v1715 = vpop.f32.mrb[0].mxu0
    %1716 = vmatprep.mubr.bf16.mxu0 %v870
    %1717 = vmatmul.mubr.bf16.gmra.mrb[0].mxu0 %v869
    %v1718 = vpop.f32.mrb[0].mxu0
    %v1719 = vadd.f32 %v1430, %v1718
    %v1720 = vpop.f32.mrb[0].mxu0
    %v1721 = vpop.f32.mrb[0].mxu0
    %v1722 = vadd.f32 %v1433, %v1721
    %v1723 = vpop.f32.mrb[0].mxu0
    %1724 = vmatprep.mubr.bf16.mxu0 %v874
    %1725 = vmatmul.mubr.bf16.gmra.mrb[0].mxu0 %v873
    %v1726 = vpop.f32.mrb[0].mxu0
    %v1727 = vadd.f32 %v1438, %v1726
    %v1728 = vpop.f32.mrb[0].mxu0
    %v1729 = vpop.f32.mrb[0].mxu0
    %v1730 = vadd.f32 %v1441, %v1729
    %v1731 = vpop.f32.mrb[0].mxu0
    %1732 = vmatprep.mubr.bf16.mxu0 %v878
    %1733 = vmatmul.mubr.bf16.gmra.mrb[0].mxu0 %v877
    %v1734 = vpop.f32.mrb[0].mxu0
    %v1735 = vadd.f32 %v1446, %v1734
    %v1736 = vpop.f32.mrb[0].mxu0
    %v1737 = vpop.f32.mrb[0].mxu0
    %v1738 = vadd.f32 %v1449, %v1737
    %v1739 = vpop.f32.mrb[0].mxu0
    %1740 = vmatprep.mubr.bf16.mxu0 %v882
    %1741 = vmatmul.mubr.bf16.gmra.mrb[0].mxu0 %v881
    %v1742 = vpop.f32.mrb[0].mxu0
    %v1743 = vadd.f32 %v1454, %v1742
    %v1744 = vpop.f32.mrb[0].mxu0
    %v1745 = vpop.f32.mrb[0].mxu0
    %v1746 = vadd.f32 %v1457, %v1745
    %v1747 = vpop.f32.mrb[0].mxu0
    %1748 = vmatprep.mubr.bf16.mxu0 %v886
    %1749 = vmatmul.mubr.bf16.gmra.mrb[0].mxu0 %v885
    %v1750 = vpop.f32.mrb[0].mxu0
    %v1751 = vadd.f32 %v1462, %v1750
    %v1752 = vpop.f32.mrb[0].mxu0
    %v1753 = vpop.f32.mrb[0].mxu0
    %v1754 = vadd.f32 %v1465, %v1753
    %v1755 = vpop.f32.mrb[0].mxu0
    %1756 = vmatprep.mubr.bf16.mxu0 %v890
    %1757 = vmatmul.mubr.bf16.gmra.mrb[0].mxu0 %v889
    %v1758 = vpop.f32.mrb[0].mxu0
    %v1759 = vadd.f32 %v1470, %v1758
    %v1760 = vpop.f32.mrb[0].mxu0
    %v1761 = vpop.f32.mrb[0].mxu0
    %v1762 = vadd.f32 %v1473, %v1761
    %v1763 = vpop.f32.mrb[0].mxu0
    %1764 = vmatprep.mubr.bf16.mxu0 %v894
    %1765 = vmatmul.mubr.bf16.gmra.mrb[0].mxu0 %v893
    %v1766 = vpop.f32.mrb[0].mxu0
    %v1767 = vadd.f32 %v1478, %v1766
    %v1768 = vpop.f32.mrb[0].mxu0
    %v1769 = vpop.f32.mrb[0].mxu0
    %v1770 = vadd.f32 %v1481, %v1769
    %v1771 = vpop.f32.mrb[0].mxu0
    %1772 = vmatprep.mubr.bf16.mxu0 %v898
    %1773 = vmatmul.mubr.bf16.gmra.mrb[0].mxu0 %v897
    %v1774 = vpop.f32.mrb[0].mxu0
    %v1775 = vadd.f32 %v1486, %v1774
    %v1776 = vpop.f32.mrb[0].mxu0
    %v1777 = vpop.f32.mrb[0].mxu0
    %v1778 = vadd.f32 %v1489, %v1777
    %v1779 = vpop.f32.mrb[0].mxu0
    %1780 = vmatprep.mubr.bf16.mxu0 %v902
    %1781 = vmatmul.mubr.bf16.gmra.mrb[0].mxu0 %v901
    %v1782 = vpop.f32.mrb[0].mxu0
    %v1783 = vadd.f32 %v1494, %v1782
    %v1784 = vpop.f32.mrb[0].mxu0
    %v1785 = vpop.f32.mrb[0].mxu0
    %v1786 = vadd.f32 %v1497, %v1785
    %v1787 = vpop.f32.mrb[0].mxu0
    %1788 = vmatprep.mubr.bf16.mxu0 %v906
    %1789 = vmatmul.mubr.bf16.gmra.mrb[0].mxu0 %v905
    %v1790 = vpop.f32.mrb[0].mxu0
    %v1791 = vadd.f32 %v1502, %v1790
    %v1792 = vpop.f32.mrb[0].mxu0
    %v1793 = vpop.f32.mrb[0].mxu0
    %v1794 = vadd.f32 %v1505, %v1793
    %v1795 = vpop.f32.mrb[0].mxu0
    %1796 = vmatprep.mubr.bf16.mxu0 %v910
    %1797 = vmatmul.mubr.bf16.gmra.mrb[0].mxu0 %v909
    %v1798 = vpop.f32.mrb[0].mxu0
    %v1799 = vadd.f32 %v1510, %v1798
    %v1800 = vpop.f32.mrb[0].mxu0
    %v1801 = vpop.f32.mrb[0].mxu0
    %v1802 = vadd.f32 %v1513, %v1801
    %v1803 = vpop.f32.mrb[0].mxu0
    %1804 = vmatprep.mubr.bf16.mxu0 %v914
    %1805 = vmatmul.mubr.bf16.gmra.mrb[0].mxu0 %v913
    %v1806 = vpop.f32.mrb[0].mxu0
    %v1807 = vadd.f32 %v1518, %v1806
    %v1808 = vpop.f32.mrb[0].mxu0
    %v1809 = vpop.f32.mrb[0].mxu0
    %v1810 = vadd.f32 %v1521, %v1809
    %v1811 = vpop.f32.mrb[0].mxu0
    %1812 = vdwg.mxu0
    %v1813 = vadd.f32 %v147, %v1559
    %v1814 = vadd.f32 %v148, %v1562
    %v1815 = vadd.f32 %v149, %v1567
    %v1816 = vadd.f32 %v150, %v1570
    %v1817 = vadd.f32 %v151, %v1575
    %v1818 = vadd.f32 %v152, %v1578
    %v1819 = vadd.f32 %v153, %v1583
    %v1820 = vadd.f32 %v154, %v1586
    %v1821 = vadd.f32 %v155, %v1591
    %v1822 = vadd.f32 %v156, %v1594
    %v1823 = vadd.f32 %v157, %v1599
    %v1824 = vadd.f32 %v158, %v1602
    %v1825 = vadd.f32 %v159, %v1607
    %v1826 = vadd.f32 %v160, %v1610
    %v1827 = vadd.f32 %v161, %v1615
    %v1828 = vadd.f32 %v162, %v1618
    %v1829 = vadd.f32 %v163, %v1623
    %v1830 = vadd.f32 %v164, %v1626
    %v1831 = vadd.f32 %v165, %v1631
    %v1832 = vadd.f32 %v166, %v1634
    %v1833 = vadd.f32 %v167, %v1639
    %v1834 = vadd.f32 %v168, %v1642
    %v1835 = vadd.f32 %v169, %v1647
    %v1836 = vadd.f32 %v170, %v1650
    %v1837 = vadd.f32 %v171, %v1655
    %v1838 = vadd.f32 %v172, %v1658
    %v1839 = vadd.f32 %v173, %v1663
    %v1840 = vadd.f32 %v174, %v1666
    %v1841 = vadd.f32 %v175, %v1671
    %v1842 = vadd.f32 %v176, %v1674
    %v1843 = vadd.f32 %v177, %v1679
    %v1844 = vadd.f32 %v178, %v1682
    %v1845 = vadd.f32 %v179, %v1687
    %v1846 = vadd.f32 %v180, %v1690
    %v1847 = vadd.f32 %v181, %v1695
    %v1848 = vadd.f32 %v182, %v1698
    %v1849 = vadd.f32 %v183, %v1703
    %v1850 = vadd.f32 %v184, %v1706
    %v1851 = vadd.f32 %v185, %v1711
    %v1852 = vadd.f32 %v186, %v1714
    %v1853 = vadd.f32 %v187, %v1719
    %v1854 = vadd.f32 %v188, %v1722
    %v1855 = vadd.f32 %v189, %v1727
    %v1856 = vadd.f32 %v190, %v1730
    %v1857 = vadd.f32 %v191, %v1735
    %v1858 = vadd.f32 %v192, %v1738
    %v1859 = vadd.f32 %v193, %v1743
    %v1860 = vadd.f32 %v194, %v1746
    %v1861 = vadd.f32 %v195, %v1751
    %v1862 = vadd.f32 %v196, %v1754
    %v1863 = vadd.f32 %v197, %v1759
    %v1864 = vadd.f32 %v198, %v1762
    %v1865 = vadd.f32 %v199, %v1767
    %v1866 = vadd.f32 %v200, %v1770
    %v1867 = vadd.f32 %v201, %v1775
    %v1868 = vadd.f32 %v202, %v1778
    %v1869 = vadd.f32 %v203, %v1783
    %v1870 = vadd.f32 %v204, %v1786
    %v1871 = vadd.f32 %v205, %v1791
    %v1872 = vadd.f32 %v206, %v1794
    %v1873 = vadd.f32 %v207, %v1799
    %v1874 = vadd.f32 %v208, %v1802
    %v1875 = vadd.f32 %v209, %v1807
    %v1876 = vadd.f32 %v210, %v1810
    %1877 = vst [vmem:[#allocation2] sm:$0xff] %v1813
    %1878 = vst [vmem:[#allocation2 + $0x8] sm:$0xff] %v1814
    %1879 = vst [vmem:[#allocation2 + $0x10] sm:$0xff] %v1815
    %1880 = vst [vmem:[#allocation2 + $0x18] sm:$0xff] %v1816
    %1881 = vst [vmem:[#allocation2 + $0x20] sm:$0xff] %v1817
    %1882 = vst [vmem:[#allocation2 + $0x28] sm:$0xff] %v1818
    %1883 = vst [vmem:[#allocation2 + $0x30] sm:$0xff] %v1819
    %1884 = vst [vmem:[#allocation2 + $0x38] sm:$0xff] %v1820
    %1885 = vst [vmem:[#allocation2 + $0x40] sm:$0xff] %v1821
    %1886 = vst [vmem:[#allocation2 + $0x48] sm:$0xff] %v1822
    %1887 = vst [vmem:[#allocation2 + $0x50] sm:$0xff] %v1823
    %1888 = vst [vmem:[#allocation2 + $0x58] sm:$0xff] %v1824
    %1889 = vst [vmem:[#allocation2 + $0x60] sm:$0xff] %v1825
    %1890 = vst [vmem:[#allocation2 + $0x68] sm:$0xff] %v1826
    %1891 = vst [vmem:[#allocation2 + $0x70] sm:$0xff] %v1827
    %1892 = vst [vmem:[#allocation2 + $0x78] sm:$0xff] %v1828
    %1893 = vst [vmem:[#allocation2 + $0x80] sm:$0xff] %v1829
    %1894 = vst [vmem:[#allocation2 + $0x88] sm:$0xff] %v1830
    %1895 = vst [vmem:[#allocation2 + $0x90] sm:$0xff] %v1831
    %1896 = vst [vmem:[#allocation2 + $0x98] sm:$0xff] %v1832
    %1897 = vst [vmem:[#allocation2 + $0xa0] sm:$0xff] %v1833
    %1898 = vst [vmem:[#allocation2 + $0xa8] sm:$0xff] %v1834
    %1899 = vst [vmem:[#allocation2 + $0xb0] sm:$0xff] %v1835
    %1900 = vst [vmem:[#allocation2 + $0xb8] sm:$0xff] %v1836
    %1901 = vst [vmem:[#allocation2 + $0xc0] sm:$0xff] %v1837
    %1902 = vst [vmem:[#allocation2 + $0xc8] sm:$0xff] %v1838
    %1903 = vst [vmem:[#allocation2 + $0xd0] sm:$0xff] %v1839
    %1904 = vst [vmem:[#allocation2 + $0xd8] sm:$0xff] %v1840
    %1905 = vst [vmem:[#allocation2 + $0xe0] sm:$0xff] %v1841
    %1906 = vst [vmem:[#allocation2 + $0xe8] sm:$0xff] %v1842
    %1907 = vst [vmem:[#allocation2 + $0xf0] sm:$0xff] %v1843
    %1908 = vst [vmem:[#allocation2 + $0xf8] sm:$0xff] %v1844
    %1909 = vst [vmem:[#allocation2 + $0x100] sm:$0xff] %v1845
    %1910 = vst [vmem:[#allocation2 + $0x108] sm:$0xff] %v1846
    %1911 = vst [vmem:[#allocation2 + $0x110] sm:$0xff] %v1847
    %1912 = vst [vmem:[#allocation2 + $0x118] sm:$0xff] %v1848
    %1913 = vst [vmem:[#allocation2 + $0x120] sm:$0xff] %v1849
    %1914 = vst [vmem:[#allocation2 + $0x128] sm:$0xff] %v1850
    %1915 = vst [vmem:[#allocation2 + $0x130] sm:$0xff] %v1851
    %1916 = vst [vmem:[#allocation2 + $0x138] sm:$0xff] %v1852
    %1917 = vst [vmem:[#allocation2 + $0x140] sm:$0xff] %v1853
    %1918 = vst [vmem:[#allocation2 + $0x148] sm:$0xff] %v1854
    %1919 = vst [vmem:[#allocation2 + $0x150] sm:$0xff] %v1855
    %1920 = vst [vmem:[#allocation2 + $0x158] sm:$0xff] %v1856
    %1921 = vst [vmem:[#allocation2 + $0x160] sm:$0xff] %v1857
    %1922 = vst [vmem:[#allocation2 + $0x168] sm:$0xff] %v1858
    %1923 = vst [vmem:[#allocation2 + $0x170] sm:$0xff] %v1859
    %1924 = vst [vmem:[#allocation2 + $0x178] sm:$0xff] %v1860
    %1925 = vst [vmem:[#allocation2 + $0x180] sm:$0xff] %v1861
    %1926 = vst [vmem:[#allocation2 + $0x188] sm:$0xff] %v1862
    %1927 = vst [vmem:[#allocation2 + $0x190] sm:$0xff] %v1863
    %1928 = vst [vmem:[#allocation2 + $0x198] sm:$0xff] %v1864
    %1929 = vst [vmem:[#allocation2 + $0x1a0] sm:$0xff] %v1865
    %1930 = vst [vmem:[#allocation2 + $0x1a8] sm:$0xff] %v1866
    %1931 = vst [vmem:[#allocation2 + $0x1b0] sm:$0xff] %v1867
    %1932 = vst [vmem:[#allocation2 + $0x1b8] sm:$0xff] %v1868
    %1933 = vst [vmem:[#allocation2 + $0x1c0] sm:$0xff] %v1869
    %1934 = vst [vmem:[#allocation2 + $0x1c8] sm:$0xff] %v1870
    %1935 = vst [vmem:[#allocation2 + $0x1d0] sm:$0xff] %v1871
    %1936 = vst [vmem:[#allocation2 + $0x1d8] sm:$0xff] %v1872
    %1937 = vst [vmem:[#allocation2 + $0x1e0] sm:$0xff] %v1873
    %1938 = vst [vmem:[#allocation2 + $0x1e8] sm:$0xff] %v1874
    %1939 = vst [vmem:[#allocation2 + $0x1f0] sm:$0xff] %v1875
    %1940 = vst [vmem:[#allocation2 + $0x1f8] sm:$0xff] %v1876
  $region21: #{graphsage_forward.5} parent=0 // pred_fallthru
    _
  // Predicated region
  $region22: #{graphsage_forward.5} parent=0 // pred_check
    %p1941 = pneg %p73
  $region23: #{graphsage_forward.5} parent=0 // pred_check_branch
    %1943 = sbr.rel (%p1941) target = $region25
  $region24: #{graphsage_forward.5} parent=0 // pred_region
    %v1944 = vld [vmem:[#allocation2] sm:$0xff]
    %v1945 = vld [vmem:[#allocation2 + $0x8] sm:$0xff]
    %v1946 = vld [vmem:[#allocation2 + $0x10] sm:$0xff]
    %v1947 = vld [vmem:[#allocation2 + $0x18] sm:$0xff]
    %v1948 = vld [vmem:[#allocation2 + $0x20] sm:$0xff]
    %v1949 = vld [vmem:[#allocation2 + $0x28] sm:$0xff]
    %v1950 = vld [vmem:[#allocation2 + $0x30] sm:$0xff]
    %v1951 = vld [vmem:[#allocation2 + $0x38] sm:$0xff]
    %v1952 = vld [vmem:[#allocation2 + $0x40] sm:$0xff]
    %v1953 = vld [vmem:[#allocation2 + $0x48] sm:$0xff]
    %v1954 = vld [vmem:[#allocation2 + $0x50] sm:$0xff]
    %v1955 = vld [vmem:[#allocation2 + $0x58] sm:$0xff]
    %v1956 = vld [vmem:[#allocation2 + $0x60] sm:$0xff]
    %v1957 = vld [vmem:[#allocation2 + $0x68] sm:$0xff]
    %v1958 = vld [vmem:[#allocation2 + $0x70] sm:$0xff]
    %v1959 = vld [vmem:[#allocation2 + $0x78] sm:$0xff]
    %v1960 = vld [vmem:[#allocation2 + $0x80] sm:$0xff]
    %v1961 = vld [vmem:[#allocation2 + $0x88] sm:$0xff]
    %v1962 = vld [vmem:[#allocation2 + $0x90] sm:$0xff]
    %v1963 = vld [vmem:[#allocation2 + $0x98] sm:$0xff]
    %v1964 = vld [vmem:[#allocation2 + $0xa0] sm:$0xff]
    %v1965 = vld [vmem:[#allocation2 + $0xa8] sm:$0xff]
    %v1966 = vld [vmem:[#allocation2 + $0xb0] sm:$0xff]
    %v1967 = vld [vmem:[#allocation2 + $0xb8] sm:$0xff]
    %v1968 = vld [vmem:[#allocation2 + $0xc0] sm:$0xff]
    %v1969 = vld [vmem:[#allocation2 + $0xc8] sm:$0xff]
    %v1970 = vld [vmem:[#allocation2 + $0xd0] sm:$0xff]
    %v1971 = vld [vmem:[#allocation2 + $0xd8] sm:$0xff]
    %v1972 = vld [vmem:[#allocation2 + $0xe0] sm:$0xff]
    %v1973 = vld [vmem:[#allocation2 + $0xe8] sm:$0xff]
    %v1974 = vld [vmem:[#allocation2 + $0xf0] sm:$0xff]
    %v1975 = vld [vmem:[#allocation2 + $0xf8] sm:$0xff]
    %v1976 = vld [vmem:[#allocation2 + $0x100] sm:$0xff]
    %v1977 = vld [vmem:[#allocation2 + $0x108] sm:$0xff]
    %v1978 = vld [vmem:[#allocation2 + $0x110] sm:$0xff]
    %v1979 = vld [vmem:[#allocation2 + $0x118] sm:$0xff]
    %v1980 = vld [vmem:[#allocation2 + $0x120] sm:$0xff]
    %v1981 = vld [vmem:[#allocation2 + $0x128] sm:$0xff]
    %v1982 = vld [vmem:[#allocation2 + $0x130] sm:$0xff]
    %v1983 = vld [vmem:[#allocation2 + $0x138] sm:$0xff]
    %v1984 = vld [vmem:[#allocation2 + $0x140] sm:$0xff]
    %v1985 = vld [vmem:[#allocation2 + $0x148] sm:$0xff]
    %v1986 = vld [vmem:[#allocation2 + $0x150] sm:$0xff]
    %v1987 = vld [vmem:[#allocation2 + $0x158] sm:$0xff]
    %v1988 = vld [vmem:[#allocation2 + $0x160] sm:$0xff]
    %v1989 = vld [vmem:[#allocation2 + $0x168] sm:$0xff]
    %v1990 = vld [vmem:[#allocation2 + $0x170] sm:$0xff]
    %v1991 = vld [vmem:[#allocation2 + $0x178] sm:$0xff]
    %v1992 = vld [vmem:[#allocation2 + $0x180] sm:$0xff]
    %v1993 = vld [vmem:[#allocation2 + $0x188] sm:$0xff]
    %v1994 = vld [vmem:[#allocation2 + $0x190] sm:$0xff]
    %v1995 = vld [vmem:[#allocation2 + $0x198] sm:$0xff]
    %v1996 = vld [vmem:[#allocation2 + $0x1a0] sm:$0xff]
    %v1997 = vld [vmem:[#allocation2 + $0x1a8] sm:$0xff]
    %v1998 = vld [vmem:[#allocation2 + $0x1b0] sm:$0xff]
    %v1999 = vld [vmem:[#allocation2 + $0x1b8] sm:$0xff]
    %v2000 = vld [vmem:[#allocation2 + $0x1c0] sm:$0xff]
    %v2001 = vld [vmem:[#allocation2 + $0x1c8] sm:$0xff]
    %v2002 = vld [vmem:[#allocation2 + $0x1d0] sm:$0xff]
    %v2003 = vld [vmem:[#allocation2 + $0x1d8] sm:$0xff]
    %v2004 = vld [vmem:[#allocation2 + $0x1e0] sm:$0xff]
    %v2005 = vld [vmem:[#allocation2 + $0x1e8] sm:$0xff]
    %v2006 = vld [vmem:[#allocation2 + $0x1f0] sm:$0xff]
    %v2007 = vld [vmem:[#allocation2 + $0x1f8] sm:$0xff]
    %v2008 = vld [vmem:[%s4] sm:$0xff]
    %v2009 = vld [vmem:[%s4 + $0x8] sm:$0xff]
    %v2010 = vld [vmem:[%s4 + $0x10] sm:$0xff]
    %v2011 = vld [vmem:[%s4 + $0x18] sm:$0xff]
    %v2012 = vld [vmem:[%s4 + $0x20] sm:$0xff]
    %v2013 = vld [vmem:[%s4 + $0x28] sm:$0xff]
    %v2014 = vld [vmem:[%s4 + $0x30] sm:$0xff]
    %v2015 = vld [vmem:[%s4 + $0x38] sm:$0xff]
    %v2016 = vld [vmem:[%s4 + $0x40] sm:$0xff]
    %v2017 = vld [vmem:[%s4 + $0x48] sm:$0xff]
    %v2018 = vld [vmem:[%s4 + $0x50] sm:$0xff]
    %v2019 = vld [vmem:[%s4 + $0x58] sm:$0xff]
    %v2020 = vld [vmem:[%s4 + $0x60] sm:$0xff]
    %v2021 = vld [vmem:[%s4 + $0x68] sm:$0xff]
    %v2022 = vld [vmem:[%s4 + $0x70] sm:$0xff]
    %v2023 = vld [vmem:[%s4 + $0x78] sm:$0xff]
    %v2024 = vld [vmem:[%s4 + $0x80] sm:$0xff]
    %v2025 = vld [vmem:[%s4 + $0x88] sm:$0xff]
    %v2026 = vld [vmem:[%s4 + $0x90] sm:$0xff]
    %v2027 = vld [vmem:[%s4 + $0x98] sm:$0xff]
    %v2028 = vld [vmem:[%s4 + $0xa0] sm:$0xff]
    %v2029 = vld [vmem:[%s4 + $0xa8] sm:$0xff]
    %v2030 = vld [vmem:[%s4 + $0xb0] sm:$0xff]
    %v2031 = vld [vmem:[%s4 + $0xb8] sm:$0xff]
    %v2032 = vld [vmem:[%s4 + $0xc0] sm:$0xff]
    %v2033 = vld [vmem:[%s4 + $0xc8] sm:$0xff]
    %v2034 = vld [vmem:[%s4 + $0xd0] sm:$0xff]
    %v2035 = vld [vmem:[%s4 + $0xd8] sm:$0xff]
    %v2036 = vld [vmem:[%s4 + $0xe0] sm:$0xff]
    %v2037 = vld [vmem:[%s4 + $0xe8] sm:$0xff]
    %v2038 = vld [vmem:[%s4 + $0xf0] sm:$0xff]
    %v2039 = vld [vmem:[%s4 + $0xf8] sm:$0xff]
    %v2040 = vld [vmem:[%s4 + $0x100] sm:$0xff]
    %v2041 = vld [vmem:[%s4 + $0x108] sm:$0xff]
    %v2042 = vld [vmem:[%s4 + $0x110] sm:$0xff]
    %v2043 = vld [vmem:[%s4 + $0x118] sm:$0xff]
    %v2044 = vld [vmem:[%s4 + $0x120] sm:$0xff]
    %v2045 = vld [vmem:[%s4 + $0x128] sm:$0xff]
    %v2046 = vld [vmem:[%s4 + $0x130] sm:$0xff]
    %v2047 = vld [vmem:[%s4 + $0x138] sm:$0xff]
    %v2048 = vld [vmem:[%s4 + $0x140] sm:$0xff]
    %v2049 = vld [vmem:[%s4 + $0x148] sm:$0xff]
    %v2050 = vld [vmem:[%s4 + $0x150] sm:$0xff]
    %v2051 = vld [vmem:[%s4 + $0x158] sm:$0xff]
    %v2052 = vld [vmem:[%s4 + $0x160] sm:$0xff]
    %v2053 = vld [vmem:[%s4 + $0x168] sm:$0xff]
    %v2054 = vld [vmem:[%s4 + $0x170] sm:$0xff]
    %v2055 = vld [vmem:[%s4 + $0x178] sm:$0xff]
    %v2056 = vld [vmem:[%s4 + $0x180] sm:$0xff]
    %v2057 = vld [vmem:[%s4 + $0x188] sm:$0xff]
    %v2058 = vld [vmem:[%s4 + $0x190] sm:$0xff]
    %v2059 = vld [vmem:[%s4 + $0x198] sm:$0xff]
    %v2060 = vld [vmem:[%s4 + $0x1a0] sm:$0xff]
    %v2061 = vld [vmem:[%s4 + $0x1a8] sm:$0xff]
    %v2062 = vld [vmem:[%s4 + $0x1b0] sm:$0xff]
    %v2063 = vld [vmem:[%s4 + $0x1b8] sm:$0xff]
    %v2064 = vld [vmem:[%s4 + $0x1c0] sm:$0xff]
    %v2065 = vld [vmem:[%s4 + $0x1c8] sm:$0xff]
    %v2066 = vld [vmem:[%s4 + $0x1d0] sm:$0xff]
    %v2067 = vld [vmem:[%s4 + $0x1d8] sm:$0xff]
    %v2068 = vld [vmem:[%s4 + $0x1e0] sm:$0xff]
    %v2069 = vld [vmem:[%s4 + $0x1e8] sm:$0xff]
    %v2070 = vld [vmem:[%s4 + $0x1f0] sm:$0xff]
    %v2071 = vld [vmem:[%s4 + $0x1f8] sm:$0xff]
    %v2072 = vadd.f32 %v1944, %v2008
    %v2073 = vadd.f32 %v1945, %v2009
    %v2074 = vadd.f32 %v1946, %v2010
    %v2075 = vadd.f32 %v1947, %v2011
    %v2076 = vadd.f32 %v1948, %v2012
    %v2077 = vadd.f32 %v1949, %v2013
    %v2078 = vadd.f32 %v1950, %v2014
    %v2079 = vadd.f32 %v1951, %v2015
    %v2080 = vadd.f32 %v1952, %v2016
    %v2081 = vadd.f32 %v1953, %v2017
    %v2082 = vadd.f32 %v1954, %v2018
    %v2083 = vadd.f32 %v1955, %v2019
    %v2084 = vadd.f32 %v1956, %v2020
    %v2085 = vadd.f32 %v1957, %v2021
    %v2086 = vadd.f32 %v1958, %v2022
    %v2087 = vadd.f32 %v1959, %v2023
    %v2088 = vadd.f32 %v1960, %v2024
    %v2089 = vadd.f32 %v1961, %v2025
    %v2090 = vadd.f32 %v1962, %v2026
    %v2091 = vadd.f32 %v1963, %v2027
    %v2092 = vadd.f32 %v1964, %v2028
    %v2093 = vadd.f32 %v1965, %v2029
    %v2094 = vadd.f32 %v1966, %v2030
    %v2095 = vadd.f32 %v1967, %v2031
    %v2096 = vadd.f32 %v1968, %v2032
    %v2097 = vadd.f32 %v1969, %v2033
    %v2098 = vadd.f32 %v1970, %v2034
    %v2099 = vadd.f32 %v1971, %v2035
    %v2100 = vadd.f32 %v1972, %v2036
    %v2101 = vadd.f32 %v1973, %v2037
    %v2102 = vadd.f32 %v1974, %v2038
    %v2103 = vadd.f32 %v1975, %v2039
    %v2104 = vadd.f32 %v1976, %v2040
    %v2105 = vadd.f32 %v1977, %v2041
    %v2106 = vadd.f32 %v1978, %v2042
    %v2107 = vadd.f32 %v1979, %v2043
    %v2108 = vadd.f32 %v1980, %v2044
    %v2109 = vadd.f32 %v1981, %v2045
    %v2110 = vadd.f32 %v1982, %v2046
    %v2111 = vadd.f32 %v1983, %v2047
    %v2112 = vadd.f32 %v1984, %v2048
    %v2113 = vadd.f32 %v1985, %v2049
    %v2114 = vadd.f32 %v1986, %v2050
    %v2115 = vadd.f32 %v1987, %v2051
    %v2116 = vadd.f32 %v1988, %v2052
    %v2117 = vadd.f32 %v1989, %v2053
    %v2118 = vadd.f32 %v1990, %v2054
    %v2119 = vadd.f32 %v1991, %v2055
    %v2120 = vadd.f32 %v1992, %v2056
    %v2121 = vadd.f32 %v1993, %v2057
    %v2122 = vadd.f32 %v1994, %v2058
    %v2123 = vadd.f32 %v1995, %v2059
    %v2124 = vadd.f32 %v1996, %v2060
    %v2125 = vadd.f32 %v1997, %v2061
    %v2126 = vadd.f32 %v1998, %v2062
    %v2127 = vadd.f32 %v1999, %v2063
    %v2128 = vadd.f32 %v2000, %v2064
    %v2129 = vadd.f32 %v2001, %v2065
    %v2130 = vadd.f32 %v2002, %v2066
    %v2131 = vadd.f32 %v2003, %v2067
    %v2132 = vadd.f32 %v2004, %v2068
    %v2133 = vadd.f32 %v2005, %v2069
    %v2134 = vadd.f32 %v2006, %v2070
    %v2135 = vadd.f32 %v2007, %v2071
    %v2136 = vmax.f32 %v2072, 0.0
    %v2137 = vmax.f32 %v2073, 0.0
    %v2138 = vmax.f32 %v2074, 0.0
    %v2139 = vmax.f32 %v2075, 0.0
    %v2140 = vmax.f32 %v2076, 0.0
    %v2141 = vmax.f32 %v2077, 0.0
    %v2142 = vmax.f32 %v2078, 0.0
    %v2143 = vmax.f32 %v2079, 0.0
    %v2144 = vmax.f32 %v2080, 0.0
    %v2145 = vmax.f32 %v2081, 0.0
    %v2146 = vmax.f32 %v2082, 0.0
    %v2147 = vmax.f32 %v2083, 0.0
    %v2148 = vmax.f32 %v2084, 0.0
    %v2149 = vmax.f32 %v2085, 0.0
    %v2150 = vmax.f32 %v2086, 0.0
    %v2151 = vmax.f32 %v2087, 0.0
    %v2152 = vmax.f32 %v2088, 0.0
    %v2153 = vmax.f32 %v2089, 0.0
    %v2154 = vmax.f32 %v2090, 0.0
    %v2155 = vmax.f32 %v2091, 0.0
    %v2156 = vmax.f32 %v2092, 0.0
    %v2157 = vmax.f32 %v2093, 0.0
    %v2158 = vmax.f32 %v2094, 0.0
    %v2159 = vmax.f32 %v2095, 0.0
    %v2160 = vmax.f32 %v2096, 0.0
    %v2161 = vmax.f32 %v2097, 0.0
    %v2162 = vmax.f32 %v2098, 0.0
    %v2163 = vmax.f32 %v2099, 0.0
    %v2164 = vmax.f32 %v2100, 0.0
    %v2165 = vmax.f32 %v2101, 0.0
    %v2166 = vmax.f32 %v2102, 0.0
    %v2167 = vmax.f32 %v2103, 0.0
    %v2168 = vmax.f32 %v2104, 0.0
    %v2169 = vmax.f32 %v2105, 0.0
    %v2170 = vmax.f32 %v2106, 0.0
    %v2171 = vmax.f32 %v2107, 0.0
    %v2172 = vmax.f32 %v2108, 0.0
    %v2173 = vmax.f32 %v2109, 0.0
    %v2174 = vmax.f32 %v2110, 0.0
    %v2175 = vmax.f32 %v2111, 0.0
    %v2176 = vmax.f32 %v2112, 0.0
    %v2177 = vmax.f32 %v2113, 0.0
    %v2178 = vmax.f32 %v2114, 0.0
    %v2179 = vmax.f32 %v2115, 0.0
    %v2180 = vmax.f32 %v2116, 0.0
    %v2181 = vmax.f32 %v2117, 0.0
    %v2182 = vmax.f32 %v2118, 0.0
    %v2183 = vmax.f32 %v2119, 0.0
    %v2184 = vmax.f32 %v2120, 0.0
    %v2185 = vmax.f32 %v2121, 0.0
    %v2186 = vmax.f32 %v2122, 0.0
    %v2187 = vmax.f32 %v2123, 0.0
    %v2188 = vmax.f32 %v2124, 0.0
    %v2189 = vmax.f32 %v2125, 0.0
    %v2190 = vmax.f32 %v2126, 0.0
    %v2191 = vmax.f32 %v2127, 0.0
    %v2192 = vmax.f32 %v2128, 0.0
    %v2193 = vmax.f32 %v2129, 0.0
    %v2194 = vmax.f32 %v2130, 0.0
    %v2195 = vmax.f32 %v2131, 0.0
    %v2196 = vmax.f32 %v2132, 0.0
    %v2197 = vmax.f32 %v2133, 0.0
    %v2198 = vmax.f32 %v2134, 0.0
    %v2199 = vmax.f32 %v2135, 0.0
    %v2200 = vpack.c.bf16 %v2137, %v2136
    %v2201 = vpack.c.bf16 %v2139, %v2138
    %v2202 = vpack.c.bf16 %v2141, %v2140
    %v2203 = vpack.c.bf16 %v2143, %v2142
    %v2204 = vpack.c.bf16 %v2145, %v2144
    %v2205 = vpack.c.bf16 %v2147, %v2146
    %v2206 = vpack.c.bf16 %v2149, %v2148
    %v2207 = vpack.c.bf16 %v2151, %v2150
    %v2208 = vpack.c.bf16 %v2153, %v2152
    %v2209 = vpack.c.bf16 %v2155, %v2154
    %v2210 = vpack.c.bf16 %v2157, %v2156
    %v2211 = vpack.c.bf16 %v2159, %v2158
    %v2212 = vpack.c.bf16 %v2161, %v2160
    %v2213 = vpack.c.bf16 %v2163, %v2162
    %v2214 = vpack.c.bf16 %v2165, %v2164
    %v2215 = vpack.c.bf16 %v2167, %v2166
    %v2216 = vpack.c.bf16 %v2169, %v2168
    %v2217 = vpack.c.bf16 %v2171, %v2170
    %v2218 = vpack.c.bf16 %v2173, %v2172
    %v2219 = vpack.c.bf16 %v2175, %v2174
    %v2220 = vpack.c.bf16 %v2177, %v2176
    %v2221 = vpack.c.bf16 %v2179, %v2178
    %v2222 = vpack.c.bf16 %v2181, %v2180
    %v2223 = vpack.c.bf16 %v2183, %v2182
    %v2224 = vpack.c.bf16 %v2185, %v2184
    %v2225 = vpack.c.bf16 %v2187, %v2186
    %v2226 = vpack.c.bf16 %v2189, %v2188
    %v2227 = vpack.c.bf16 %v2191, %v2190
    %v2228 = vpack.c.bf16 %v2193, %v2192
    %v2229 = vpack.c.bf16 %v2195, %v2194
    %v2230 = vpack.c.bf16 %v2197, %v2196
    %v2231 = vpack.c.bf16 %v2199, %v2198
    %v2264 = vunpack.c.l.b16 %v2200
    %v2265 = vunpack.c.h.b16 %v2200
    %v2266 = vunpack.c.l.b16 %v2201
    %v2267 = vunpack.c.h.b16 %v2201
    %v2268 = vunpack.c.l.b16 %v2202
    %v2269 = vunpack.c.h.b16 %v2202
    %v2270 = vunpack.c.l.b16 %v2203
    %v2271 = vunpack.c.h.b16 %v2203
    %v2272 = vunpack.c.l.b16 %v2204
    %v2273 = vunpack.c.h.b16 %v2204
    %v2274 = vunpack.c.l.b16 %v2205
    %v2275 = vunpack.c.h.b16 %v2205
    %v2276 = vunpack.c.l.b16 %v2206
    %v2277 = vunpack.c.h.b16 %v2206
    %v2278 = vunpack.c.l.b16 %v2207
    %v2279 = vunpack.c.h.b16 %v2207
    %v2280 = vunpack.c.l.b16 %v2208
    %v2281 = vunpack.c.h.b16 %v2208
    %v2282 = vunpack.c.l.b16 %v2209
    %v2283 = vunpack.c.h.b16 %v2209
    %v2284 = vunpack.c.l.b16 %v2210
    %v2285 = vunpack.c.h.b16 %v2210
    %v2286 = vunpack.c.l.b16 %v2211
    %v2287 = vunpack.c.h.b16 %v2211
    %v2288 = vunpack.c.l.b16 %v2212
    %v2289 = vunpack.c.h.b16 %v2212
    %v2290 = vunpack.c.l.b16 %v2213
    %v2291 = vunpack.c.h.b16 %v2213
    %v2292 = vunpack.c.l.b16 %v2214
    %v2293 = vunpack.c.h.b16 %v2214
    %v2294 = vunpack.c.l.b16 %v2215
    %v2295 = vunpack.c.h.b16 %v2215
    %v2296 = vunpack.c.l.b16 %v2216
    %v2297 = vunpack.c.h.b16 %v2216
    %v2298 = vunpack.c.l.b16 %v2217
    %v2299 = vunpack.c.h.b16 %v2217
    %v2300 = vunpack.c.l.b16 %v2218
    %v2301 = vunpack.c.h.b16 %v2218
    %v2302 = vunpack.c.l.b16 %v2219
    %v2303 = vunpack.c.h.b16 %v2219
    %v2304 = vunpack.c.l.b16 %v2220
    %v2305 = vunpack.c.h.b16 %v2220
    %v2306 = vunpack.c.l.b16 %v2221
    %v2307 = vunpack.c.h.b16 %v2221
    %v2308 = vunpack.c.l.b16 %v2222
    %v2309 = vunpack.c.h.b16 %v2222
    %v2310 = vunpack.c.l.b16 %v2223
    %v2311 = vunpack.c.h.b16 %v2223
    %v2312 = vunpack.c.l.b16 %v2224
    %v2313 = vunpack.c.h.b16 %v2224
    %v2314 = vunpack.c.l.b16 %v2225
    %v2315 = vunpack.c.h.b16 %v2225
    %v2316 = vunpack.c.l.b16 %v2226
    %v2317 = vunpack.c.h.b16 %v2226
    %v2318 = vunpack.c.l.b16 %v2227
    %v2319 = vunpack.c.h.b16 %v2227
    %v2320 = vunpack.c.l.b16 %v2228
    %v2321 = vunpack.c.h.b16 %v2228
    %v2322 = vunpack.c.l.b16 %v2229
    %v2323 = vunpack.c.h.b16 %v2229
    %v2324 = vunpack.c.l.b16 %v2230
    %v2325 = vunpack.c.h.b16 %v2230
    %v2326 = vunpack.c.l.b16 %v2231
    %v2327 = vunpack.c.h.b16 %v2231
    %v2328 = vpack.c.b16 %v2264, %v2264
    %v2329 = vpack.c.b16 %v2265, %v2265
    %v2330 = vpack.c.b16 %v2266, %v2266
    %v2331 = vpack.c.b16 %v2267, %v2267
    %v2332 = vpack.c.b16 %v2268, %v2268
    %v2333 = vpack.c.b16 %v2269, %v2269
    %v2334 = vpack.c.b16 %v2270, %v2270
    %v2335 = vpack.c.b16 %v2271, %v2271
    %v2336 = vpack.c.b16 %v2272, %v2272
    %v2337 = vpack.c.b16 %v2273, %v2273
    %v2338 = vpack.c.b16 %v2274, %v2274
    %v2339 = vpack.c.b16 %v2275, %v2275
    %v2340 = vpack.c.b16 %v2276, %v2276
    %v2341 = vpack.c.b16 %v2277, %v2277
    %v2342 = vpack.c.b16 %v2278, %v2278
    %v2343 = vpack.c.b16 %v2279, %v2279
    %v2344 = vpack.c.b16 %v2280, %v2280
    %v2345 = vpack.c.b16 %v2281, %v2281
    %v2346 = vpack.c.b16 %v2282, %v2282
    %v2347 = vpack.c.b16 %v2283, %v2283
    %v2348 = vpack.c.b16 %v2284, %v2284
    %v2349 = vpack.c.b16 %v2285, %v2285
    %v2350 = vpack.c.b16 %v2286, %v2286
    %v2351 = vpack.c.b16 %v2287, %v2287
    %v2352 = vpack.c.b16 %v2288, %v2288
    %v2353 = vpack.c.b16 %v2289, %v2289
    %v2354 = vpack.c.b16 %v2290, %v2290
    %v2355 = vpack.c.b16 %v2291, %v2291
    %v2356 = vpack.c.b16 %v2292, %v2292
    %v2357 = vpack.c.b16 %v2293, %v2293
    %v2358 = vpack.c.b16 %v2294, %v2294
    %v2359 = vpack.c.b16 %v2295, %v2295
    %v2360 = vpack.c.b16 %v2296, %v2296
    %v2361 = vpack.c.b16 %v2297, %v2297
    %v2362 = vpack.c.b16 %v2298, %v2298
    %v2363 = vpack.c.b16 %v2299, %v2299
    %v2364 = vpack.c.b16 %v2300, %v2300
    %v2365 = vpack.c.b16 %v2301, %v2301
    %v2366 = vpack.c.b16 %v2302, %v2302
    %v2367 = vpack.c.b16 %v2303, %v2303
    %v2368 = vpack.c.b16 %v2304, %v2304
    %v2369 = vpack.c.b16 %v2305, %v2305
    %v2370 = vpack.c.b16 %v2306, %v2306
    %v2371 = vpack.c.b16 %v2307, %v2307
    %v2372 = vpack.c.b16 %v2308, %v2308
    %v2373 = vpack.c.b16 %v2309, %v2309
    %v2374 = vpack.c.b16 %v2310, %v2310
    %v2375 = vpack.c.b16 %v2311, %v2311
    %v2376 = vpack.c.b16 %v2312, %v2312
    %v2377 = vpack.c.b16 %v2313, %v2313
    %v2378 = vpack.c.b16 %v2314, %v2314
    %v2379 = vpack.c.b16 %v2315, %v2315
    %v2380 = vpack.c.b16 %v2316, %v2316
    %v2381 = vpack.c.b16 %v2317, %v2317
    %v2382 = vpack.c.b16 %v2318, %v2318
    %v2383 = vpack.c.b16 %v2319, %v2319
    %v2384 = vpack.c.b16 %v2320, %v2320
    %v2385 = vpack.c.b16 %v2321, %v2321
    %v2386 = vpack.c.b16 %v2322, %v2322
    %v2387 = vpack.c.b16 %v2323, %v2323
    %v2388 = vpack.c.b16 %v2324, %v2324
    %v2389 = vpack.c.b16 %v2325, %v2325
    %v2390 = vpack.c.b16 %v2326, %v2326
    %v2391 = vpack.c.b16 %v2327, %v2327
    %2456 = vst [vmem:[%s5] sm:$0xf] %v2328
    %2457 = vst [vmem:[%s5 + $0x4] sm:$0xf] %v2329
    %2458 = vst [vmem:[%s5 + $0x8] sm:$0xf] %v2330
    %2459 = vst [vmem:[%s5 + $0xc] sm:$0xf] %v2331
    %2460 = vst [vmem:[%s5 + $0x10] sm:$0xf] %v2332
    %2461 = vst [vmem:[%s5 + $0x14] sm:$0xf] %v2333
    %2462 = vst [vmem:[%s5 + $0x18] sm:$0xf] %v2334
    %2463 = vst [vmem:[%s5 + $0x1c] sm:$0xf] %v2335
    %2464 = vst [vmem:[%s5 + $0x20] sm:$0xf] %v2336
    %2465 = vst [vmem:[%s5 + $0x24] sm:$0xf] %v2337
    %2466 = vst [vmem:[%s5 + $0x28] sm:$0xf] %v2338
    %2467 = vst [vmem:[%s5 + $0x2c] sm:$0xf] %v2339
    %2468 = vst [vmem:[%s5 + $0x30] sm:$0xf] %v2340
    %2469 = vst [vmem:[%s5 + $0x34] sm:$0xf] %v2341
    %2470 = vst [vmem:[%s5 + $0x38] sm:$0xf] %v2342
    %2471 = vst [vmem:[%s5 + $0x3c] sm:$0xf] %v2343
    %2472 = vst [vmem:[%s5 + $0x40] sm:$0xf] %v2344
    %2473 = vst [vmem:[%s5 + $0x44] sm:$0xf] %v2345
    %2474 = vst [vmem:[%s5 + $0x48] sm:$0xf] %v2346
    %2475 = vst [vmem:[%s5 + $0x4c] sm:$0xf] %v2347
    %2476 = vst [vmem:[%s5 + $0x50] sm:$0xf] %v2348
    %2477 = vst [vmem:[%s5 + $0x54] sm:$0xf] %v2349
    %2478 = vst [vmem:[%s5 + $0x58] sm:$0xf] %v2350
    %2479 = vst [vmem:[%s5 + $0x5c] sm:$0xf] %v2351
    %2480 = vst [vmem:[%s5 + $0x60] sm:$0xf] %v2352
    %2481 = vst [vmem:[%s5 + $0x64] sm:$0xf] %v2353
    %2482 = vst [vmem:[%s5 + $0x68] sm:$0xf] %v2354
    %2483 = vst [vmem:[%s5 + $0x6c] sm:$0xf] %v2355
    %2484 = vst [vmem:[%s5 + $0x70] sm:$0xf] %v2356
    %2485 = vst [vmem:[%s5 + $0x74] sm:$0xf] %v2357
    %2486 = vst [vmem:[%s5 + $0x78] sm:$0xf] %v2358
    %2487 = vst [vmem:[%s5 + $0x7c] sm:$0xf] %v2359
    %2488 = vst [vmem:[%s5 + $0x80] sm:$0xf] %v2360
    %2489 = vst [vmem:[%s5 + $0x84] sm:$0xf] %v2361
    %2490 = vst [vmem:[%s5 + $0x88] sm:$0xf] %v2362
    %2491 = vst [vmem:[%s5 + $0x8c] sm:$0xf] %v2363
    %2492 = vst [vmem:[%s5 + $0x90] sm:$0xf] %v2364
    %2493 = vst [vmem:[%s5 + $0x94] sm:$0xf] %v2365
    %2494 = vst [vmem:[%s5 + $0x98] sm:$0xf] %v2366
    %2495 = vst [vmem:[%s5 + $0x9c] sm:$0xf] %v2367
    %2496 = vst [vmem:[%s5 + $0xa0] sm:$0xf] %v2368
    %2497 = vst [vmem:[%s5 + $0xa4] sm:$0xf] %v2369
    %2498 = vst [vmem:[%s5 + $0xa8] sm:$0xf] %v2370
    %2499 = vst [vmem:[%s5 + $0xac] sm:$0xf] %v2371
    %2500 = vst [vmem:[%s5 + $0xb0] sm:$0xf] %v2372
    %2501 = vst [vmem:[%s5 + $0xb4] sm:$0xf] %v2373
    %2502 = vst [vmem:[%s5 + $0xb8] sm:$0xf] %v2374
    %2503 = vst [vmem:[%s5 + $0xbc] sm:$0xf] %v2375
    %2504 = vst [vmem:[%s5 + $0xc0] sm:$0xf] %v2376
    %2505 = vst [vmem:[%s5 + $0xc4] sm:$0xf] %v2377
    %2506 = vst [vmem:[%s5 + $0xc8] sm:$0xf] %v2378
    %2507 = vst [vmem:[%s5 + $0xcc] sm:$0xf] %v2379
    %2508 = vst [vmem:[%s5 + $0xd0] sm:$0xf] %v2380
    %2509 = vst [vmem:[%s5 + $0xd4] sm:$0xf] %v2381
    %2510 = vst [vmem:[%s5 + $0xd8] sm:$0xf] %v2382
    %2511 = vst [vmem:[%s5 + $0xdc] sm:$0xf] %v2383
    %2512 = vst [vmem:[%s5 + $0xe0] sm:$0xf] %v2384
    %2513 = vst [vmem:[%s5 + $0xe4] sm:$0xf] %v2385
    %2514 = vst [vmem:[%s5 + $0xe8] sm:$0xf] %v2386
    %2515 = vst [vmem:[%s5 + $0xec] sm:$0xf] %v2387
    %2516 = vst [vmem:[%s5 + $0xf0] sm:$0xf] %v2388
    %2517 = vst [vmem:[%s5 + $0xf4] sm:$0xf] %v2389
    %2518 = vst [vmem:[%s5 + $0xf8] sm:$0xf] %v2390
    %2519 = vst [vmem:[%s5 + $0xfc] sm:$0xf] %v2391
  $region25: #{graphsage_forward.5} parent=0 // pred_fallthru
    _
  // Predicated region
  $region26: #{graphsage_forward.5} parent=0 // pred_check
    _
  $region27: #{graphsage_forward.5} parent=0 // pred_check_branch
    %2521 = sbr.rel (0) target = $region29
  $region28: #{graphsage_forward.5} parent=0 // pred_region
    _
  $region29: #{graphsage_forward.5} parent=0 // pred_fallthru
    _
  // Predicated region
  $region30: #{graphsage_forward.5} parent=0 // pred_check
    _
  $region31: #{graphsage_forward.5} parent=0 // pred_check_branch
    %2523 = sbr.rel (0) target = $region33
  $region32: #{graphsage_forward.5} parent=0 // pred_region
    _
  $region33: #{graphsage_forward.5} parent=0 // pred_fallthru
    _

</llo_original>
